<compile_context>
chip_gen: v7x
topology: tpu7x:2x2x1
jax: 0.10.0
libtpu: 0.0.40
codegen_flags: <defaults>
</compile_context>

<pallas_src>
import math
import functools

import jax
import jax.numpy as jnp
from jax import lax
from jax.experimental import pallas as pl
from jax.experimental.pallas import tpu as pltpu


def _tpu_vmem_info():
    """(vmem_capacity, scoped_vmem_limit, dual_tensorcore?) for the local TPU."""
    cap = 0
    try:
        cap = int(pltpu.get_tpu_info().vmem_capacity_bytes)
    except Exception:
        cap = 0
    if cap <= 0:
        cap = 64 * 1024 * 1024                     # conservative fallback (v7x per-TC)
    dual_tc = cap <= 64 * 1024 * 1024              # 64 MiB/TC parts are the 2-TC generation
    if dual_tc:
        limit = 36 * 1024 * 1024                   # headroom on 64 MiB parts (v7x)
    else:
        limit = min(int(0.78 * cap), 110 * 1024 * 1024)   # ~100 MiB on 128 MiB parts
    return cap, limit, dual_tc


def _choose_block_rows(B, seq_q, seq_k, E, dim, H, nh_pad, in_bytes, out_bytes,
                       has_mask, vmem_limit_bytes, dual_tc, row_align):
    """How many (batch*N) rows to pack per grid step."""
    # Pipelined I/O per packed row -> double buffered by the Pallas pipeline.
    io_row = (seq_q * E + seq_k * E + seq_k * dim * (2 if has_mask else 1)) * in_bytes
    io_row += seq_q * nh_pad * out_bytes
    # Live intermediates per packed row -> single copy (f32 dominated).
    inter_row = ((seq_q + seq_k) * E * (4 + in_bytes)        # q/k projections (+ cast copy)
                 + seq_q * seq_k * (8 + in_bytes)            # scores + exp + cast (per head)
                 + seq_k * 2 * dim * in_bytes                # rhs = [m*v | m]
                 + seq_q * 2 * dim * 4                       # fused num|den result
                 + seq_q * (2 * H * dim + nh_pad) * 4)       # head outputs + projected out
    per_row = 2 * io_row + inter_row
    # Weights: one copy with Buffered(1); keep 2x in the estimate as safety margin.
    weights = 2 * ((2 * E * E + H * dim * nh_pad) * in_bytes + (2 * E + nh_pad) * 4)
    budget = max(per_row, int(0.8 * vmem_limit_bytes) - weights)
    tb = max(1, budget // per_row)
    tb = min(tb, B)
    if dual_tc and B >= 2:
        # >= 2 and an even number of grid steps so both TensorCores get work.
        n = max(2, -(-B // tb))
        if n % 2:
            n += 1
        tb = -(-B // n)
    tb = max(row_align, (tb // row_align) * row_align)
    return int(tb)


def _mtan_kernel(*refs, num_heads, head_dim, has_mask, approx_recip):
    if has_mask:
        (q_ref, k_ref, v_ref, m_ref,
         wq_ref, bq_ref, wk_ref, bk_ref, wo_ref, bo_ref, out_ref) = refs
    else:
        (q_ref, k_ref, v_ref,
         wq_ref, bq_ref, wk_ref, bk_ref, wo_ref, bo_ref, out_ref) = refs
        m_ref = None

    tb, sq, emb = q_ref.shape
    sk = k_ref.shape[1]
    dim = v_ref.shape[2]
    H, ek = num_heads, head_dim
    cdtype = q_ref.dtype

    # --- q/k projections hoisted out of the head loop: two full-width (E, E)
    # MXU matmuls over all packed rows.  1/sqrt(ek) is folded into wq/bq.
    q2 = q_ref[...].reshape(tb * sq, emb)
    k2 = k_ref[...].reshape(tb * sk, emb)
    qp = lax.dot_general(q2, wq_ref[...], (((1,), (0,)), ((), ())),
                         preferred_element_type=jnp.float32) + bq_ref[...]
    kp = lax.dot_general(k2, wk_ref[...], (((1,), (0,)), ((), ())),
                         preferred_element_type=jnp.float32) + bk_ref[...]

    v = v_ref[...]                                          # (tb, sk, dim)
    if has_mask:
        m = m_ref[...]                                      # 0/1 in compute dtype
        # Fused softmax-reduction RHS, built once per block: a single matmul
        # gives numerator (exp @ m*v) and denominator (exp @ m) side by side.
        rhs = jnp.concatenate([m * v, m], axis=-1)          # (tb, sk, 2*dim)
        # Keys masked in EVERY channel cannot contribute; push them to -1e9
        # before the row max so exp() of valid keys does not underflow
        # (PyTorch masks before its internal softmax max).
        key_valid = jnp.max(m, axis=-1) > 0                 # (tb, sk)
        neg = jnp.where(key_valid, jnp.float32(0.0), jnp.float32(-1e9))[:, None, :]
        # All-keys-masked channels: PyTorch's softmax over uniform -1e9 scores
        # degenerates to a plain mean over seq_k -- reproduce exactly.
        mean_v = jnp.mean(v.astype(jnp.float32), axis=1)[:, None, :]   # (tb, 1, dim)

    head_outs = []
    # NOTE: static loop; mTAN uses small H (1-4).  For large H switch to
    # lax.fori_loop + a VMEM staging scratch to bound live ranges.
    for h in range(H):
        sl = slice(h * ek, (h + 1) * ek)
        qh = qp[:, sl].astype(cdtype).reshape(tb, sq, ek)
        kh = kp[:, sl].astype(cdtype).reshape(tb, sk, ek)

        # scores[t, q, k]: contracted last dims, batched over tb (no transpose).
        scores = lax.dot_general(qh, kh, (((2,), (2,)), ((0,), (0,))),
                                 preferred_element_type=jnp.float32)   # (tb, sq, sk)
        if has_mask:
            scores = scores + neg

        rowmax = jnp.max(scores, axis=-1, keepdims=True)
        exp_s = jnp.exp(scores - rowmax)                    # f32, evaluated once
        exp_c = exp_s.astype(cdtype)

        if has_mask:
            nd = lax.dot_general(exp_c, rhs, (((2,), (1,)), ((0,), (0,))),
                                 preferred_element_type=jnp.float32)   # (tb, sq, 2*dim)
            num = nd[..., :dim]
            den = nd[..., dim:]
            ok = den > 0.0
            inv = pl.reciprocal(jnp.where(ok, den, 1.0), approx=approx_recip)
            head_outs.append(jnp.where(ok, num * inv, mean_v))
        else:
            num = lax.dot_general(exp_c, v, (((2,), (1,)), ((0,), (0,))),
                                  preferred_element_type=jnp.float32)  # (tb, sq, dim)
            den = jnp.sum(exp_s, axis=-1, keepdims=True)               # > 0 always
            head_outs.append(num * pl.reciprocal(den, approx=approx_recip))

    # --- merge heads (PyTorch layout [head0 | head1 | ...]) and apply ONE
    # (H*dim -> nhidden_padded) output projection.
    x_cat = jnp.concatenate(head_outs, axis=-1) if H > 1 else head_outs[0]
    x2 = x_cat.reshape(tb * sq, H * dim).astype(wo_ref.dtype)
    out = lax.dot_general(x2, wo_ref[...], (((1,), (0,)), ((), ())),
                          preferred_element_type=jnp.float32) + bo_ref[...]
    out_ref[...] = out.astype(out_ref.dtype)


def init_params(rng, input_dim, nhidden, embed_time, num_heads):
    """Deterministic synthetic parameters (PyTorch Linear-style, stored (in, out))."""
    ks = jax.random.split(rng, 6)

    def uni(k, shape, fan_in):
        bound = 1.0 / math.sqrt(fan_in)
        return jax.random.uniform(k, shape, jnp.float32, -bound, bound)

    return {
        "wq": uni(ks[0], (embed_time, embed_time), embed_time),
        "bq": uni(ks[1], (1, embed_time), embed_time),
        "wk": uni(ks[2], (embed_time, embed_time), embed_time),
        "bk": uni(ks[3], (1, embed_time), embed_time),
        "wo": uni(ks[4], (input_dim * num_heads, nhidden), input_dim * num_heads),
        "bo": uni(ks[5], (1, nhidden), input_dim * num_heads),
    }


def multi_time_attention(params, query, key_t, value, mask=None, *,
                         embed_time, num_heads,
                         compute_dtype=jnp.float32,
                         approx_reciprocal=None,
                         block_rows=None):
    # TODO(synk): dropout argument of the torch module is not implemented (inference path).
    batch, N, seq_k, dim = value.shape
    seq_q = query.shape[2]
    E = embed_time
    assert E % num_heads == 0
    H = num_heads
    ek = E // H
    nhidden = params["wo"].shape[1]
    out_dtype = value.dtype
    has_mask = mask is not None
    cdtype = jnp.dtype(compute_dtype)
    if approx_reciprocal is None:
        approx_reciprocal = cdtype != jnp.dtype(jnp.float32)

    B = batch * N
    qf = query.reshape(B, seq_q, E).astype(cdtype)
    kf = key_t.reshape(B, seq_k, E).astype(cdtype)
    vf = value.reshape(B, seq_k, dim).astype(cdtype)
    if has_mask:
        # Binarize so semantics exactly match masked_fill(mask == 0).
        mf = (mask.reshape(B, seq_k, dim) != 0).astype(cdtype)

    # Fold 1/sqrt(ek) into the query projection (weight folding at trace time).
    scale = 1.0 / math.sqrt(ek)
    wq = (params["wq"] * scale).astype(cdtype)
    bq = (params["bq"] * scale).astype(jnp.float32)
    wk = params["wk"].astype(cdtype)
    bk = params["bk"].astype(jnp.float32)

    # Lane-dense output: pad nhidden to a multiple of 128 (zero-padded wo/bo,
    # result sliced afterwards) so the kernel's stores are never masked.
    nh_pad = ((nhidden + 127) // 128) * 128
    wo = params["wo"].astype(cdtype)
    bo = params["bo"].astype(jnp.float32)
    if nh_pad != nhidden:
        wo = jnp.pad(wo, ((0, 0), (0, nh_pad - nhidden)))
        bo = jnp.pad(bo, ((0, 0), (0, nh_pad - nhidden)))

    row_align = 8 // math.gcd(seq_q, 8)          # flattened (tb*seq_q) sublane alignment
    _, vmem_limit, dual_tc = _tpu_vmem_info()
    out_bytes = jnp.dtype(out_dtype).itemsize
    if block_rows is None:
        tb = _choose_block_rows(B, seq_q, seq_k, E, dim, H, nh_pad,
                                cdtype.itemsize, out_bytes, has_mask,
                                vmem_limit, dual_tc, row_align)
    else:
        tb = max(row_align, -(-int(block_rows) // row_align) * row_align)

    n_blocks = int(pl.cdiv(B, tb))
    B_pad = n_blocks * tb
    if B_pad != B:
        pad = B_pad - B
        qf = jnp.pad(qf, ((0, pad), (0, 0), (0, 0)))
        kf = jnp.pad(kf, ((0, pad), (0, 0), (0, 0)))
        vf = jnp.pad(vf, ((0, pad), (0, 0), (0, 0)))
        if has_mask:
            mf = jnp.pad(mf, ((0, pad), (0, 0), (0, 0)))

    kernel = functools.partial(
        _mtan_kernel, num_heads=H, head_dim=ek,
        has_mask=has_mask, approx_recip=bool(approx_reciprocal))

    act_specs = [
        pl.BlockSpec((tb, seq_q, E), lambda i: (i, 0, 0)),
        pl.BlockSpec((tb, seq_k, E), lambda i: (i, 0, 0)),
        pl.BlockSpec((tb, seq_k, dim), lambda i: (i, 0, 0)),
    ]
    inputs = [qf, kf, vf]
    if has_mask:
        act_specs.append(pl.BlockSpec((tb, seq_k, dim), lambda i: (i, 0, 0)))
        inputs.append(mf)
    inputs += [wq, bq, wk, bk, wo, bo]

    out_shape = jax.ShapeDtypeStruct((B_pad * seq_q, nh_pad), out_dtype)
    out_spec = pl.BlockSpec((tb * seq_q, nh_pad), lambda i: (i, 0))

    flops = 2 * B_pad * ((seq_q + seq_k) * E * E
                         + H * seq_q * seq_k * ek
                         + H * seq_q * seq_k * (2 * dim if has_mask else dim)
                         + seq_q * H * dim * nh_pad)
    bytes_in = sum(int(x.size) * x.dtype.itemsize for x in inputs)
    bytes_out = int(B_pad * seq_q * nh_pad) * out_bytes
    cost = pl.CostEstimate(
        flops=int(flops),
        transcendentals=int(B_pad * H * seq_q * (seq_k + dim)),
        bytes_accessed=int(bytes_in + bytes_out))

    def _call(single_buffer_weights):
        w_kw = {}
        if single_buffer_weights:
            # Constant index_map -> fetch once, keep a single copy in VMEM.
            w_kw = dict(pipeline_mode=pl.Buffered(1))
        w_specs = [
            pl.BlockSpec((E, E), lambda i: (0, 0), **w_kw),
            pl.BlockSpec((1, E), lambda i: (0, 0), **w_kw),
            pl.BlockSpec((E, E), lambda i: (0, 0), **w_kw),
            pl.BlockSpec((1, E), lambda i: (0, 0), **w_kw),
            pl.BlockSpec((H * dim, nh_pad), lambda i: (0, 0), **w_kw),
            pl.BlockSpec((1, nh_pad), lambda i: (0, 0), **w_kw),
        ]
        return pl.pallas_call(
            kernel,
            out_shape=out_shape,
            grid=(n_blocks,),
            in_specs=act_specs + w_specs,
            out_specs=out_spec,
            compiler_params=pltpu.CompilerParams(
                dimension_semantics=("parallel",),
                vmem_limit_bytes=int(vmem_limit)),
            cost_estimate=cost,
        )(*inputs)

    try:
        raw = _call(True)
    except Exception:
        # pl.Buffered(1) unsupported on this jax/libtpu -> plain double buffering.
        raw = _call(False)

    out2d = raw[: B * seq_q, :nhidden]
    return out2d.reshape(batch, N, seq_q, nhidden)


def reference(params, query, key_t, value, mask, *, embed_time, num_heads):
    """Pure-JAX mirror of the PyTorch forward, for correctness checking."""
    batch, N, seq_k, dim = value.shape
    ek = embed_time // num_heads

    q = query @ params["wq"] + params["bq"]
    k = key_t @ params["wk"] + params["bk"]
    q = q.reshape(batch, N, -1, num_heads, ek).transpose(0, 1, 3, 2, 4)
    k = k.reshape(batch, N, -1, num_heads, ek).transpose(0, 1, 3, 2, 4)

    scores = jnp.einsum("bnhqe,bnhke->bnhqk", q, k) / math.sqrt(ek)
    scores = jnp.broadcast_to(scores[..., None], scores.shape + (dim,))
    if mask is not None:
        m = mask[:, :, None, None, :, :]
        scores = jnp.where(m == 0, -1e9, scores)
    p = jax.nn.softmax(scores, axis=-2)
    v = value[:, :, None, None, :, :]
    x = jnp.sum(p * v, axis=-2)                   # (B, N, h, Sq, D)
    x = x.transpose(0, 1, 3, 2, 4).reshape(batch, N, -1, num_heads * dim)
    return x @ params["wo"] + params["bo"]


if __name__ == "__main__":
    batch, N = 2, 3
    seq_q, seq_k = 8, 16
    input_dim, embed_time, num_heads, nhidden = 4, 16, 2, 32

    root = jax.random.PRNGKey(0)
    k_par, k_q, k_k, k_v, k_m = jax.random.split(root, 5)

    params = init_params(k_par, input_dim, nhidden, embed_time, num_heads)
    query = jax.random.normal(k_q, (batch, N, seq_q, embed_time), jnp.float32)
    key_t = jax.random.normal(k_k, (batch, N, seq_k, embed_time), jnp.float32)
    value = jax.random.normal(k_v, (batch, N, seq_k, input_dim), jnp.float32)
    mask = (jax.random.uniform(k_m, (batch, N, seq_k, input_dim)) > 0.2).astype(jnp.float32)

    # f32 path with mask.
    out = multi_time_attention(params, query, key_t, value, mask,
                               embed_time=embed_time, num_heads=num_heads)
    out = jax.block_until_ready(out)
    ref = reference(params, query, key_t, value, mask,
                    embed_time=embed_time, num_heads=num_heads)
    assert out.shape == (batch, N, seq_q, nhidden), out.shape
    assert jnp.allclose(out, ref, atol=1e-4, rtol=1e-4), float(jnp.max(jnp.abs(out - ref)))

    # f32 path, no mask (dedicated variant: no ones-mask is ever DMA'd).
    out_nm = jax.block_until_ready(
        multi_time_attention(params, query, key_t, value, None,
                             embed_time=embed_time, num_heads=num_heads))
    ref_nm = reference(params, query, key_t, value, None,
                       embed_time=embed_time, num_heads=num_heads)
    assert jnp.allclose(out_nm, ref_nm, atol=1e-4, rtol=1e-4), \
        float(jnp.max(jnp.abs(out_nm - ref_nm)))

    # bf16 matmul path (halved HBM traffic, bf16 MXU); softmax math stays f32.
    out_bf = jax.block_until_ready(
        multi_time_attention(params, query, key_t, value, mask,
                             embed_time=embed_time, num_heads=num_heads,
                             compute_dtype=jnp.bfloat16))
    assert jnp.allclose(out_bf.astype(jnp.float32), ref, atol=1e-1, rtol=1e-1), \
        float(jnp.max(jnp.abs(out_bf.astype(jnp.float32) - ref)))

    print("KERNEL_OK")
</pallas_src>

<mosaic_0001>
module attributes {stable_mosaic.version = 11 : i64} {
  func.func @_mtan_kernel(%arg0: i32, %arg1: memref<3x8x16xf32, #tpu.memory_space<vmem>>, %arg2: memref<3x16x16xf32, #tpu.memory_space<vmem>>, %arg3: memref<3x16x4xf32, #tpu.memory_space<vmem>>, %arg4: memref<3x16x4xf32, #tpu.memory_space<vmem>>, %arg5: memref<16x16xf32, #tpu.memory_space<vmem>>, %arg6: memref<1x16xf32, #tpu.memory_space<vmem>>, %arg7: memref<16x16xf32, #tpu.memory_space<vmem>>, %arg8: memref<1x16xf32, #tpu.memory_space<vmem>>, %arg9: memref<8x128xf32, #tpu.memory_space<vmem>>, %arg10: memref<1x128xf32, #tpu.memory_space<vmem>>, %arg11: memref<24x128xf32, #tpu.memory_space<vmem>>) attributes {dimension_semantics = [#tpu.dimension_semantics<parallel>], iteration_bounds = array<i64: 2>, scalar_prefetch = 0 : i64, scratch_operands = 0 : i64, tpu.core_type = #tpu.core_type<tc>, window_params = [{transform_indices = @transform_0, window_bounds = array<i64: 3, 8, 16>}, {transform_indices = @transform_1, window_bounds = array<i64: 3, 16, 16>}, {transform_indices = @transform_2, window_bounds = array<i64: 3, 16, 4>}, {transform_indices = @transform_3, window_bounds = array<i64: 3, 16, 4>}, {pipeline_mode = #tpu.pipeline_mode<synchronous>, transform_indices = @transform_4, window_bounds = array<i64: 16, 16>}, {pipeline_mode = #tpu.pipeline_mode<synchronous>, transform_indices = @transform_5, window_bounds = array<i64: 1, 16>}, {pipeline_mode = #tpu.pipeline_mode<synchronous>, transform_indices = @transform_6, window_bounds = array<i64: 16, 16>}, {pipeline_mode = #tpu.pipeline_mode<synchronous>, transform_indices = @transform_7, window_bounds = array<i64: 1, 16>}, {pipeline_mode = #tpu.pipeline_mode<synchronous>, transform_indices = @transform_8, window_bounds = array<i64: 8, 128>}, {pipeline_mode = #tpu.pipeline_mode<synchronous>, transform_indices = @transform_9, window_bounds = array<i64: 1, 128>}, {transform_indices = @transform_10, window_bounds = array<i64: 24, 128>}]} {
    %c0 = arith.constant 0 : index
    %c0_0 = arith.constant 0 : index
    %c0_1 = arith.constant 0 : index
    %0 = vector.load %arg1[%c0, %c0_0, %c0_1] : memref<3x8x16xf32, #tpu.memory_space<vmem>>, vector<3x8x16xf32>
    %1 = vector.shape_cast %0 : vector<3x8x16xf32> to vector<24x16xf32>
    %c0_2 = arith.constant 0 : index
    %c0_3 = arith.constant 0 : index
    %c0_4 = arith.constant 0 : index
    %2 = vector.load %arg2[%c0_2, %c0_3, %c0_4] : memref<3x16x16xf32, #tpu.memory_space<vmem>>, vector<3x16x16xf32>
    %3 = vector.shape_cast %2 : vector<3x16x16xf32> to vector<48x16xf32>
    %c0_5 = arith.constant 0 : index
    %c0_6 = arith.constant 0 : index
    %4 = vector.load %arg5[%c0_5, %c0_6] : memref<16x16xf32, #tpu.memory_space<vmem>>, vector<16x16xf32>
    %cst = arith.constant dense<0.000000e+00> : vector<24x16xf32>
    %5 = tpu.matmul %1, %4, %cst {dimension_numbers = #tpu.dot_dimension_numbers<[1], [0], [0], [1], [0, 0, 1, 1], [], []>} : vector<24x16xf32>, vector<16x16xf32>, vector<24x16xf32> -> vector<24x16xf32>
    %c0_7 = arith.constant 0 : index
    %c0_8 = arith.constant 0 : index
    %6 = vector.load %arg6[%c0_7, %c0_8] : memref<1x16xf32, #tpu.memory_space<vmem>>, vector<1x16xf32>
    %7 = vector.broadcast %6 : vector<1x16xf32> to vector<24x16xf32>
    %8 = arith.addf %5, %7 : vector<24x16xf32>
    %c0_9 = arith.constant 0 : index
    %c0_10 = arith.constant 0 : index
    %9 = vector.load %arg7[%c0_9, %c0_10] : memref<16x16xf32, #tpu.memory_space<vmem>>, vector<16x16xf32>
    %cst_11 = arith.constant dense<0.000000e+00> : vector<48x16xf32>
    %10 = tpu.matmul %3, %9, %cst_11 {dimension_numbers = #tpu.dot_dimension_numbers<[1], [0], [0], [1], [0, 0, 1, 1], [], []>} : vector<48x16xf32>, vector<16x16xf32>, vector<48x16xf32> -> vector<48x16xf32>
    %c0_12 = arith.constant 0 : index
    %c0_13 = arith.constant 0 : index
    %11 = vector.load %arg8[%c0_12, %c0_13] : memref<1x16xf32, #tpu.memory_space<vmem>>, vector<1x16xf32>
    %12 = vector.broadcast %11 : vector<1x16xf32> to vector<48x16xf32>
    %13 = arith.addf %10, %12 : vector<48x16xf32>
    %c0_14 = arith.constant 0 : index
    %c0_15 = arith.constant 0 : index
    %c0_16 = arith.constant 0 : index
    %14 = vector.load %arg3[%c0_14, %c0_15, %c0_16] : memref<3x16x4xf32, #tpu.memory_space<vmem>>, vector<3x16x4xf32>
    %c0_17 = arith.constant 0 : index
    %c0_18 = arith.constant 0 : index
    %c0_19 = arith.constant 0 : index
    %15 = vector.load %arg4[%c0_17, %c0_18, %c0_19] : memref<3x16x4xf32, #tpu.memory_space<vmem>>, vector<3x16x4xf32>
    %16 = arith.mulf %15, %14 : vector<3x16x4xf32>
    %17 = tpu.concatenate %16, %15 in 2 : vector<3x16x4xf32>, vector<3x16x4xf32> -> vector<3x16x8xf32>
    %cst_20 = arith.constant dense<0xFF800000> : vector<3x16xf32>
    %18 = vector.multi_reduction <maximumf>, %15, %cst_20 [2] : vector<3x16x4xf32> to vector<3x16xf32>
    %cst_21 = arith.constant 0.000000e+00 : f32
    %19 = vector.broadcast %cst_21 : f32 to vector<3x16xf32>
    %20 = arith.cmpf ogt, %18, %19 : vector<3x16xf32>
    %cst_22 = arith.constant 0.000000e+00 : f32
    %cst_23 = arith.constant -1.000000e+09 : f32
    %21 = vector.broadcast %cst_22 : f32 to vector<3x16xf32>
    %22 = vector.broadcast %cst_23 : f32 to vector<3x16xf32>
    %23 = arith.select %20, %21, %22 : vector<3x16xi1>, vector<3x16xf32>
    %24 = vector.shape_cast %23 : vector<3x16xf32> to vector<3x1x16xf32>
    %cst_24 = arith.constant dense<0.000000e+00> : vector<3x4xf32>
    %25 = vector.multi_reduction <add>, %14, %cst_24 [1] : vector<3x16x4xf32> to vector<3x4xf32>
    %cst_25 = arith.constant 1.600000e+01 : f32
    %26 = vector.broadcast %cst_25 : f32 to vector<3x4xf32>
    %27 = arith.divf %25, %26 : vector<3x4xf32>
    %28 = vector.shape_cast %27 : vector<3x4xf32> to vector<3x1x4xf32>
    %29 = vector.extract_strided_slice %8 {offsets = [0, 0], sizes = [24, 8], strides = [1, 1]} : vector<24x16xf32> to vector<24x8xf32>
    %30 = vector.shape_cast %29 : vector<24x8xf32> to vector<3x8x8xf32>
    %31 = vector.extract_strided_slice %13 {offsets = [0, 0], sizes = [48, 8], strides = [1, 1]} : vector<48x16xf32> to vector<48x8xf32>
    %32 = vector.shape_cast %31 : vector<48x8xf32> to vector<3x16x8xf32>
    %cst_26 = arith.constant dense<0.000000e+00> : vector<3x8x16xf32>
    %33 = tpu.matmul %30, %32, %cst_26 {dimension_numbers = #tpu.dot_dimension_numbers<[2], [2], [1], [1], [0, 0, 0, 1, 1, 1], [0], [0]>} : vector<3x8x8xf32>, vector<3x16x8xf32>, vector<3x8x16xf32> -> vector<3x8x16xf32>
    %34 = vector.broadcast %24 : vector<3x1x16xf32> to vector<3x8x16xf32>
    %35 = arith.addf %33, %34 : vector<3x8x16xf32>
    %cst_27 = arith.constant dense<0xFF800000> : vector<3x8xf32>
    %36 = vector.multi_reduction <maximumf>, %35, %cst_27 [2] : vector<3x8x16xf32> to vector<3x8xf32>
    %37 = vector.shape_cast %36 : vector<3x8xf32> to vector<3x8x1xf32>
    %38 = vector.broadcast %37 : vector<3x8x1xf32> to vector<3x8x16xf32>
    %39 = arith.subf %35, %38 : vector<3x8x16xf32>
    %40 = math.exp %39 : vector<3x8x16xf32>
    %cst_28 = arith.constant dense<0.000000e+00> : vector<3x8x8xf32>
    %41 = tpu.matmul %40, %17, %cst_28 {dimension_numbers = #tpu.dot_dimension_numbers<[2], [1], [1], [2], [0, 0, 0, 1, 1, 2], [0], [0]>} : vector<3x8x16xf32>, vector<3x16x8xf32>, vector<3x8x8xf32> -> vector<3x8x8xf32>
    %42 = vector.extract_strided_slice %41 {offsets = [0, 0, 0], sizes = [3, 8, 4], strides = [1, 1, 1]} : vector<3x8x8xf32> to vector<3x8x4xf32>
    %43 = vector.extract_strided_slice %41 {offsets = [0, 0, 4], sizes = [3, 8, 4], strides = [1, 1, 1]} : vector<3x8x8xf32> to vector<3x8x4xf32>
    %cst_29 = arith.constant 0.000000e+00 : f32
    %44 = vector.broadcast %cst_29 : f32 to vector<3x8x4xf32>
    %45 = arith.cmpf ogt, %43, %44 : vector<3x8x4xf32>
    %cst_30 = arith.constant 1.000000e+00 : f32
    %46 = vector.broadcast %cst_30 : f32 to vector<3x8x4xf32>
    %47 = arith.select %45, %43, %46 : vector<3x8x4xi1>, vector<3x8x4xf32>
    %48 = tpu.reciprocal %47 : vector<3x8x4xf32> -> vector<3x8x4xf32>
    %49 = arith.mulf %42, %48 : vector<3x8x4xf32>
    %50 = vector.shape_cast %28 : vector<3x1x4xf32> to vector<3x1x4xf32>
    %51 = vector.broadcast %50 : vector<3x1x4xf32> to vector<3x8x4xf32>
    %52 = arith.select %45, %49, %51 : vector<3x8x4xi1>, vector<3x8x4xf32>
    %53 = vector.extract_strided_slice %8 {offsets = [0, 8], sizes = [24, 8], strides = [1, 1]} : vector<24x16xf32> to vector<24x8xf32>
    %54 = vector.shape_cast %53 : vector<24x8xf32> to vector<3x8x8xf32>
    %55 = vector.extract_strided_slice %13 {offsets = [0, 8], sizes = [48, 8], strides = [1, 1]} : vector<48x16xf32> to vector<48x8xf32>
    %56 = vector.shape_cast %55 : vector<48x8xf32> to vector<3x16x8xf32>
    %cst_31 = arith.constant dense<0.000000e+00> : vector<3x8x16xf32>
    %57 = tpu.matmul %54, %56, %cst_31 {dimension_numbers = #tpu.dot_dimension_numbers<[2], [2], [1], [1], [0, 0, 0, 1, 1, 1], [0], [0]>} : vector<3x8x8xf32>, vector<3x16x8xf32>, vector<3x8x16xf32> -> vector<3x8x16xf32>
    %58 = vector.broadcast %24 : vector<3x1x16xf32> to vector<3x8x16xf32>
    %59 = arith.addf %57, %58 : vector<3x8x16xf32>
    %cst_32 = arith.constant dense<0xFF800000> : vector<3x8xf32>
    %60 = vector.multi_reduction <maximumf>, %59, %cst_32 [2] : vector<3x8x16xf32> to vector<3x8xf32>
    %61 = vector.shape_cast %60 : vector<3x8xf32> to vector<3x8x1xf32>
    %62 = vector.broadcast %61 : vector<3x8x1xf32> to vector<3x8x16xf32>
    %63 = arith.subf %59, %62 : vector<3x8x16xf32>
    %64 = math.exp %63 : vector<3x8x16xf32>
    %cst_33 = arith.constant dense<0.000000e+00> : vector<3x8x8xf32>
    %65 = tpu.matmul %64, %17, %cst_33 {dimension_numbers = #tpu.dot_dimension_numbers<[2], [1], [1], [2], [0, 0, 0, 1, 1, 2], [0], [0]>} : vector<3x8x16xf32>, vector<3x16x8xf32>, vector<3x8x8xf32> -> vector<3x8x8xf32>
    %66 = vector.extract_strided_slice %65 {offsets = [0, 0, 0], sizes = [3, 8, 4], strides = [1, 1, 1]} : vector<3x8x8xf32> to vector<3x8x4xf32>
    %67 = vector.extract_strided_slice %65 {offsets = [0, 0, 4], sizes = [3, 8, 4], strides = [1, 1, 1]} : vector<3x8x8xf32> to vector<3x8x4xf32>
    %cst_34 = arith.constant 0.000000e+00 : f32
    %68 = vector.broadcast %cst_34 : f32 to vector<3x8x4xf32>
    %69 = arith.cmpf ogt, %67, %68 : vector<3x8x4xf32>
    %cst_35 = arith.constant 1.000000e+00 : f32
    %70 = vector.broadcast %cst_35 : f32 to vector<3x8x4xf32>
    %71 = arith.select %69, %67, %70 : vector<3x8x4xi1>, vector<3x8x4xf32>
    %72 = tpu.reciprocal %71 : vector<3x8x4xf32> -> vector<3x8x4xf32>
    %73 = arith.mulf %66, %72 : vector<3x8x4xf32>
    %74 = vector.shape_cast %28 : vector<3x1x4xf32> to vector<3x1x4xf32>
    %75 = vector.broadcast %74 : vector<3x1x4xf32> to vector<3x8x4xf32>
    %76 = arith.select %69, %73, %75 : vector<3x8x4xi1>, vector<3x8x4xf32>
    %77 = tpu.concatenate %52, %76 in 2 : vector<3x8x4xf32>, vector<3x8x4xf32> -> vector<3x8x8xf32>
    %78 = vector.shape_cast %77 : vector<3x8x8xf32> to vector<24x8xf32>
    %c0_36 = arith.constant 0 : index
    %c0_37 = arith.constant 0 : index
    %79 = vector.load %arg9[%c0_36, %c0_37] : memref<8x128xf32, #tpu.memory_space<vmem>>, vector<8x128xf32>
    %cst_38 = arith.constant dense<0.000000e+00> : vector<24x128xf32>
    %80 = tpu.matmul %78, %79, %cst_38 {dimension_numbers = #tpu.dot_dimension_numbers<[1], [0], [0], [1], [0, 0, 1, 1], [], []>} : vector<24x8xf32>, vector<8x128xf32>, vector<24x128xf32> -> vector<24x128xf32>
    %c0_39 = arith.constant 0 : index
    %c0_40 = arith.constant 0 : index
    %81 = vector.load %arg10[%c0_39, %c0_40] : memref<1x128xf32, #tpu.memory_space<vmem>>, vector<1x128xf32>
    %82 = vector.broadcast %81 : vector<1x128xf32> to vector<24x128xf32>
    %83 = arith.addf %80, %82 : vector<24x128xf32>
    %c0_41 = arith.constant 0 : index
    %c0_42 = arith.constant 0 : index
    %84 = vector.load %arg11[%c0_41, %c0_42] : memref<24x128xf32, #tpu.memory_space<vmem>>, vector<24x128xf32>
    tpu.vector_store %arg11[%c0_41, %c0_42], %83 {strides = array<i32>} : memref<24x128xf32, #tpu.memory_space<vmem>>, vector<24x128xf32>,
    return
  }
  func.func @transform_0(%arg0: i32) -> (i32, i32, i32) {
    %c0_i32 = arith.constant 0 : i32
    %c0_i32_0 = arith.constant 0 : i32
    %c0_i32_1 = arith.constant 0 : i32
    return %arg0, %c0_i32, %c0_i32_0 : i32, i32, i32
  }
  func.func @transform_1(%arg0: i32) -> (i32, i32, i32) {
    %c0_i32 = arith.constant 0 : i32
    %c0_i32_0 = arith.constant 0 : i32
    %c0_i32_1 = arith.constant 0 : i32
    return %arg0, %c0_i32, %c0_i32_0 : i32, i32, i32
  }
  func.func @transform_2(%arg0: i32) -> (i32, i32, i32) {
    %c0_i32 = arith.constant 0 : i32
    %c0_i32_0 = arith.constant 0 : i32
    %c0_i32_1 = arith.constant 0 : i32
    return %arg0, %c0_i32, %c0_i32_0 : i32, i32, i32
  }
  func.func @transform_3(%arg0: i32) -> (i32, i32, i32) {
    %c0_i32 = arith.constant 0 : i32
    %c0_i32_0 = arith.constant 0 : i32
    %c0_i32_1 = arith.constant 0 : i32
    return %arg0, %c0_i32, %c0_i32_0 : i32, i32, i32
  }
  func.func @transform_4(%arg0: i32) -> (i32, i32) {
    %c0_i32 = arith.constant 0 : i32
    %c0_i32_0 = arith.constant 0 : i32
    %c0_i32_1 = arith.constant 0 : i32
    return %c0_i32, %c0_i32_0 : i32, i32
  }
  func.func @transform_5(%arg0: i32) -> (i32, i32) {
    %c0_i32 = arith.constant 0 : i32
    %c0_i32_0 = arith.constant 0 : i32
    %c0_i32_1 = arith.constant 0 : i32
    return %c0_i32, %c0_i32_0 : i32, i32
  }
  func.func @transform_6(%arg0: i32) -> (i32, i32) {
    %c0_i32 = arith.constant 0 : i32
    %c0_i32_0 = arith.constant 0 : i32
    %c0_i32_1 = arith.constant 0 : i32
    return %c0_i32, %c0_i32_0 : i32, i32
  }
  func.func @transform_7(%arg0: i32) -> (i32, i32) {
    %c0_i32 = arith.constant 0 : i32
    %c0_i32_0 = arith.constant 0 : i32
    %c0_i32_1 = arith.constant 0 : i32
    return %c0_i32, %c0_i32_0 : i32, i32
  }
  func.func @transform_8(%arg0: i32) -> (i32, i32) {
    %c0_i32 = arith.constant 0 : i32
    %c0_i32_0 = arith.constant 0 : i32
    %c0_i32_1 = arith.constant 0 : i32
    return %c0_i32, %c0_i32_0 : i32, i32
  }
  func.func @transform_9(%arg0: i32) -> (i32, i32) {
    %c0_i32 = arith.constant 0 : i32
    %c0_i32_0 = arith.constant 0 : i32
    %c0_i32_1 = arith.constant 0 : i32
    return %c0_i32, %c0_i32_0 : i32, i32
  }
  func.func @transform_10(%arg0: i32) -> (i32, i32) {
    %c0_i32 = arith.constant 0 : i32
    %c0_i32_0 = arith.constant 0 : i32
    return %arg0, %c0_i32 : i32, i32
  }
}

module attributes {stable_mosaic.version = 11 : i64} {
  func.func @_mtan_kernel(%arg0: i32, %arg1: memref<3x8x16xf32, #tpu.memory_space<vmem>>, %arg2: memref<3x16x16xf32, #tpu.memory_space<vmem>>, %arg3: memref<3x16x4xf32, #tpu.memory_space<vmem>>, %arg4: memref<3x16x4xf32, #tpu.memory_space<vmem>>, %arg5: memref<16x16xf32, #tpu.memory_space<vmem>>, %arg6: memref<1x16xf32, #tpu.memory_space<vmem>>, %arg7: memref<16x16xf32, #tpu.memory_space<vmem>>, %arg8: memref<1x16xf32, #tpu.memory_space<vmem>>, %arg9: memref<8x128xf32, #tpu.memory_space<vmem>>, %arg10: memref<1x128xf32, #tpu.memory_space<vmem>>, %arg11: memref<24x128xf32, #tpu.memory_space<vmem>>) attributes {dimension_semantics = [#tpu.dimension_semantics<parallel>], iteration_bounds = array<i64: 2>, scalar_prefetch = 0 : i64, scratch_operands = 0 : i64, tpu.core_type = #tpu.core_type<tc>, window_params = [{transform_indices = @transform_0, window_bounds = array<i64: 3, 8, 16>}, {transform_indices = @transform_1, window_bounds = array<i64: 3, 16, 16>}, {transform_indices = @transform_2, window_bounds = array<i64: 3, 16, 4>}, {transform_indices = @transform_3, window_bounds = array<i64: 3, 16, 4>}, {pipeline_mode = #tpu.pipeline_mode<synchronous>, transform_indices = @transform_4, window_bounds = array<i64: 16, 16>}, {pipeline_mode = #tpu.pipeline_mode<synchronous>, transform_indices = @transform_5, window_bounds = array<i64: 1, 16>}, {pipeline_mode = #tpu.pipeline_mode<synchronous>, transform_indices = @transform_6, window_bounds = array<i64: 16, 16>}, {pipeline_mode = #tpu.pipeline_mode<synchronous>, transform_indices = @transform_7, window_bounds = array<i64: 1, 16>}, {pipeline_mode = #tpu.pipeline_mode<synchronous>, transform_indices = @transform_8, window_bounds = array<i64: 8, 128>}, {pipeline_mode = #tpu.pipeline_mode<synchronous>, transform_indices = @transform_9, window_bounds = array<i64: 1, 128>}, {transform_indices = @transform_10, window_bounds = array<i64: 24, 128>}]} {
    %c0 = arith.constant 0 : index
    %c0_0 = arith.constant 0 : index
    %c0_1 = arith.constant 0 : index
    %0 = vector.load %arg1[%c0, %c0_0, %c0_1] : memref<3x8x16xf32, #tpu.memory_space<vmem>>, vector<3x8x16xf32>
    %1 = vector.shape_cast %0 : vector<3x8x16xf32> to vector<24x16xf32>
    %c0_2 = arith.constant 0 : index
    %c0_3 = arith.constant 0 : index
    %c0_4 = arith.constant 0 : index
    %2 = vector.load %arg2[%c0_2, %c0_3, %c0_4] : memref<3x16x16xf32, #tpu.memory_space<vmem>>, vector<3x16x16xf32>
    %3 = vector.shape_cast %2 : vector<3x16x16xf32> to vector<48x16xf32>
    %c0_5 = arith.constant 0 : index
    %c0_6 = arith.constant 0 : index
    %4 = vector.load %arg5[%c0_5, %c0_6] : memref<16x16xf32, #tpu.memory_space<vmem>>, vector<16x16xf32>
    %cst = arith.constant dense<0.000000e+00> : vector<24x16xf32>
    %5 = tpu.matmul %1, %4, %cst {dimension_numbers = #tpu.dot_dimension_numbers<[1], [0], [0], [1], [0, 0, 1, 1], [], []>} : vector<24x16xf32>, vector<16x16xf32>, vector<24x16xf32> -> vector<24x16xf32>
    %c0_7 = arith.constant 0 : index
    %c0_8 = arith.constant 0 : index
    %6 = vector.load %arg6[%c0_7, %c0_8] : memref<1x16xf32, #tpu.memory_space<vmem>>, vector<1x16xf32>
    %7 = vector.broadcast %6 : vector<1x16xf32> to vector<24x16xf32>
    %8 = arith.addf %5, %7 : vector<24x16xf32>
    %c0_9 = arith.constant 0 : index
    %c0_10 = arith.constant 0 : index
    %9 = vector.load %arg7[%c0_9, %c0_10] : memref<16x16xf32, #tpu.memory_space<vmem>>, vector<16x16xf32>
    %cst_11 = arith.constant dense<0.000000e+00> : vector<48x16xf32>
    %10 = tpu.matmul %3, %9, %cst_11 {dimension_numbers = #tpu.dot_dimension_numbers<[1], [0], [0], [1], [0, 0, 1, 1], [], []>} : vector<48x16xf32>, vector<16x16xf32>, vector<48x16xf32> -> vector<48x16xf32>
    %c0_12 = arith.constant 0 : index
    %c0_13 = arith.constant 0 : index
    %11 = vector.load %arg8[%c0_12, %c0_13] : memref<1x16xf32, #tpu.memory_space<vmem>>, vector<1x16xf32>
    %12 = vector.broadcast %11 : vector<1x16xf32> to vector<48x16xf32>
    %13 = arith.addf %10, %12 : vector<48x16xf32>
    %c0_14 = arith.constant 0 : index
    %c0_15 = arith.constant 0 : index
    %c0_16 = arith.constant 0 : index
    %14 = vector.load %arg3[%c0_14, %c0_15, %c0_16] : memref<3x16x4xf32, #tpu.memory_space<vmem>>, vector<3x16x4xf32>
    %c0_17 = arith.constant 0 : index
    %c0_18 = arith.constant 0 : index
    %c0_19 = arith.constant 0 : index
    %15 = vector.load %arg4[%c0_17, %c0_18, %c0_19] : memref<3x16x4xf32, #tpu.memory_space<vmem>>, vector<3x16x4xf32>
    %16 = arith.mulf %15, %14 : vector<3x16x4xf32>
    %17 = tpu.concatenate %16, %15 in 2 : vector<3x16x4xf32>, vector<3x16x4xf32> -> vector<3x16x8xf32>
    %cst_20 = arith.constant dense<0xFF800000> : vector<3x16xf32>
    %18 = vector.multi_reduction <maximumf>, %15, %cst_20 [2] : vector<3x16x4xf32> to vector<3x16xf32>
    %cst_21 = arith.constant 0.000000e+00 : f32
    %19 = vector.broadcast %cst_21 : f32 to vector<3x16xf32>
    %20 = arith.cmpf ogt, %18, %19 : vector<3x16xf32>
    %cst_22 = arith.constant 0.000000e+00 : f32
    %cst_23 = arith.constant -1.000000e+09 : f32
    %21 = vector.broadcast %cst_22 : f32 to vector<3x16xf32>
    %22 = vector.broadcast %cst_23 : f32 to vector<3x16xf32>
    %23 = arith.select %20, %21, %22 : vector<3x16xi1>, vector<3x16xf32>
    %24 = vector.shape_cast %23 : vector<3x16xf32> to vector<3x1x16xf32>
    %cst_24 = arith.constant dense<0.000000e+00> : vector<3x4xf32>
    %25 = vector.multi_reduction <add>, %14, %cst_24 [1] : vector<3x16x4xf32> to vector<3x4xf32>
    %cst_25 = arith.constant 1.600000e+01 : f32
    %26 = vector.broadcast %cst_25 : f32 to vector<3x4xf32>
    %27 = arith.divf %25, %26 : vector<3x4xf32>
    %28 = vector.shape_cast %27 : vector<3x4xf32> to vector<3x1x4xf32>
    %29 = vector.extract_strided_slice %8 {offsets = [0, 0], sizes = [24, 8], strides = [1, 1]} : vector<24x16xf32> to vector<24x8xf32>
    %30 = vector.shape_cast %29 : vector<24x8xf32> to vector<3x8x8xf32>
    %31 = vector.extract_strided_slice %13 {offsets = [0, 0], sizes = [48, 8], strides = [1, 1]} : vector<48x16xf32> to vector<48x8xf32>
    %32 = vector.shape_cast %31 : vector<48x8xf32> to vector<3x16x8xf32>
    %cst_26 = arith.constant dense<0.000000e+00> : vector<3x8x16xf32>
    %33 = tpu.matmul %30, %32, %cst_26 {dimension_numbers = #tpu.dot_dimension_numbers<[2], [2], [1], [1], [0, 0, 0, 1, 1, 1], [0], [0]>} : vector<3x8x8xf32>, vector<3x16x8xf32>, vector<3x8x16xf32> -> vector<3x8x16xf32>
    %34 = vector.broadcast %24 : vector<3x1x16xf32> to vector<3x8x16xf32>
    %35 = arith.addf %33, %34 : vector<3x8x16xf32>
    %cst_27 = arith.constant dense<0xFF800000> : vector<3x8xf32>
    %36 = vector.multi_reduction <maximumf>, %35, %cst_27 [2] : vector<3x8x16xf32> to vector<3x8xf32>
    %37 = vector.shape_cast %36 : vector<3x8xf32> to vector<3x8x1xf32>
    %38 = vector.broadcast %37 : vector<3x8x1xf32> to vector<3x8x16xf32>
    %39 = arith.subf %35, %38 : vector<3x8x16xf32>
    %40 = math.exp %39 : vector<3x8x16xf32>
    %cst_28 = arith.constant dense<0.000000e+00> : vector<3x8x8xf32>
    %41 = tpu.matmul %40, %17, %cst_28 {dimension_numbers = #tpu.dot_dimension_numbers<[2], [1], [1], [2], [0, 0, 0, 1, 1, 2], [0], [0]>} : vector<3x8x16xf32>, vector<3x16x8xf32>, vector<3x8x8xf32> -> vector<3x8x8xf32>
    %42 = vector.extract_strided_slice %41 {offsets = [0, 0, 0], sizes = [3, 8, 4], strides = [1, 1, 1]} : vector<3x8x8xf32> to vector<3x8x4xf32>
    %43 = vector.extract_strided_slice %41 {offsets = [0, 0, 4], sizes = [3, 8, 4], strides = [1, 1, 1]} : vector<3x8x8xf32> to vector<3x8x4xf32>
    %cst_29 = arith.constant 0.000000e+00 : f32
    %44 = vector.broadcast %cst_29 : f32 to vector<3x8x4xf32>
    %45 = arith.cmpf ogt, %43, %44 : vector<3x8x4xf32>
    %cst_30 = arith.constant 1.000000e+00 : f32
    %46 = vector.broadcast %cst_30 : f32 to vector<3x8x4xf32>
    %47 = arith.select %45, %43, %46 : vector<3x8x4xi1>, vector<3x8x4xf32>
    %48 = tpu.reciprocal %47 : vector<3x8x4xf32> -> vector<3x8x4xf32>
    %49 = arith.mulf %42, %48 : vector<3x8x4xf32>
    %50 = vector.shape_cast %28 : vector<3x1x4xf32> to vector<3x1x4xf32>
    %51 = vector.broadcast %50 : vector<3x1x4xf32> to vector<3x8x4xf32>
    %52 = arith.select %45, %49, %51 : vector<3x8x4xi1>, vector<3x8x4xf32>
    %53 = vector.extract_strided_slice %8 {offsets = [0, 8], sizes = [24, 8], strides = [1, 1]} : vector<24x16xf32> to vector<24x8xf32>
    %54 = vector.shape_cast %53 : vector<24x8xf32> to vector<3x8x8xf32>
    %55 = vector.extract_strided_slice %13 {offsets = [0, 8], sizes = [48, 8], strides = [1, 1]} : vector<48x16xf32> to vector<48x8xf32>
    %56 = vector.shape_cast %55 : vector<48x8xf32> to vector<3x16x8xf32>
    %cst_31 = arith.constant dense<0.000000e+00> : vector<3x8x16xf32>
    %57 = tpu.matmul %54, %56, %cst_31 {dimension_numbers = #tpu.dot_dimension_numbers<[2], [2], [1], [1], [0, 0, 0, 1, 1, 1], [0], [0]>} : vector<3x8x8xf32>, vector<3x16x8xf32>, vector<3x8x16xf32> -> vector<3x8x16xf32>
    %58 = vector.broadcast %24 : vector<3x1x16xf32> to vector<3x8x16xf32>
    %59 = arith.addf %57, %58 : vector<3x8x16xf32>
    %cst_32 = arith.constant dense<0xFF800000> : vector<3x8xf32>
    %60 = vector.multi_reduction <maximumf>, %59, %cst_32 [2] : vector<3x8x16xf32> to vector<3x8xf32>
    %61 = vector.shape_cast %60 : vector<3x8xf32> to vector<3x8x1xf32>
    %62 = vector.broadcast %61 : vector<3x8x1xf32> to vector<3x8x16xf32>
    %63 = arith.subf %59, %62 : vector<3x8x16xf32>
    %64 = math.exp %63 : vector<3x8x16xf32>
    %cst_33 = arith.constant dense<0.000000e+00> : vector<3x8x8xf32>
    %65 = tpu.matmul %64, %17, %cst_33 {dimension_numbers = #tpu.dot_dimension_numbers<[2], [1], [1], [2], [0, 0, 0, 1, 1, 2], [0], [0]>} : vector<3x8x16xf32>, vector<3x16x8xf32>, vector<3x8x8xf32> -> vector<3x8x8xf32>
    %66 = vector.extract_strided_slice %65 {offsets = [0, 0, 0], sizes = [3, 8, 4], strides = [1, 1, 1]} : vector<3x8x8xf32> to vector<3x8x4xf32>
    %67 = vector.extract_strided_slice %65 {offsets = [0, 0, 4], sizes = [3, 8, 4], strides = [1, 1, 1]} : vector<3x8x8xf32> to vector<3x8x4xf32>
    %cst_34 = arith.constant 0.000000e+00 : f32
    %68 = vector.broadcast %cst_34 : f32 to vector<3x8x4xf32>
    %69 = arith.cmpf ogt, %67, %68 : vector<3x8x4xf32>
    %cst_35 = arith.constant 1.000000e+00 : f32
    %70 = vector.broadcast %cst_35 : f32 to vector<3x8x4xf32>
    %71 = arith.select %69, %67, %70 : vector<3x8x4xi1>, vector<3x8x4xf32>
    %72 = tpu.reciprocal %71 : vector<3x8x4xf32> -> vector<3x8x4xf32>
    %73 = arith.mulf %66, %72 : vector<3x8x4xf32>
    %74 = vector.shape_cast %28 : vector<3x1x4xf32> to vector<3x1x4xf32>
    %75 = vector.broadcast %74 : vector<3x1x4xf32> to vector<3x8x4xf32>
    %76 = arith.select %69, %73, %75 : vector<3x8x4xi1>, vector<3x8x4xf32>
    %77 = tpu.concatenate %52, %76 in 2 : vector<3x8x4xf32>, vector<3x8x4xf32> -> vector<3x8x8xf32>
    %78 = vector.shape_cast %77 : vector<3x8x8xf32> to vector<24x8xf32>
    %c0_36 = arith.constant 0 : index
    %c0_37 = arith.constant 0 : index
    %79 = vector.load %arg9[%c0_36, %c0_37] : memref<8x128xf32, #tpu.memory_space<vmem>>, vector<8x128xf32>
    %cst_38 = arith.constant dense<0.000000e+00> : vector<24x128xf32>
    %80 = tpu.matmul %78, %79, %cst_38 {dimension_numbers = #tpu.dot_dimension_numbers<[1], [0], [0], [1], [0, 0, 1, 1], [], []>} : vector<24x8xf32>, vector<8x128xf32>, vector<24x128xf32> -> vector<24x128xf32>
    %c0_39 = arith.constant 0 : index
    %c0_40 = arith.constant 0 : index
    %81 = vector.load %arg10[%c0_39, %c0_40] : memref<1x128xf32, #tpu.memory_space<vmem>>, vector<1x128xf32>
    %82 = vector.broadcast %81 : vector<1x128xf32> to vector<24x128xf32>
    %83 = arith.addf %80, %82 : vector<24x128xf32>
    %c0_41 = arith.constant 0 : index
    %c0_42 = arith.constant 0 : index
    %84 = vector.load %arg11[%c0_41, %c0_42] : memref<24x128xf32, #tpu.memory_space<vmem>>, vector<24x128xf32>
    tpu.vector_store %arg11[%c0_41, %c0_42], %83 {strides = array<i32>} : memref<24x128xf32, #tpu.memory_space<vmem>>, vector<24x128xf32>,
    return
  }
  func.func @transform_0(%arg0: i32) -> (i32, i32, i32) {
    %c0_i32 = arith.constant 0 : i32
    %c0_i32_0 = arith.constant 0 : i32
    %c0_i32_1 = arith.constant 0 : i32
    return %arg0, %c0_i32, %c0_i32_0 : i32, i32, i32
  }
  func.func @transform_1(%arg0: i32) -> (i32, i32, i32) {
    %c0_i32 = arith.constant 0 : i32
    %c0_i32_0 = arith.constant 0 : i32
    %c0_i32_1 = arith.constant 0 : i32
    return %arg0, %c0_i32, %c0_i32_0 : i32, i32, i32
  }
  func.func @transform_2(%arg0: i32) -> (i32, i32, i32) {
    %c0_i32 = arith.constant 0 : i32
    %c0_i32_0 = arith.constant 0 : i32
    %c0_i32_1 = arith.constant 0 : i32
    return %arg0, %c0_i32, %c0_i32_0 : i32, i32, i32
  }
  func.func @transform_3(%arg0: i32) -> (i32, i32, i32) {
    %c0_i32 = arith.constant 0 : i32
    %c0_i32_0 = arith.constant 0 : i32
    %c0_i32_1 = arith.constant 0 : i32
    return %arg0, %c0_i32, %c0_i32_0 : i32, i32, i32
  }
  func.func @transform_4(%arg0: i32) -> (i32, i32) {
    %c0_i32 = arith.constant 0 : i32
    %c0_i32_0 = arith.constant 0 : i32
    %c0_i32_1 = arith.constant 0 : i32
    return %c0_i32, %c0_i32_0 : i32, i32
  }
  func.func @transform_5(%arg0: i32) -> (i32, i32) {
    %c0_i32 = arith.constant 0 : i32
    %c0_i32_0 = arith.constant 0 : i32
    %c0_i32_1 = arith.constant 0 : i32
    return %c0_i32, %c0_i32_0 : i32, i32
  }
  func.func @transform_6(%arg0: i32) -> (i32, i32) {
    %c0_i32 = arith.constant 0 : i32
    %c0_i32_0 = arith.constant 0 : i32
    %c0_i32_1 = arith.constant 0 : i32
    return %c0_i32, %c0_i32_0 : i32, i32
  }
  func.func @transform_7(%arg0: i32) -> (i32, i32) {
    %c0_i32 = arith.constant 0 : i32
    %c0_i32_0 = arith.constant 0 : i32
    %c0_i32_1 = arith.constant 0 : i32
    return %c0_i32, %c0_i32_0 : i32, i32
  }
  func.func @transform_8(%arg0: i32) -> (i32, i32) {
    %c0_i32 = arith.constant 0 : i32
    %c0_i32_0 = arith.constant 0 : i32
    %c0_i32_1 = arith.constant 0 : i32
    return %c0_i32, %c0_i32_0 : i32, i32
  }
  func.func @transform_9(%arg0: i32) -> (i32, i32) {
    %c0_i32 = arith.constant 0 : i32
    %c0_i32_0 = arith.constant 0 : i32
    %c0_i32_1 = arith.constant 0 : i32
    return %c0_i32, %c0_i32_0 : i32, i32
  }
  func.func @transform_10(%arg0: i32) -> (i32, i32) {
    %c0_i32 = arith.constant 0 : i32
    %c0_i32_0 = arith.constant 0 : i32
    return %arg0, %c0_i32 : i32, i32
  }
}

</mosaic_0001>

<llo_original>
// kernel: tpu_custom_call.1
$region0: #{tpu_custom_call.1}
  #allocation0 [shape = 'u32[]', space=smem, size = 0x4, offset = 0x4, fixed_abs, tag = 'smem constant byte address 0x4 - core index']
  #allocation1 [shape = 'u32[144,128]{1,0:T(1,128)}', space=vmem, size = 0x12000, scoped, tag = 'internal scratch']
  %s0 = inlined_call_operand.vmem [shape: f32[6,8,16], index: 0, kind: input, shape index: {}]
  %s1 = inlined_call_operand.vmem [shape: f32[6,16,16], index: 1, kind: input, shape index: {}]
  %s2 = inlined_call_operand.vmem [shape: f32[6,16,4], index: 2, kind: input, shape index: {}]
  %s3 = inlined_call_operand.vmem [shape: f32[6,16,4], index: 3, kind: input, shape index: {}]
  %s4 = inlined_call_operand.vmem [shape: f32[16,16], index: 4, kind: input, shape index: {}]
  %s5 = inlined_call_operand.vmem [shape: f32[1,16], index: 5, kind: input, shape index: {}]
  %s6 = inlined_call_operand.vmem [shape: f32[16,16], index: 6, kind: input, shape index: {}]
  %s7 = inlined_call_operand.vmem [shape: f32[1,16], index: 7, kind: input, shape index: {}]
  %s8 = inlined_call_operand.vmem [shape: f32[8,128], index: 8, kind: input, shape index: {}]
  %s9 = inlined_call_operand.vmem [shape: f32[1,128], index: 9, kind: input, shape index: {}]
  %s10 = inlined_call_operand.hbm [shape: f32[48,128], index: 10, kind: output, shape index: {}]
  %s11 = sld [smem:[#allocation0]]
  $region73: #{tpu_custom_call.1} parent=0
    _
  %s13 = ssub.s32 1, %s11
  %s14 = scalar_select 0, %s13, %s11
  $region1: #{tpu_custom_call.1} parent=0
    #allocation2 [shape = 'u8[24576]{0}', space=vmem, size = 0x6000, scoped, tag = 'output window, operand 0']
    #allocation3 [shape = 's32[2]{0}', space=sflag, size = 0x8, scoped, tag = 'scoped memory for tpu_custom_call.1']
    %15 = vsyncpa [#allocation3], 0
    %s16 = scalar_lea.sflag [#allocation3], 1
    %17 = vsyncpa %s16, 0
    loop: start=0, step=1, limit=4
    $region2: #{tpu_custom_call.1} parent=1 // loop_pre_header
      _
    $region3: #{tpu_custom_call.1} parent=1 // loop_header
      %s19 = sphi 0, %s23
      %p20 = scmp.ge.s32.totalorder %s19, 4
      %s29 = sphi 0, %s31
      %s32 = sphi 0, %s29
      %s33 = sphi 0, %s32
      %s49 = sphi 0, %s33
      %s55 = sphi 0, %s57
      %s58 = sphi 0, %s55
      %s59 = sphi 0, %s58
      %s75 = sphi 0, %s59
      %s81 = sphi 0, %s83
      %s84 = sphi 0, %s81
      %s85 = sphi 0, %s84
      %s101 = sphi 0, %s85
      %s107 = sphi 0, %s109
      %s110 = sphi 0, %s107
      %s111 = sphi 0, %s110
      %s127 = sphi 0, %s111
      %s131 = sphi 0, %s131
      %s133 = sphi 0, %s131
      %s134 = sphi 0, %s133
      %s148 = sphi 0, %s134
      %s152 = sphi 0, %s152
      %s154 = sphi 0, %s152
      %s155 = sphi 0, %s154
      %s169 = sphi 0, %s155
      %s173 = sphi 0, %s173
      %s175 = sphi 0, %s173
      %s176 = sphi 0, %s175
      %s190 = sphi 0, %s176
      %s194 = sphi 0, %s194
      %s196 = sphi 0, %s194
      %s197 = sphi 0, %s196
      %s211 = sphi 0, %s197
      %s215 = sphi 0, %s215
      %s217 = sphi 0, %s215
      %s218 = sphi 0, %s217
      %s232 = sphi 0, %s218
      %s236 = sphi 0, %s236
      %s238 = sphi 0, %s236
      %s239 = sphi 0, %s238
      %s253 = sphi 0, %s239
      %s259 = sphi 0, %s261
      %s262 = sphi 0, %s259
      %s263 = sphi 0, %s262
      %s279 = sphi 0, %s263
    $region4: #{tpu_custom_call.1} parent=1 // loop_header_branch
      %22 = sbr.rel (%p20) target = $region8
    $region5: #{tpu_custom_call.1} parent=1 // loop_body
      %s24 = ssub.s32 %s19, 1
      %s25 = ssub.s32 %s19, 2
      %s26 = sadd.s32 %s19, 1
      %s27 = ssub.s32 %s19, %s26
      %p28 = scmp.eq.s32.totalorder %s27, 0
      %s30 = sadd.s32 %s29, 1
      %s31 = scalar_select %p28, %s29, %s30
      %p34 = pneg %p28
      %p35 = scmp.eq.s32.totalorder %s19, 1
      %p36 = por %p34, %p35
      %p37 = scmp.ne.s32.totalorder %s29, %s32
      %p38 = scmp.eq.s32.totalorder %s19, 0
      %p39 = por %p37, %p38
      %p40 = scmp.ne.s32.totalorder %s29, %s32
      %p41 = scmp.eq.s32.totalorder %s24, 1
      %p42 = por %p40, %p41
      %p43 = scmp.ne.s32.totalorder %s32, %s33
      %p44 = scmp.eq.s32.totalorder %s24, 0
      %p45 = por %p43, %p44
      %p46 = scmp.ne.s32.totalorder %s32, %s33
      %p47 = scmp.eq.s32.totalorder %s25, 1
      %p48 = por %p46, %p47
      %p50 = scmp.ne.s32.totalorder %s33, %s49
      %p51 = scmp.eq.s32.totalorder %s25, 0
      %p52 = por %p50, %p51
      %s53 = ssub.s32 %s19, %s26
      %p54 = scmp.eq.s32.totalorder %s53, 0
      %s56 = sadd.s32 %s55, 1
      %s57 = scalar_select %p54, %s55, %s56
      %p60 = pneg %p54
      %p61 = scmp.eq.s32.totalorder %s19, 1
      %p62 = por %p60, %p61
      %p63 = scmp.ne.s32.totalorder %s55, %s58
      %p64 = scmp.eq.s32.totalorder %s19, 0
      %p65 = por %p63, %p64
      %p66 = scmp.ne.s32.totalorder %s55, %s58
      %p67 = scmp.eq.s32.totalorder %s24, 1
      %p68 = por %p66, %p67
      %p69 = scmp.ne.s32.totalorder %s58, %s59
      %p70 = scmp.eq.s32.totalorder %s24, 0
      %p71 = por %p69, %p70
      %p72 = scmp.ne.s32.totalorder %s58, %s59
      %p73 = scmp.eq.s32.totalorder %s25, 1
      %p74 = por %p72, %p73
      %p76 = scmp.ne.s32.totalorder %s59, %s75
      %p77 = scmp.eq.s32.totalorder %s25, 0
      %p78 = por %p76, %p77
      %s79 = ssub.s32 %s19, %s26
      %p80 = scmp.eq.s32.totalorder %s79, 0
      %s82 = sadd.s32 %s81, 1
      %s83 = scalar_select %p80, %s81, %s82
      %p86 = pneg %p80
      %p87 = scmp.eq.s32.totalorder %s19, 1
      %p88 = por %p86, %p87
      %p89 = scmp.ne.s32.totalorder %s81, %s84
      %p90 = scmp.eq.s32.totalorder %s19, 0
      %p91 = por %p89, %p90
      %p92 = scmp.ne.s32.totalorder %s81, %s84
      %p93 = scmp.eq.s32.totalorder %s24, 1
      %p94 = por %p92, %p93
      %p95 = scmp.ne.s32.totalorder %s84, %s85
      %p96 = scmp.eq.s32.totalorder %s24, 0
      %p97 = por %p95, %p96
      %p98 = scmp.ne.s32.totalorder %s84, %s85
      %p99 = scmp.eq.s32.totalorder %s25, 1
      %p100 = por %p98, %p99
      %p102 = scmp.ne.s32.totalorder %s85, %s101
      %p103 = scmp.eq.s32.totalorder %s25, 0
      %p104 = por %p102, %p103
      %s105 = ssub.s32 %s19, %s26
      %p106 = scmp.eq.s32.totalorder %s105, 0
      %s108 = sadd.s32 %s107, 1
      %s109 = scalar_select %p106, %s107, %s108
      %p112 = pneg %p106
      %p113 = scmp.eq.s32.totalorder %s19, 1
      %p114 = por %p112, %p113
      %p115 = scmp.ne.s32.totalorder %s107, %s110
      %p116 = scmp.eq.s32.totalorder %s19, 0
      %p117 = por %p115, %p116
      %p118 = scmp.ne.s32.totalorder %s107, %s110
      %p119 = scmp.eq.s32.totalorder %s24, 1
      %p120 = por %p118, %p119
      %p121 = scmp.ne.s32.totalorder %s110, %s111
      %p122 = scmp.eq.s32.totalorder %s24, 0
      %p123 = por %p121, %p122
      %p124 = scmp.ne.s32.totalorder %s110, %s111
      %p125 = scmp.eq.s32.totalorder %s25, 1
      %p126 = por %p124, %p125
      %p128 = scmp.ne.s32.totalorder %s111, %s127
      %p129 = scmp.eq.s32.totalorder %s25, 0
      %p130 = por %p128, %p129
      %s132 = sadd.s32 %s131, 1
      %p135 = scmp.eq.s32.totalorder %s19, 1
      %p136 = scmp.ne.s32.totalorder %s131, %s133
      %p137 = scmp.eq.s32.totalorder %s19, 0
      %p138 = por %p136, %p137
      %p139 = scmp.ne.s32.totalorder %s131, %s133
      %p140 = scmp.eq.s32.totalorder %s24, 1
      %p141 = por %p139, %p140
      %p142 = scmp.ne.s32.totalorder %s133, %s134
      %p143 = scmp.eq.s32.totalorder %s24, 0
      %p144 = por %p142, %p143
      %p145 = scmp.ne.s32.totalorder %s133, %s134
      %p146 = scmp.eq.s32.totalorder %s25, 1
      %p147 = por %p145, %p146
      %p149 = scmp.ne.s32.totalorder %s134, %s148
      %p150 = scmp.eq.s32.totalorder %s25, 0
      %p151 = por %p149, %p150
      %s153 = sadd.s32 %s152, 1
      %p156 = scmp.eq.s32.totalorder %s19, 1
      %p157 = scmp.ne.s32.totalorder %s152, %s154
      %p158 = scmp.eq.s32.totalorder %s19, 0
      %p159 = por %p157, %p158
      %p160 = scmp.ne.s32.totalorder %s152, %s154
      %p161 = scmp.eq.s32.totalorder %s24, 1
      %p162 = por %p160, %p161
      %p163 = scmp.ne.s32.totalorder %s154, %s155
      %p164 = scmp.eq.s32.totalorder %s24, 0
      %p165 = por %p163, %p164
      %p166 = scmp.ne.s32.totalorder %s154, %s155
      %p167 = scmp.eq.s32.totalorder %s25, 1
      %p168 = por %p166, %p167
      %p170 = scmp.ne.s32.totalorder %s155, %s169
      %p171 = scmp.eq.s32.totalorder %s25, 0
      %p172 = por %p170, %p171
      %s174 = sadd.s32 %s173, 1
      %p177 = scmp.eq.s32.totalorder %s19, 1
      %p178 = scmp.ne.s32.totalorder %s173, %s175
      %p179 = scmp.eq.s32.totalorder %s19, 0
      %p180 = por %p178, %p179
      %p181 = scmp.ne.s32.totalorder %s173, %s175
      %p182 = scmp.eq.s32.totalorder %s24, 1
      %p183 = por %p181, %p182
      %p184 = scmp.ne.s32.totalorder %s175, %s176
      %p185 = scmp.eq.s32.totalorder %s24, 0
      %p186 = por %p184, %p185
      %p187 = scmp.ne.s32.totalorder %s175, %s176
      %p188 = scmp.eq.s32.totalorder %s25, 1
      %p189 = por %p187, %p188
      %p191 = scmp.ne.s32.totalorder %s176, %s190
      %p192 = scmp.eq.s32.totalorder %s25, 0
      %p193 = por %p191, %p192
      %s195 = sadd.s32 %s194, 1
      %p198 = scmp.eq.s32.totalorder %s19, 1
      %p199 = scmp.ne.s32.totalorder %s194, %s196
      %p200 = scmp.eq.s32.totalorder %s19, 0
      %p201 = por %p199, %p200
      %p202 = scmp.ne.s32.totalorder %s194, %s196
      %p203 = scmp.eq.s32.totalorder %s24, 1
      %p204 = por %p202, %p203
      %p205 = scmp.ne.s32.totalorder %s196, %s197
      %p206 = scmp.eq.s32.totalorder %s24, 0
      %p207 = por %p205, %p206
      %p208 = scmp.ne.s32.totalorder %s196, %s197
      %p209 = scmp.eq.s32.totalorder %s25, 1
      %p210 = por %p208, %p209
      %p212 = scmp.ne.s32.totalorder %s197, %s211
      %p213 = scmp.eq.s32.totalorder %s25, 0
      %p214 = por %p212, %p213
      %s216 = sadd.s32 %s215, 1
      %p219 = scmp.eq.s32.totalorder %s19, 1
      %p220 = scmp.ne.s32.totalorder %s215, %s217
      %p221 = scmp.eq.s32.totalorder %s19, 0
      %p222 = por %p220, %p221
      %p223 = scmp.ne.s32.totalorder %s215, %s217
      %p224 = scmp.eq.s32.totalorder %s24, 1
      %p225 = por %p223, %p224
      %p226 = scmp.ne.s32.totalorder %s217, %s218
      %p227 = scmp.eq.s32.totalorder %s24, 0
      %p228 = por %p226, %p227
      %p229 = scmp.ne.s32.totalorder %s217, %s218
      %p230 = scmp.eq.s32.totalorder %s25, 1
      %p231 = por %p229, %p230
      %p233 = scmp.ne.s32.totalorder %s218, %s232
      %p234 = scmp.eq.s32.totalorder %s25, 0
      %p235 = por %p233, %p234
      %s237 = sadd.s32 %s236, 1
      %p240 = scmp.eq.s32.totalorder %s19, 1
      %p241 = scmp.ne.s32.totalorder %s236, %s238
      %p242 = scmp.eq.s32.totalorder %s19, 0
      %p243 = por %p241, %p242
      %p244 = scmp.ne.s32.totalorder %s236, %s238
      %p245 = scmp.eq.s32.totalorder %s24, 1
      %p246 = por %p244, %p245
      %p247 = scmp.ne.s32.totalorder %s238, %s239
      %p248 = scmp.eq.s32.totalorder %s24, 0
      %p249 = por %p247, %p248
      %p250 = scmp.ne.s32.totalorder %s238, %s239
      %p251 = scmp.eq.s32.totalorder %s25, 1
      %p252 = por %p250, %p251
      %p254 = scmp.ne.s32.totalorder %s239, %s253
      %p255 = scmp.eq.s32.totalorder %s25, 0
      %p256 = por %p254, %p255
      %s257 = ssub.s32 %s19, %s26
      %p258 = scmp.eq.s32.totalorder %s257, 0
      %s260 = sadd.s32 %s259, 1
      %s261 = scalar_select %p258, %s259, %s260
      %p264 = pneg %p258
      %p265 = scmp.eq.s32.totalorder %s19, 1
      %p266 = por %p264, %p265
      %p267 = scmp.ne.s32.totalorder %s259, %s262
      %p268 = scmp.eq.s32.totalorder %s19, 0
      %p269 = por %p267, %p268
      %p270 = scmp.ne.s32.totalorder %s259, %s262
      %p271 = scmp.eq.s32.totalorder %s24, 1
      %p272 = por %p270, %p271
      %p273 = scmp.ne.s32.totalorder %s262, %s263
      %p274 = scmp.eq.s32.totalorder %s24, 0
      %p275 = por %p273, %p274
      %p276 = scmp.ne.s32.totalorder %s262, %s263
      %p277 = scmp.eq.s32.totalorder %s25, 1
      %p278 = por %p276, %p277
      %p280 = scmp.ne.s32.totalorder %s263, %s279
      %p281 = scmp.eq.s32.totalorder %s25, 0
      %p282 = por %p280, %p281
      %p283 = scmp.le.s32.totalorder 1, %s19
      %p284 = scmp.lt.s32.totalorder %s19, 3
      %p285 = pnand %p283, %p284
      %p286 = pneg %p285
      // Predicated region
      $region9: #{tpu_custom_call.1} parent=5 // pred_check
        _
      $region10: #{tpu_custom_call.1} parent=5 // pred_check_branch
        %288 = sbr.rel (%p285) target = $region12
      $region11: #{tpu_custom_call.1} parent=5 // pred_region
        %s289 = ssub.s32 %s19, 1
        // Predicated region
        $region13: #{tpu_custom_call.1} parent=11 // pred_check
          %p290 = pneg %p144
        $region14: #{tpu_custom_call.1} parent=11 // pred_check_branch
          %292 = sbr.rel (%p290) target = $region16
        $region15: #{tpu_custom_call.1} parent=11 // pred_region
          _
        $region16: #{tpu_custom_call.1} parent=11 // pred_fallthru
          _
        // Predicated region
        $region17: #{tpu_custom_call.1} parent=11 // pred_check
          %p293 = pneg %p165
        $region18: #{tpu_custom_call.1} parent=11 // pred_check_branch
          %295 = sbr.rel (%p293) target = $region20
        $region19: #{tpu_custom_call.1} parent=11 // pred_region
          _
        $region20: #{tpu_custom_call.1} parent=11 // pred_fallthru
          _
        // Predicated region
        $region21: #{tpu_custom_call.1} parent=11 // pred_check
          %p296 = pneg %p186
        $region22: #{tpu_custom_call.1} parent=11 // pred_check_branch
          %298 = sbr.rel (%p296) target = $region24
        $region23: #{tpu_custom_call.1} parent=11 // pred_region
          _
        $region24: #{tpu_custom_call.1} parent=11 // pred_fallthru
          _
        // Predicated region
        $region25: #{tpu_custom_call.1} parent=11 // pred_check
          %p299 = pneg %p207
        $region26: #{tpu_custom_call.1} parent=11 // pred_check_branch
          %301 = sbr.rel (%p299) target = $region28
        $region27: #{tpu_custom_call.1} parent=11 // pred_region
          _
        $region28: #{tpu_custom_call.1} parent=11 // pred_fallthru
          _
        // Predicated region
        $region29: #{tpu_custom_call.1} parent=11 // pred_check
          %p302 = pneg %p228
        $region30: #{tpu_custom_call.1} parent=11 // pred_check_branch
          %304 = sbr.rel (%p302) target = $region32
        $region31: #{tpu_custom_call.1} parent=11 // pred_region
          _
        $region32: #{tpu_custom_call.1} parent=11 // pred_fallthru
          _
        // Predicated region
        $region33: #{tpu_custom_call.1} parent=11 // pred_check
          %p305 = pneg %p249
        $region34: #{tpu_custom_call.1} parent=11 // pred_check_branch
          %307 = sbr.rel (%p305) target = $region36
        $region35: #{tpu_custom_call.1} parent=11 // pred_region
          _
        $region36: #{tpu_custom_call.1} parent=11 // pred_fallthru
          _
      $region12: #{tpu_custom_call.1} parent=5 // pred_fallthru
        _
      %p308 = scmp.lt.s32.totalorder %s19, 2
      // Predicated region
      $region37: #{tpu_custom_call.1} parent=5 // pred_check
        %p309 = pneg %p308
      $region38: #{tpu_custom_call.1} parent=5 // pred_check_branch
        %311 = sbr.rel (%p309) target = $region40
      $region39: #{tpu_custom_call.1} parent=5 // pred_region
        // Predicated region
        $region41: #{tpu_custom_call.1} parent=39 // pred_check
          %p312 = pneg %p39
        $region42: #{tpu_custom_call.1} parent=39 // pred_check_branch
          %314 = sbr.rel (%p312) target = $region44
        $region43: #{tpu_custom_call.1} parent=39 // pred_region
          %s315 = smul.u32 3, %s19
          %p316 = scmp.lt.s32.totalorder %s315, 5
          %s317 = scalar_select %p316, %s315, 5
          %s318 = smul.addr %s317, 8
          %s319 = scalar_lea.vmem %s0, %s318
          %s320 = smul.u32 3, %s19
        $region44: #{tpu_custom_call.1} parent=39 // pred_fallthru
          _
        // Predicated region
        $region45: #{tpu_custom_call.1} parent=39 // pred_check
          %p321 = pneg %p65
        $region46: #{tpu_custom_call.1} parent=39 // pred_check_branch
          %323 = sbr.rel (%p321) target = $region48
        $region47: #{tpu_custom_call.1} parent=39 // pred_region
          %s324 = smul.u32 3, %s19
          %p325 = scmp.lt.s32.totalorder %s324, 5
          %s326 = scalar_select %p325, %s324, 5
          %s327 = smul.addr %s326, 2
          %s328 = smul.addr %s327, 8
          %s329 = scalar_lea.vmem %s1, %s328
          %s330 = smul.u32 3, %s19
        $region48: #{tpu_custom_call.1} parent=39 // pred_fallthru
          _
        // Predicated region
        $region49: #{tpu_custom_call.1} parent=39 // pred_check
          %p331 = pneg %p91
        $region50: #{tpu_custom_call.1} parent=39 // pred_check_branch
          %333 = sbr.rel (%p331) target = $region52
        $region51: #{tpu_custom_call.1} parent=39 // pred_region
          %s334 = smul.u32 3, %s19
          %p335 = scmp.lt.s32.totalorder %s334, 5
          %s336 = scalar_select %p335, %s334, 5
          %s337 = smul.addr %s336, 2
          %s338 = smul.addr %s337, 8
          %s339 = scalar_lea.vmem %s2, %s338
          %s340 = smul.u32 3, %s19
        $region52: #{tpu_custom_call.1} parent=39 // pred_fallthru
          _
        // Predicated region
        $region53: #{tpu_custom_call.1} parent=39 // pred_check
          %p341 = pneg %p117
        $region54: #{tpu_custom_call.1} parent=39 // pred_check_branch
          %343 = sbr.rel (%p341) target = $region56
        $region55: #{tpu_custom_call.1} parent=39 // pred_region
          %s344 = smul.u32 3, %s19
          %p345 = scmp.lt.s32.totalorder %s344, 5
          %s346 = scalar_select %p345, %s344, 5
          %s347 = smul.addr %s346, 2
          %s348 = smul.addr %s347, 8
          %s349 = scalar_lea.vmem %s3, %s348
          %s350 = smul.u32 3, %s19
        $region56: #{tpu_custom_call.1} parent=39 // pred_fallthru
          _
      $region40: #{tpu_custom_call.1} parent=5 // pred_fallthru
        _
      %p351 = scmp.le.s32.totalorder 1, %s19
      %p352 = scmp.lt.s32.totalorder %s19, 3
      %p353 = pnand %p351, %p352
      %p354 = pneg %p353
      // Predicated region
      $region57: #{tpu_custom_call.1} parent=5 // pred_check
        _
      $region58: #{tpu_custom_call.1} parent=5 // pred_check_branch
        %356 = sbr.rel (%p353) target = $region60
      $region59: #{tpu_custom_call.1} parent=5 // pred_region
        %s357 = ssub.s32 %s19, 1
        %s358 = smul.u32 3, %s24
        %p359 = scmp.lt.s32.totalorder %s358, 5
        %s360 = scalar_select %p359, %s358, 5
        %s361 = smul.addr %s360, 8
        %s362 = scalar_lea.vmem %s0, %s361
        %p363 = pneg %p45
        %p364 = pneg %p42
        %s365 = smul.u32 3, %s24
        %p366 = scmp.lt.s32.totalorder %s365, 5
        %s367 = scalar_select %p366, %s365, 5
        %s368 = smul.addr %s367, 2
        %s369 = smul.addr %s368, 8
        %s370 = scalar_lea.vmem %s1, %s369
        %p371 = pneg %p71
        %p372 = pneg %p68
        %s373 = smul.u32 3, %s24
        %p374 = scmp.lt.s32.totalorder %s373, 5
        %s375 = scalar_select %p374, %s373, 5
        %s376 = smul.addr %s375, 2
        %s377 = smul.addr %s376, 8
        %s378 = scalar_lea.vmem %s2, %s377
        %p379 = pneg %p97
        %p380 = pneg %p94
        %s381 = smul.u32 3, %s24
        %p382 = scmp.lt.s32.totalorder %s381, 5
        %s383 = scalar_select %p382, %s381, 5
        %s384 = smul.addr %s383, 2
        %s385 = smul.addr %s384, 8
        %s386 = scalar_lea.vmem %s3, %s385
        %p387 = pneg %p123
        %p388 = pneg %p120
        %p389 = pneg %p144
        %p390 = pneg %p141
        %p391 = pneg %p165
        %p392 = pneg %p162
        %p393 = pneg %p186
        %p394 = pneg %p183
        %p395 = pneg %p207
        %p396 = pneg %p204
        %p397 = pneg %p228
        %p398 = pneg %p225
        %p399 = pneg %p249
        %p400 = pneg %p246
        %p401 = pneg %p275
        %p402 = pneg %p272
        %s403 = sand.u32 %s262, 1
        %s404 = scalar_lea.sflag [#allocation3], %s403
        %s405 = sand.u32 %s262, 1
        %s406 = smul.addr %s405, 24
        %s407 = scalar_lea.vmem [#allocation2], %s406
        %s408 = smul.u32 3, %s24
        %p409 = scmp.lt.s32.totalorder %s408, 5
        %s410 = scalar_select %p409, %s408, 5
        %s411 = smul.addr %s410, 8
        %s412 = scalar_lea.vmem %s0, %s411
        %s413 = smul.u32 3, %s24
        %s414 = smul.u32 3, %s24
        %p415 = scmp.lt.s32.totalorder %s414, 5
        %s416 = scalar_select %p415, %s414, 5
        %s417 = smul.addr %s416, 2
        %s418 = smul.addr %s417, 8
        %s419 = scalar_lea.vmem %s1, %s418
        %s420 = smul.u32 3, %s24
        %s421 = smul.u32 3, %s24
        %p422 = scmp.lt.s32.totalorder %s421, 5
        %s423 = scalar_select %p422, %s421, 5
        %s424 = smul.addr %s423, 2
        %s425 = smul.addr %s424, 8
        %s426 = scalar_lea.vmem %s2, %s425
        %s427 = smul.u32 3, %s24
        %s428 = smul.u32 3, %s24
        %p429 = scmp.lt.s32.totalorder %s428, 5
        %s430 = scalar_select %p429, %s428, 5
        %s431 = smul.addr %s430, 2
        %s432 = smul.addr %s431, 8
        %s433 = scalar_lea.vmem %s3, %s432
        %s434 = smul.u32 3, %s24
        %s435 = smul.u32 3, %s24
        %v436 = vld [vmem:[%s412] sm:$0xff]
        %v437 = vld [vmem:[%s412 + $0x8] sm:$0xff]
        %v438 = vld [vmem:[%s412 + $0x10] sm:$0xff]
        %v439 = vld [vmem:[%s419] sm:$0xff]
        %v440 = vld [vmem:[%s419 + $0x8] sm:$0xff]
        %v441 = vld [vmem:[%s419 + $0x10] sm:$0xff]
        %v442 = vld [vmem:[%s419 + $0x18] sm:$0xff]
        %v443 = vld [vmem:[%s419 + $0x20] sm:$0xff]
        %v444 = vld [vmem:[%s419 + $0x28] sm:$0xff]
        %v445 = vld [vmem:[%s4] sm:$0xff]
        %v446 = vld [vmem:[%s4 + $0x8] sm:$0xff]
        %v447 = vld [vmem:[%s5] sm:$0x1]
        %v449 = vlaneseq
        %v450 = vshrl.u32 %v449, 7
        %v451 = vsub.s32 0, %v450
        %v452 = vrot.slane %v447, %v451
        %vm454 = vcmask 130048
        %v456 = vsel %vm454, %v436, 0
        %v459 = vsel %vm454, %v437, 0
        %v462 = vsel %vm454, %v438, 0
        %464 = vmatprep.subr.mxu0 0.0
        %465 = vmatpush1.msra.mxu0 %v445
        %466 = vmatprep.subr.mxu0 0.0
        %467 = vmatpush1.msra.mxu0 %v446
        %468 = vmatprep.subr.mxu0 0.0
        %469 = vmatpush1.msra.mxu0 0.0
        %470 = vmatprep.subr.mxu0 0.0
        %471 = vmatpush1.msra.mxu0 0.0
        %472 = vmatprep.subr.mxu0 0.0
        %473 = vmatpush1.msra.mxu0 0.0
        %474 = vmatprep.subr.mxu0 0.0
        %475 = vmatpush1.msra.mxu0 0.0
        %476 = vmatprep.subr.mxu0 0.0
        %477 = vmatpush1.msra.mxu0 0.0
        %478 = vmatprep.subr.mxu0 0.0
        %479 = vmatpush1.msra.mxu0 0.0
        %480 = vmatprep.subr.mxu0 0.0
        %481 = vmatpush1.msra.mxu0 0.0
        %482 = vmatprep.subr.mxu0 0.0
        %483 = vmatpush1.msra.mxu0 0.0
        %484 = vmatprep.subr.mxu0 0.0
        %485 = vmatpush1.msra.mxu0 0.0
        %486 = vmatprep.subr.mxu0 0.0
        %487 = vmatpush1.msra.mxu0 0.0
        %488 = vmatprep.subr.mxu0 0.0
        %489 = vmatpush1.msra.mxu0 0.0
        %490 = vmatprep.subr.mxu0 0.0
        %491 = vmatpush1.msra.mxu0 0.0
        %492 = vmatprep.subr.mxu0 0.0
        %493 = vmatpush1.msra.mxu0 0.0
        %494 = vmatprep.subr.mxu0 0.0
        %495 = vmatpush1.msra.mxu0 0.0
        %496 = vmatprep.subr.mxu0 0.0
        %497 = vmatpush1.msra.mxu0 0.0
        %498 = vmatprep.subr.mxu0 0.0
        %499 = vmatpush1.msra.mxu0 0.0
        %500 = vmatprep.subr.mxu0 0.0
        %501 = vmatpush1.msra.mxu0 0.0
        %502 = vmatprep.subr.mxu0 0.0
        %503 = vmatpush1.msra.mxu0 0.0
        %504 = vmatprep.subr.mxu0 0.0
        %505 = vmatpush1.msra.mxu0 0.0
        %506 = vmatprep.subr.mxu0 0.0
        %507 = vmatpush1.msra.mxu0 0.0
        %508 = vmatprep.subr.mxu0 0.0
        %509 = vmatpush1.msra.mxu0 0.0
        %510 = vmatprep.subr.mxu0 0.0
        %511 = vmatpush1.msra.mxu0 0.0
        %512 = vmatprep.subr.mxu0 0.0
        %513 = vmatpush1.msra.mxu0 0.0
        %514 = vmatprep.subr.mxu0 0.0
        %515 = vmatpush1.msra.mxu0 0.0
        %516 = vmatprep.subr.mxu0 0.0
        %517 = vmatpush1.msra.mxu0 0.0
        %518 = vmatprep.subr.mxu0 0.0
        %519 = vmatpush1.msra.mxu0 0.0
        %520 = vmatprep.subr.mxu0 0.0
        %521 = vmatpush1.msra.mxu0 0.0
        %522 = vmatprep.subr.mxu0 0.0
        %523 = vmatpush1.msra.mxu0 0.0
        %524 = vmatprep.subr.mxu0 0.0
        %525 = vmatpush1.msra.mxu0 0.0
        %526 = vmatprep.subr.mxu0 0.0
        %527 = vmatpush1.msra.mxu0 0.0
        %528 = vmatprep.mubr.f32.mxu0 0.0
        %529 = vmatmul.mubr.f32.gmra.mrb[0].mxu0 %v456
        %v530 = vpop.f32.mrb[0].mxu0
        %v531 = vadd.f32 %v452, %v530
        %v532 = vpop.f32.mrb[0].mxu0
        %533 = vmatprep.mubr.f32.mxu0 0.0
        %534 = vmatmul.mubr.f32.gmra.mrb[0].mxu0 %v459
        %v535 = vpop.f32.mrb[0].mxu0
        %v536 = vadd.f32 %v452, %v535
        %v537 = vpop.f32.mrb[0].mxu0
        %538 = vmatprep.mubr.f32.mxu0 0.0
        %539 = vmatmul.mubr.f32.gmra.mrb[0].mxu0 %v462
        %v540 = vpop.f32.mrb[0].mxu0
        %v541 = vadd.f32 %v452, %v540
        %v542 = vpop.f32.mrb[0].mxu0
        %543 = vdwg.mxu0
        %v544 = vld [vmem:[%s6] sm:$0xff]
        %v545 = vld [vmem:[%s6 + $0x8] sm:$0xff]
        %v546 = vld [vmem:[%s7] sm:$0x1]
        %v548 = vlaneseq
        %v549 = vshrl.u32 %v548, 7
        %v550 = vsub.s32 0, %v549
        %v551 = vrot.slane %v546, %v550
        %v554 = vsel %vm454, %v439, 0
        %v557 = vsel %vm454, %v440, 0
        %v560 = vsel %vm454, %v441, 0
        %v563 = vsel %vm454, %v442, 0
        %v566 = vsel %vm454, %v443, 0
        %v569 = vsel %vm454, %v444, 0
        %571 = vmatprep.subr.mxu0 0.0
        %572 = vmatpush1.msra.mxu0 %v544
        %573 = vmatprep.subr.mxu0 0.0
        %574 = vmatpush1.msra.mxu0 %v545
        %575 = vmatprep.subr.mxu0 0.0
        %576 = vmatpush1.msra.mxu0 0.0
        %577 = vmatprep.subr.mxu0 0.0
        %578 = vmatpush1.msra.mxu0 0.0
        %579 = vmatprep.subr.mxu0 0.0
        %580 = vmatpush1.msra.mxu0 0.0
        %581 = vmatprep.subr.mxu0 0.0
        %582 = vmatpush1.msra.mxu0 0.0
        %583 = vmatprep.subr.mxu0 0.0
        %584 = vmatpush1.msra.mxu0 0.0
        %585 = vmatprep.subr.mxu0 0.0
        %586 = vmatpush1.msra.mxu0 0.0
        %587 = vmatprep.subr.mxu0 0.0
        %588 = vmatpush1.msra.mxu0 0.0
        %589 = vmatprep.subr.mxu0 0.0
        %590 = vmatpush1.msra.mxu0 0.0
        %591 = vmatprep.subr.mxu0 0.0
        %592 = vmatpush1.msra.mxu0 0.0
        %593 = vmatprep.subr.mxu0 0.0
        %594 = vmatpush1.msra.mxu0 0.0
        %595 = vmatprep.subr.mxu0 0.0
        %596 = vmatpush1.msra.mxu0 0.0
        %597 = vmatprep.subr.mxu0 0.0
        %598 = vmatpush1.msra.mxu0 0.0
        %599 = vmatprep.subr.mxu0 0.0
        %600 = vmatpush1.msra.mxu0 0.0
        %601 = vmatprep.subr.mxu0 0.0
        %602 = vmatpush1.msra.mxu0 0.0
        %603 = vmatprep.subr.mxu0 0.0
        %604 = vmatpush1.msra.mxu0 0.0
        %605 = vmatprep.subr.mxu0 0.0
        %606 = vmatpush1.msra.mxu0 0.0
        %607 = vmatprep.subr.mxu0 0.0
        %608 = vmatpush1.msra.mxu0 0.0
        %609 = vmatprep.subr.mxu0 0.0
        %610 = vmatpush1.msra.mxu0 0.0
        %611 = vmatprep.subr.mxu0 0.0
        %612 = vmatpush1.msra.mxu0 0.0
        %613 = vmatprep.subr.mxu0 0.0
        %614 = vmatpush1.msra.mxu0 0.0
        %615 = vmatprep.subr.mxu0 0.0
        %616 = vmatpush1.msra.mxu0 0.0
        %617 = vmatprep.subr.mxu0 0.0
        %618 = vmatpush1.msra.mxu0 0.0
        %619 = vmatprep.subr.mxu0 0.0
        %620 = vmatpush1.msra.mxu0 0.0
        %621 = vmatprep.subr.mxu0 0.0
        %622 = vmatpush1.msra.mxu0 0.0
        %623 = vmatprep.subr.mxu0 0.0
        %624 = vmatpush1.msra.mxu0 0.0
        %625 = vmatprep.subr.mxu0 0.0
        %626 = vmatpush1.msra.mxu0 0.0
        %627 = vmatprep.subr.mxu0 0.0
        %628 = vmatpush1.msra.mxu0 0.0
        %629 = vmatprep.subr.mxu0 0.0
        %630 = vmatpush1.msra.mxu0 0.0
        %631 = vmatprep.subr.mxu0 0.0
        %632 = vmatpush1.msra.mxu0 0.0
        %633 = vmatprep.subr.mxu0 0.0
        %634 = vmatpush1.msra.mxu0 0.0
        %635 = vmatprep.mubr.f32.mxu0 0.0
        %636 = vmatmul.mubr.f32.gmra.mrb[0].mxu0 %v554
        %v637 = vpop.f32.mrb[0].mxu0
        %v638 = vadd.f32 %v551, %v637
        %v639 = vpop.f32.mrb[0].mxu0
        %640 = vmatprep.mubr.f32.mxu0 0.0
        %641 = vmatmul.mubr.f32.gmra.mrb[0].mxu0 %v557
        %v642 = vpop.f32.mrb[0].mxu0
        %v643 = vadd.f32 %v551, %v642
        %v644 = vpop.f32.mrb[0].mxu0
        %645 = vmatprep.mubr.f32.mxu0 0.0
        %646 = vmatmul.mubr.f32.gmra.mrb[0].mxu0 %v560
        %v647 = vpop.f32.mrb[0].mxu0
        %v648 = vadd.f32 %v551, %v647
        %v649 = vpop.f32.mrb[0].mxu0
        %650 = vmatprep.mubr.f32.mxu0 0.0
        %651 = vmatmul.mubr.f32.gmra.mrb[0].mxu0 %v563
        %v652 = vpop.f32.mrb[0].mxu0
        %v653 = vadd.f32 %v551, %v652
        %v654 = vpop.f32.mrb[0].mxu0
        %655 = vmatprep.mubr.f32.mxu0 0.0
        %656 = vmatmul.mubr.f32.gmra.mrb[0].mxu0 %v566
        %v657 = vpop.f32.mrb[0].mxu0
        %v658 = vadd.f32 %v551, %v657
        %v659 = vpop.f32.mrb[0].mxu0
        %660 = vmatprep.mubr.f32.mxu0 0.0
        %661 = vmatmul.mubr.f32.gmra.mrb[0].mxu0 %v569
        %v662 = vpop.f32.mrb[0].mxu0
        %v663 = vadd.f32 %v551, %v662
        %v664 = vpop.f32.mrb[0].mxu0
        %665 = vdwg.mxu0
        %v666 = vld [vmem:[%s426] sm:$0xff]
        %v667 = vld [vmem:[%s426 + $0x8] sm:$0xff]
        %v668 = vld [vmem:[%s426 + $0x10] sm:$0xff]
        %v669 = vld [vmem:[%s426 + $0x18] sm:$0xff]
        %v670 = vld [vmem:[%s426 + $0x20] sm:$0xff]
        %v671 = vld [vmem:[%s426 + $0x28] sm:$0xff]
        %v672 = vld [vmem:[%s433] sm:$0xff]
        %v673 = vld [vmem:[%s433 + $0x8] sm:$0xff]
        %v674 = vld [vmem:[%s433 + $0x10] sm:$0xff]
        %v675 = vld [vmem:[%s433 + $0x18] sm:$0xff]
        %v676 = vld [vmem:[%s433 + $0x20] sm:$0xff]
        %v677 = vld [vmem:[%s433 + $0x28] sm:$0xff]
        %v678 = vmul.f32 %v672, %v666
        %v679 = vmul.f32 %v673, %v667
        %v680 = vmul.f32 %v674, %v668
        %v681 = vmul.f32 %v675, %v669
        %v682 = vmul.f32 %v676, %v670
        %v683 = vmul.f32 %v677, %v671
        %690 = vrot.lane.b32.xlu0 %v672, 4
        %v691 = vpop.permute.xlu0 %690
        %692 = vrot.lane.b32.xlu0 %v673, 4
        %v693 = vpop.permute.xlu0 %692
        %694 = vrot.lane.b32.xlu0 %v674, 4
        %v695 = vpop.permute.xlu0 %694
        %696 = vrot.lane.b32.xlu0 %v675, 4
        %v697 = vpop.permute.xlu0 %696
        %698 = vrot.lane.b32.xlu0 %v676, 4
        %v699 = vpop.permute.xlu0 %698
        %700 = vrot.lane.b32.xlu0 %v677, 4
        %v701 = vpop.permute.xlu0 %700
        %vm708 = vcmask 31744
        %v709 = vsel %vm708, %v678, %v691
        %v710 = vsel %vm708, %v679, %v693
        %v711 = vsel %vm708, %v680, %v695
        %v712 = vsel %vm708, %v681, %v697
        %v713 = vsel %vm708, %v682, %v699
        %v714 = vsel %vm708, %v683, %v701
        %v715 = vsel %vm708, %v672, -inf
        %716 = vmax.xlane.f32.xlu0 %v715
        %v717 = vpop.xlane.xlu0 %716
        %v718 = vsel %vm708, %v673, -inf
        %719 = vmax.xlane.f32.xlu0 %v718
        %v720 = vpop.xlane.xlu0 %719
        %v721 = vsel %vm708, %v674, -inf
        %722 = vmax.xlane.f32.xlu0 %v721
        %v723 = vpop.xlane.xlu0 %722
        %v724 = vsel %vm708, %v675, -inf
        %725 = vmax.xlane.f32.xlu0 %v724
        %v726 = vpop.xlane.xlu0 %725
        %v727 = vsel %vm708, %v676, -inf
        %728 = vmax.xlane.f32.xlu0 %v727
        %v729 = vpop.xlane.xlu0 %728
        %v730 = vsel %vm708, %v677, -inf
        %731 = vmax.xlane.f32.xlu0 %v730
        %v732 = vpop.xlane.xlu0 %731
        %vm733 = vcmp.gt.f32.partialorder %v717, 0.0
        %vm734 = vcmp.gt.f32.partialorder %v720, 0.0
        %vm735 = vcmp.gt.f32.partialorder %v723, 0.0
        %vm736 = vcmp.gt.f32.partialorder %v726, 0.0
        %vm737 = vcmp.gt.f32.partialorder %v729, 0.0
        %vm738 = vcmp.gt.f32.partialorder %v732, 0.0
        %v739 = vsel %vm733, 0.0, -1e+09
        %v740 = vsel %vm734, 0.0, -1e+09
        %v741 = vsel %vm735, 0.0, -1e+09
        %v742 = vsel %vm736, 0.0, -1e+09
        %v743 = vsel %vm737, 0.0, -1e+09
        %v744 = vsel %vm738, 0.0, -1e+09
        %v745 = vsel %vm708, %v666, 0.0
        %v746 = vsel %vm708, %v667, 0.0
        %v747 = vadd.f32 %v745, %v746
        %v748 = vrot.slane %v747, 4
        %v749 = vadd.f32 %v747, %v748
        %v750 = vrot.slane %v749, 2
        %v751 = vadd.f32 %v749, %v750
        %v752 = vrot.slane %v751, 1
        %v753 = vadd.f32 %v751, %v752
        %v754 = vsel %vm708, %v668, 0.0
        %v755 = vsel %vm708, %v669, 0.0
        %v756 = vadd.f32 %v754, %v755
        %v757 = vrot.slane %v756, 4
        %v758 = vadd.f32 %v756, %v757
        %v759 = vrot.slane %v758, 2
        %v760 = vadd.f32 %v758, %v759
        %v761 = vrot.slane %v760, 1
        %v762 = vadd.f32 %v760, %v761
        %v763 = vsel %vm708, %v670, 0.0
        %v764 = vsel %vm708, %v671, 0.0
        %v765 = vadd.f32 %v763, %v764
        %v766 = vrot.slane %v765, 4
        %v767 = vadd.f32 %v765, %v766
        %v768 = vrot.slane %v767, 2
        %v769 = vadd.f32 %v767, %v768
        %v770 = vrot.slane %v769, 1
        %v771 = vadd.f32 %v769, %v770
        %v772 = vrcp.pop 16.0
        %v773 = vmul.f32 %v753, %v772
        %v774 = vmul.f32 %v762, %v772
        %v775 = vmul.f32 %v771, %v772
        %v778 = vlaneseq
        %v779 = vand.u32 %v778, 127
        %v780 = vlaneseq
        %v781 = vshrl.u32 %v780, 7
        %v782 = vsub.s32 %v779, %v781
        %v783 = vrot.slane %v739, %v782
        %v784 = vadd.s32 %v779, 4294967288
        %v785 = vlaneseq
        %v786 = vshrl.u32 %v785, 7
        %v787 = vsub.s32 %v784, %v786
        %v788 = vrot.slane %v740, %v787
        %vm789 = vcmask 130112
        %v790 = vsel %vm789, %v788, %v783
        %vm791 = vcmask 1042434
        %v792 = vsel %vm791, %v790, %v790
        %vm793 = vcmask 1043459
        %v794 = vsel %vm793, %v790, %v792
        %vm795 = vcmask 1044484
        %v796 = vsel %vm795, %v790, %v794
        %vm797 = vcmask 1045509
        %v798 = vsel %vm797, %v790, %v796
        %vm799 = vcmask 1046534
        %v800 = vsel %vm799, %v790, %v798
        %vm801 = vcmask 1047559
        %v802 = vsel %vm801, %v790, %v800
        %vm804 = vcmask 64512
        %v806 = vsel %vm804, %v531, 0
        %v809 = vsel %vm804, %v638, 0
        %v812 = vsel %vm804, %v643, 0
        %814 = vmatprep.subr.mxu0 0.0
        %815 = vmatpush1.xpose.msra.mxu0 %v809
        %816 = vmatprep.subr.mxu0 0.0
        %817 = vmatpush1.xpose.msra.mxu0 %v812
        %818 = vmatprep.subr.mxu0 0.0
        %819 = vmatpush1.xpose.msra.mxu0 0.0
        %820 = vmatprep.subr.mxu0 0.0
        %821 = vmatpush1.xpose.msra.mxu0 0.0
        %822 = vmatprep.subr.mxu0 0.0
        %823 = vmatpush1.xpose.msra.mxu0 0.0
        %824 = vmatprep.subr.mxu0 0.0
        %825 = vmatpush1.xpose.msra.mxu0 0.0
        %826 = vmatprep.subr.mxu0 0.0
        %827 = vmatpush1.xpose.msra.mxu0 0.0
        %828 = vmatprep.subr.mxu0 0.0
        %829 = vmatpush1.xpose.msra.mxu0 0.0
        %830 = vmatprep.subr.mxu0 0.0
        %831 = vmatpush1.xpose.msra.mxu0 0.0
        %832 = vmatprep.subr.mxu0 0.0
        %833 = vmatpush1.xpose.msra.mxu0 0.0
        %834 = vmatprep.subr.mxu0 0.0
        %835 = vmatpush1.xpose.msra.mxu0 0.0
        %836 = vmatprep.subr.mxu0 0.0
        %837 = vmatpush1.xpose.msra.mxu0 0.0
        %838 = vmatprep.subr.mxu0 0.0
        %839 = vmatpush1.xpose.msra.mxu0 0.0
        %840 = vmatprep.subr.mxu0 0.0
        %841 = vmatpush1.xpose.msra.mxu0 0.0
        %842 = vmatprep.subr.mxu0 0.0
        %843 = vmatpush1.xpose.msra.mxu0 0.0
        %844 = vmatprep.subr.mxu0 0.0
        %845 = vmatpush1.xpose.msra.mxu0 0.0
        %846 = vmatprep.subr.mxu0 0.0
        %847 = vmatpush1.xpose.msra.mxu0 0.0
        %848 = vmatprep.subr.mxu0 0.0
        %849 = vmatpush1.xpose.msra.mxu0 0.0
        %850 = vmatprep.subr.mxu0 0.0
        %851 = vmatpush1.xpose.msra.mxu0 0.0
        %852 = vmatprep.subr.mxu0 0.0
        %853 = vmatpush1.xpose.msra.mxu0 0.0
        %854 = vmatprep.subr.mxu0 0.0
        %855 = vmatpush1.xpose.msra.mxu0 0.0
        %856 = vmatprep.subr.mxu0 0.0
        %857 = vmatpush1.xpose.msra.mxu0 0.0
        %858 = vmatprep.subr.mxu0 0.0
        %859 = vmatpush1.xpose.msra.mxu0 0.0
        %860 = vmatprep.subr.mxu0 0.0
        %861 = vmatpush1.xpose.msra.mxu0 0.0
        %862 = vmatprep.subr.mxu0 0.0
        %863 = vmatpush1.xpose.msra.mxu0 0.0
        %864 = vmatprep.subr.mxu0 0.0
        %865 = vmatpush1.xpose.msra.mxu0 0.0
        %866 = vmatprep.subr.mxu0 0.0
        %867 = vmatpush1.xpose.msra.mxu0 0.0
        %868 = vmatprep.subr.mxu0 0.0
        %869 = vmatpush1.xpose.msra.mxu0 0.0
        %870 = vmatprep.subr.mxu0 0.0
        %871 = vmatpush1.xpose.msra.mxu0 0.0
        %872 = vmatprep.subr.mxu0 0.0
        %873 = vmatpush1.xpose.msra.mxu0 0.0
        %874 = vmatprep.subr.mxu0 0.0
        %875 = vmatpush1.xpose.msra.mxu0 0.0
        %876 = vmatprep.subr.mxu0 0.0
        %877 = vmatpush1.xpose.msra.mxu0 0.0
        %878 = vmatprep.mubr.f32.mxu0 0.0
        %879 = vmatmul.mubr.f32.gmra.mrb[0].mxu0 %v806
        %v880 = vpop.f32.mrb[0].mxu0
        %v881 = vadd.f32 %v802, %v880
        %v882 = vpop.f32.mrb[0].mxu0
        %883 = vdwg.mxu0
        %v886 = vlaneseq
        %v887 = vshrl.u32 %v886, 7
        %v888 = vsub.s32 %v779, %v887
        %v889 = vrot.slane %v741, %v888
        %v890 = vlaneseq
        %v891 = vshrl.u32 %v890, 7
        %v892 = vsub.s32 %v784, %v891
        %v893 = vrot.slane %v742, %v892
        %v894 = vsel %vm789, %v893, %v889
        %v895 = vsel %vm791, %v894, %v894
        %v896 = vsel %vm793, %v894, %v895
        %v897 = vsel %vm795, %v894, %v896
        %v898 = vsel %vm797, %v894, %v897
        %v899 = vsel %vm799, %v894, %v898
        %v900 = vsel %vm801, %v894, %v899
        %v903 = vsel %vm804, %v536, 0
        %v906 = vsel %vm804, %v648, 0
        %v909 = vsel %vm804, %v653, 0
        %911 = vmatprep.subr.mxu0 0.0
        %912 = vmatpush1.xpose.msra.mxu0 %v906
        %913 = vmatprep.subr.mxu0 0.0
        %914 = vmatpush1.xpose.msra.mxu0 %v909
        %915 = vmatprep.subr.mxu0 0.0
        %916 = vmatpush1.xpose.msra.mxu0 0.0
        %917 = vmatprep.subr.mxu0 0.0
        %918 = vmatpush1.xpose.msra.mxu0 0.0
        %919 = vmatprep.subr.mxu0 0.0
        %920 = vmatpush1.xpose.msra.mxu0 0.0
        %921 = vmatprep.subr.mxu0 0.0
        %922 = vmatpush1.xpose.msra.mxu0 0.0
        %923 = vmatprep.subr.mxu0 0.0
        %924 = vmatpush1.xpose.msra.mxu0 0.0
        %925 = vmatprep.subr.mxu0 0.0
        %926 = vmatpush1.xpose.msra.mxu0 0.0
        %927 = vmatprep.subr.mxu0 0.0
        %928 = vmatpush1.xpose.msra.mxu0 0.0
        %929 = vmatprep.subr.mxu0 0.0
        %930 = vmatpush1.xpose.msra.mxu0 0.0
        %931 = vmatprep.subr.mxu0 0.0
        %932 = vmatpush1.xpose.msra.mxu0 0.0
        %933 = vmatprep.subr.mxu0 0.0
        %934 = vmatpush1.xpose.msra.mxu0 0.0
        %935 = vmatprep.subr.mxu0 0.0
        %936 = vmatpush1.xpose.msra.mxu0 0.0
        %937 = vmatprep.subr.mxu0 0.0
        %938 = vmatpush1.xpose.msra.mxu0 0.0
        %939 = vmatprep.subr.mxu0 0.0
        %940 = vmatpush1.xpose.msra.mxu0 0.0
        %941 = vmatprep.subr.mxu0 0.0
        %942 = vmatpush1.xpose.msra.mxu0 0.0
        %943 = vmatprep.subr.mxu0 0.0
        %944 = vmatpush1.xpose.msra.mxu0 0.0
        %945 = vmatprep.subr.mxu0 0.0
        %946 = vmatpush1.xpose.msra.mxu0 0.0
        %947 = vmatprep.subr.mxu0 0.0
        %948 = vmatpush1.xpose.msra.mxu0 0.0
        %949 = vmatprep.subr.mxu0 0.0
        %950 = vmatpush1.xpose.msra.mxu0 0.0
        %951 = vmatprep.subr.mxu0 0.0
        %952 = vmatpush1.xpose.msra.mxu0 0.0
        %953 = vmatprep.subr.mxu0 0.0
        %954 = vmatpush1.xpose.msra.mxu0 0.0
        %955 = vmatprep.subr.mxu0 0.0
        %956 = vmatpush1.xpose.msra.mxu0 0.0
        %957 = vmatprep.subr.mxu0 0.0
        %958 = vmatpush1.xpose.msra.mxu0 0.0
        %959 = vmatprep.subr.mxu0 0.0
        %960 = vmatpush1.xpose.msra.mxu0 0.0
        %961 = vmatprep.subr.mxu0 0.0
        %962 = vmatpush1.xpose.msra.mxu0 0.0
        %963 = vmatprep.subr.mxu0 0.0
        %964 = vmatpush1.xpose.msra.mxu0 0.0
        %965 = vmatprep.subr.mxu0 0.0
        %966 = vmatpush1.xpose.msra.mxu0 0.0
        %967 = vmatprep.subr.mxu0 0.0
        %968 = vmatpush1.xpose.msra.mxu0 0.0
        %969 = vmatprep.subr.mxu0 0.0
        %970 = vmatpush1.xpose.msra.mxu0 0.0
        %971 = vmatprep.subr.mxu0 0.0
        %972 = vmatpush1.xpose.msra.mxu0 0.0
        %973 = vmatprep.subr.mxu0 0.0
        %974 = vmatpush1.xpose.msra.mxu0 0.0
        %975 = vmatprep.mubr.f32.mxu0 0.0
        %976 = vmatmul.mubr.f32.gmra.mrb[0].mxu0 %v903
        %v977 = vpop.f32.mrb[0].mxu0
        %v978 = vadd.f32 %v900, %v977
        %v979 = vpop.f32.mrb[0].mxu0
        %980 = vdwg.mxu0
        %v983 = vlaneseq
        %v984 = vshrl.u32 %v983, 7
        %v985 = vsub.s32 %v779, %v984
        %v986 = vrot.slane %v743, %v985
        %v987 = vlaneseq
        %v988 = vshrl.u32 %v987, 7
        %v989 = vsub.s32 %v784, %v988
        %v990 = vrot.slane %v744, %v989
        %v991 = vsel %vm789, %v990, %v986
        %v992 = vsel %vm791, %v991, %v991
        %v993 = vsel %vm793, %v991, %v992
        %v994 = vsel %vm795, %v991, %v993
        %v995 = vsel %vm797, %v991, %v994
        %v996 = vsel %vm799, %v991, %v995
        %v997 = vsel %vm801, %v991, %v996
        %v1000 = vsel %vm804, %v541, 0
        %v1003 = vsel %vm804, %v658, 0
        %v1006 = vsel %vm804, %v663, 0
        %1008 = vmatprep.subr.mxu0 0.0
        %1009 = vmatpush1.xpose.msra.mxu0 %v1003
        %1010 = vmatprep.subr.mxu0 0.0
        %1011 = vmatpush1.xpose.msra.mxu0 %v1006
        %1012 = vmatprep.subr.mxu0 0.0
        %1013 = vmatpush1.xpose.msra.mxu0 0.0
        %1014 = vmatprep.subr.mxu0 0.0
        %1015 = vmatpush1.xpose.msra.mxu0 0.0
        %1016 = vmatprep.subr.mxu0 0.0
        %1017 = vmatpush1.xpose.msra.mxu0 0.0
        %1018 = vmatprep.subr.mxu0 0.0
        %1019 = vmatpush1.xpose.msra.mxu0 0.0
        %1020 = vmatprep.subr.mxu0 0.0
        %1021 = vmatpush1.xpose.msra.mxu0 0.0
        %1022 = vmatprep.subr.mxu0 0.0
        %1023 = vmatpush1.xpose.msra.mxu0 0.0
        %1024 = vmatprep.subr.mxu0 0.0
        %1025 = vmatpush1.xpose.msra.mxu0 0.0
        %1026 = vmatprep.subr.mxu0 0.0
        %1027 = vmatpush1.xpose.msra.mxu0 0.0
        %1028 = vmatprep.subr.mxu0 0.0
        %1029 = vmatpush1.xpose.msra.mxu0 0.0
        %1030 = vmatprep.subr.mxu0 0.0
        %1031 = vmatpush1.xpose.msra.mxu0 0.0
        %1032 = vmatprep.subr.mxu0 0.0
        %1033 = vmatpush1.xpose.msra.mxu0 0.0
        %1034 = vmatprep.subr.mxu0 0.0
        %1035 = vmatpush1.xpose.msra.mxu0 0.0
        %1036 = vmatprep.subr.mxu0 0.0
        %1037 = vmatpush1.xpose.msra.mxu0 0.0
        %1038 = vmatprep.subr.mxu0 0.0
        %1039 = vmatpush1.xpose.msra.mxu0 0.0
        %1040 = vmatprep.subr.mxu0 0.0
        %1041 = vmatpush1.xpose.msra.mxu0 0.0
        %1042 = vmatprep.subr.mxu0 0.0
        %1043 = vmatpush1.xpose.msra.mxu0 0.0
        %1044 = vmatprep.subr.mxu0 0.0
        %1045 = vmatpush1.xpose.msra.mxu0 0.0
        %1046 = vmatprep.subr.mxu0 0.0
        %1047 = vmatpush1.xpose.msra.mxu0 0.0
        %1048 = vmatprep.subr.mxu0 0.0
        %1049 = vmatpush1.xpose.msra.mxu0 0.0
        %1050 = vmatprep.subr.mxu0 0.0
        %1051 = vmatpush1.xpose.msra.mxu0 0.0
        %1052 = vmatprep.subr.mxu0 0.0
        %1053 = vmatpush1.xpose.msra.mxu0 0.0
        %1054 = vmatprep.subr.mxu0 0.0
        %1055 = vmatpush1.xpose.msra.mxu0 0.0
        %1056 = vmatprep.subr.mxu0 0.0
        %1057 = vmatpush1.xpose.msra.mxu0 0.0
        %1058 = vmatprep.subr.mxu0 0.0
        %1059 = vmatpush1.xpose.msra.mxu0 0.0
        %1060 = vmatprep.subr.mxu0 0.0
        %1061 = vmatpush1.xpose.msra.mxu0 0.0
        %1062 = vmatprep.subr.mxu0 0.0
        %1063 = vmatpush1.xpose.msra.mxu0 0.0
        %1064 = vmatprep.subr.mxu0 0.0
        %1065 = vmatpush1.xpose.msra.mxu0 0.0
        %1066 = vmatprep.subr.mxu0 0.0
        %1067 = vmatpush1.xpose.msra.mxu0 0.0
        %1068 = vmatprep.subr.mxu0 0.0
        %1069 = vmatpush1.xpose.msra.mxu0 0.0
        %1070 = vmatprep.subr.mxu0 0.0
        %1071 = vmatpush1.xpose.msra.mxu0 0.0
        %1072 = vmatprep.mubr.f32.mxu0 0.0
        %1073 = vmatmul.mubr.f32.gmra.mrb[0].mxu0 %v1000
        %v1074 = vpop.f32.mrb[0].mxu0
        %v1075 = vadd.f32 %v997, %v1074
        %v1076 = vpop.f32.mrb[0].mxu0
        %1077 = vdwg.mxu0
        %v1078 = vsel %vm454, %v881, -inf
        %1079 = vmax.xlane.f32.xlu0 %v1078
        %v1080 = vpop.xlane.xlu0 %1079
        %v1081 = vsel %vm454, %v978, -inf
        %1082 = vmax.xlane.f32.xlu0 %v1081
        %v1083 = vpop.xlane.xlu0 %1082
        %v1084 = vsel %vm454, %v1075, -inf
        %1085 = vmax.xlane.f32.xlu0 %v1084
        %v1086 = vpop.xlane.xlu0 %1085
        %v1087 = vsub.f32 %v881, %v1080
        %v1088 = vsub.f32 %v978, %v1083
        %v1089 = vsub.f32 %v1075, %v1086
        %v1090 = vmul.f32 %v1087, 1.442695
        %v1091 = vpow.pop %v1090
        %v1092 = vmul.f32 %v1088, 1.442695
        %v1093 = vpow.pop %v1092
        %v1094 = vmul.f32 %v1089, 1.442695
        %v1095 = vpow.pop %v1094
        %v1097 = vsel %vm454, %v1091, 0
        %1099 = vmatprep.subr.mxu0 0.0
        %1100 = vmatpush1.msra.mxu0 %v709
        %1101 = vmatprep.subr.mxu0 0.0
        %1102 = vmatpush1.msra.mxu0 %v710
        %1103 = vmatprep.subr.mxu0 0.0
        %1104 = vmatpush1.msra.mxu0 0.0
        %1105 = vmatprep.subr.mxu0 0.0
        %1106 = vmatpush1.msra.mxu0 0.0
        %1107 = vmatprep.subr.mxu0 0.0
        %1108 = vmatpush1.msra.mxu0 0.0
        %1109 = vmatprep.subr.mxu0 0.0
        %1110 = vmatpush1.msra.mxu0 0.0
        %1111 = vmatprep.subr.mxu0 0.0
        %1112 = vmatpush1.msra.mxu0 0.0
        %1113 = vmatprep.subr.mxu0 0.0
        %1114 = vmatpush1.msra.mxu0 0.0
        %1115 = vmatprep.subr.mxu0 0.0
        %1116 = vmatpush1.msra.mxu0 0.0
        %1117 = vmatprep.subr.mxu0 0.0
        %1118 = vmatpush1.msra.mxu0 0.0
        %1119 = vmatprep.subr.mxu0 0.0
        %1120 = vmatpush1.msra.mxu0 0.0
        %1121 = vmatprep.subr.mxu0 0.0
        %1122 = vmatpush1.msra.mxu0 0.0
        %1123 = vmatprep.subr.mxu0 0.0
        %1124 = vmatpush1.msra.mxu0 0.0
        %1125 = vmatprep.subr.mxu0 0.0
        %1126 = vmatpush1.msra.mxu0 0.0
        %1127 = vmatprep.subr.mxu0 0.0
        %1128 = vmatpush1.msra.mxu0 0.0
        %1129 = vmatprep.subr.mxu0 0.0
        %1130 = vmatpush1.msra.mxu0 0.0
        %1131 = vmatprep.subr.mxu0 0.0
        %1132 = vmatpush1.msra.mxu0 0.0
        %1133 = vmatprep.subr.mxu0 0.0
        %1134 = vmatpush1.msra.mxu0 0.0
        %1135 = vmatprep.subr.mxu0 0.0
        %1136 = vmatpush1.msra.mxu0 0.0
        %1137 = vmatprep.subr.mxu0 0.0
        %1138 = vmatpush1.msra.mxu0 0.0
        %1139 = vmatprep.subr.mxu0 0.0
        %1140 = vmatpush1.msra.mxu0 0.0
        %1141 = vmatprep.subr.mxu0 0.0
        %1142 = vmatpush1.msra.mxu0 0.0
        %1143 = vmatprep.subr.mxu0 0.0
        %1144 = vmatpush1.msra.mxu0 0.0
        %1145 = vmatprep.subr.mxu0 0.0
        %1146 = vmatpush1.msra.mxu0 0.0
        %1147 = vmatprep.subr.mxu0 0.0
        %1148 = vmatpush1.msra.mxu0 0.0
        %1149 = vmatprep.subr.mxu0 0.0
        %1150 = vmatpush1.msra.mxu0 0.0
        %1151 = vmatprep.subr.mxu0 0.0
        %1152 = vmatpush1.msra.mxu0 0.0
        %1153 = vmatprep.subr.mxu0 0.0
        %1154 = vmatpush1.msra.mxu0 0.0
        %1155 = vmatprep.subr.mxu0 0.0
        %1156 = vmatpush1.msra.mxu0 0.0
        %1157 = vmatprep.subr.mxu0 0.0
        %1158 = vmatpush1.msra.mxu0 0.0
        %1159 = vmatprep.subr.mxu0 0.0
        %1160 = vmatpush1.msra.mxu0 0.0
        %1161 = vmatprep.subr.mxu0 0.0
        %1162 = vmatpush1.msra.mxu0 0.0
        %1163 = vmatprep.mubr.f32.mxu0 0.0
        %1164 = vmatmul.mubr.f32.gmra.mrb[0].mxu0 %v1097
        %v1165 = vpop.f32.mrb[0].mxu0
        %v1166 = vadd.f32 0.0, %v1165
        %v1167 = vpop.f32.mrb[0].mxu0
        %1168 = vdwg.mxu0
        %v1170 = vsel %vm454, %v1093, 0
        %1172 = vmatprep.subr.mxu0 0.0
        %1173 = vmatpush1.msra.mxu0 %v711
        %1174 = vmatprep.subr.mxu0 0.0
        %1175 = vmatpush1.msra.mxu0 %v712
        %1176 = vmatprep.subr.mxu0 0.0
        %1177 = vmatpush1.msra.mxu0 0.0
        %1178 = vmatprep.subr.mxu0 0.0
        %1179 = vmatpush1.msra.mxu0 0.0
        %1180 = vmatprep.subr.mxu0 0.0
        %1181 = vmatpush1.msra.mxu0 0.0
        %1182 = vmatprep.subr.mxu0 0.0
        %1183 = vmatpush1.msra.mxu0 0.0
        %1184 = vmatprep.subr.mxu0 0.0
        %1185 = vmatpush1.msra.mxu0 0.0
        %1186 = vmatprep.subr.mxu0 0.0
        %1187 = vmatpush1.msra.mxu0 0.0
        %1188 = vmatprep.subr.mxu0 0.0
        %1189 = vmatpush1.msra.mxu0 0.0
        %1190 = vmatprep.subr.mxu0 0.0
        %1191 = vmatpush1.msra.mxu0 0.0
        %1192 = vmatprep.subr.mxu0 0.0
        %1193 = vmatpush1.msra.mxu0 0.0
        %1194 = vmatprep.subr.mxu0 0.0
        %1195 = vmatpush1.msra.mxu0 0.0
        %1196 = vmatprep.subr.mxu0 0.0
        %1197 = vmatpush1.msra.mxu0 0.0
        %1198 = vmatprep.subr.mxu0 0.0
        %1199 = vmatpush1.msra.mxu0 0.0
        %1200 = vmatprep.subr.mxu0 0.0
        %1201 = vmatpush1.msra.mxu0 0.0
        %1202 = vmatprep.subr.mxu0 0.0
        %1203 = vmatpush1.msra.mxu0 0.0
        %1204 = vmatprep.subr.mxu0 0.0
        %1205 = vmatpush1.msra.mxu0 0.0
        %1206 = vmatprep.subr.mxu0 0.0
        %1207 = vmatpush1.msra.mxu0 0.0
        %1208 = vmatprep.subr.mxu0 0.0
        %1209 = vmatpush1.msra.mxu0 0.0
        %1210 = vmatprep.subr.mxu0 0.0
        %1211 = vmatpush1.msra.mxu0 0.0
        %1212 = vmatprep.subr.mxu0 0.0
        %1213 = vmatpush1.msra.mxu0 0.0
        %1214 = vmatprep.subr.mxu0 0.0
        %1215 = vmatpush1.msra.mxu0 0.0
        %1216 = vmatprep.subr.mxu0 0.0
        %1217 = vmatpush1.msra.mxu0 0.0
        %1218 = vmatprep.subr.mxu0 0.0
        %1219 = vmatpush1.msra.mxu0 0.0
        %1220 = vmatprep.subr.mxu0 0.0
        %1221 = vmatpush1.msra.mxu0 0.0
        %1222 = vmatprep.subr.mxu0 0.0
        %1223 = vmatpush1.msra.mxu0 0.0
        %1224 = vmatprep.subr.mxu0 0.0
        %1225 = vmatpush1.msra.mxu0 0.0
        %1226 = vmatprep.subr.mxu0 0.0
        %1227 = vmatpush1.msra.mxu0 0.0
        %1228 = vmatprep.subr.mxu0 0.0
        %1229 = vmatpush1.msra.mxu0 0.0
        %1230 = vmatprep.subr.mxu0 0.0
        %1231 = vmatpush1.msra.mxu0 0.0
        %1232 = vmatprep.subr.mxu0 0.0
        %1233 = vmatpush1.msra.mxu0 0.0
        %1234 = vmatprep.subr.mxu0 0.0
        %1235 = vmatpush1.msra.mxu0 0.0
        %1236 = vmatprep.mubr.f32.mxu0 0.0
        %1237 = vmatmul.mubr.f32.gmra.mrb[0].mxu0 %v1170
        %v1238 = vpop.f32.mrb[0].mxu0
        %v1239 = vadd.f32 0.0, %v1238
        %v1240 = vpop.f32.mrb[0].mxu0
        %1241 = vdwg.mxu0
        %v1243 = vsel %vm454, %v1095, 0
        %1245 = vmatprep.subr.mxu0 0.0
        %1246 = vmatpush1.msra.mxu0 %v713
        %1247 = vmatprep.subr.mxu0 0.0
        %1248 = vmatpush1.msra.mxu0 %v714
        %1249 = vmatprep.subr.mxu0 0.0
        %1250 = vmatpush1.msra.mxu0 0.0
        %1251 = vmatprep.subr.mxu0 0.0
        %1252 = vmatpush1.msra.mxu0 0.0
        %1253 = vmatprep.subr.mxu0 0.0
        %1254 = vmatpush1.msra.mxu0 0.0
        %1255 = vmatprep.subr.mxu0 0.0
        %1256 = vmatpush1.msra.mxu0 0.0
        %1257 = vmatprep.subr.mxu0 0.0
        %1258 = vmatpush1.msra.mxu0 0.0
        %1259 = vmatprep.subr.mxu0 0.0
        %1260 = vmatpush1.msra.mxu0 0.0
        %1261 = vmatprep.subr.mxu0 0.0
        %1262 = vmatpush1.msra.mxu0 0.0
        %1263 = vmatprep.subr.mxu0 0.0
        %1264 = vmatpush1.msra.mxu0 0.0
        %1265 = vmatprep.subr.mxu0 0.0
        %1266 = vmatpush1.msra.mxu0 0.0
        %1267 = vmatprep.subr.mxu0 0.0
        %1268 = vmatpush1.msra.mxu0 0.0
        %1269 = vmatprep.subr.mxu0 0.0
        %1270 = vmatpush1.msra.mxu0 0.0
        %1271 = vmatprep.subr.mxu0 0.0
        %1272 = vmatpush1.msra.mxu0 0.0
        %1273 = vmatprep.subr.mxu0 0.0
        %1274 = vmatpush1.msra.mxu0 0.0
        %1275 = vmatprep.subr.mxu0 0.0
        %1276 = vmatpush1.msra.mxu0 0.0
        %1277 = vmatprep.subr.mxu0 0.0
        %1278 = vmatpush1.msra.mxu0 0.0
        %1279 = vmatprep.subr.mxu0 0.0
        %1280 = vmatpush1.msra.mxu0 0.0
        %1281 = vmatprep.subr.mxu0 0.0
        %1282 = vmatpush1.msra.mxu0 0.0
        %1283 = vmatprep.subr.mxu0 0.0
        %1284 = vmatpush1.msra.mxu0 0.0
        %1285 = vmatprep.subr.mxu0 0.0
        %1286 = vmatpush1.msra.mxu0 0.0
        %1287 = vmatprep.subr.mxu0 0.0
        %1288 = vmatpush1.msra.mxu0 0.0
        %1289 = vmatprep.subr.mxu0 0.0
        %1290 = vmatpush1.msra.mxu0 0.0
        %1291 = vmatprep.subr.mxu0 0.0
        %1292 = vmatpush1.msra.mxu0 0.0
        %1293 = vmatprep.subr.mxu0 0.0
        %1294 = vmatpush1.msra.mxu0 0.0
        %1295 = vmatprep.subr.mxu0 0.0
        %1296 = vmatpush1.msra.mxu0 0.0
        %1297 = vmatprep.subr.mxu0 0.0
        %1298 = vmatpush1.msra.mxu0 0.0
        %1299 = vmatprep.subr.mxu0 0.0
        %1300 = vmatpush1.msra.mxu0 0.0
        %1301 = vmatprep.subr.mxu0 0.0
        %1302 = vmatpush1.msra.mxu0 0.0
        %1303 = vmatprep.subr.mxu0 0.0
        %1304 = vmatpush1.msra.mxu0 0.0
        %1305 = vmatprep.subr.mxu0 0.0
        %1306 = vmatpush1.msra.mxu0 0.0
        %1307 = vmatprep.subr.mxu0 0.0
        %1308 = vmatpush1.msra.mxu0 0.0
        %1309 = vmatprep.mubr.f32.mxu0 0.0
        %1310 = vmatmul.mubr.f32.gmra.mrb[0].mxu0 %v1243
        %v1311 = vpop.f32.mrb[0].mxu0
        %v1312 = vadd.f32 0.0, %v1311
        %v1313 = vpop.f32.mrb[0].mxu0
        %1314 = vdwg.mxu0
        %vm1315 = vcmp.gt.f32.partialorder %v1166, 0.0
        %vm1316 = vcmp.gt.f32.partialorder %v1239, 0.0
        %vm1317 = vcmp.gt.f32.partialorder %v1312, 0.0
        %v1318 = vsel %vm1315, %v1166, 1.0
        %v1319 = vsel %vm1316, %v1239, 1.0
        %v1320 = vsel %vm1317, %v1312, 1.0
        %v1321 = vrcp.pop %v1318
        %v1322 = vrcp.pop %v1319
        %v1323 = vrcp.pop %v1320
        %1327 = vrot.lane.b32.xlu0 %v1321, 124
        %v1328 = vpop.permute.xlu0 %1327
        %1329 = vrot.lane.b32.xlu0 %v1322, 124
        %v1330 = vpop.permute.xlu0 %1329
        %1331 = vrot.lane.b32.xlu0 %v1323, 124
        %v1332 = vpop.permute.xlu0 %1331
        %v1336 = vmul.f32 %v1166, %v1328
        %v1337 = vmul.f32 %v1239, %v1330
        %v1338 = vmul.f32 %v1312, %v1332
        %1342 = vrot.lane.b32.xlu0 %v1336, 4
        %v1343 = vpop.permute.xlu0 %1342
        %1344 = vrot.lane.b32.xlu0 %v1337, 4
        %v1345 = vpop.permute.xlu0 %1344
        %1346 = vrot.lane.b32.xlu0 %v1338, 4
        %v1347 = vpop.permute.xlu0 %1346
        %1354 = vrot.lane.b32.xlu0 %v773, 4
        %v1355 = vpop.permute.xlu0 %1354
        %1356 = vrot.lane.b32.xlu0 %v774, 4
        %v1357 = vpop.permute.xlu0 %1356
        %1358 = vrot.lane.b32.xlu0 %v775, 4
        %v1359 = vpop.permute.xlu0 %1358
        %v1363 = vsel %vm1315, %v1343, %v1355
        %v1364 = vsel %vm1316, %v1345, %v1357
        %v1365 = vsel %vm1317, %v1347, %v1359
        %1366 = vrot.lane.b32.xlu0 %v531, 120
        %v1367 = vpop.permute.xlu0 %1366
        %1368 = vrot.lane.b32.xlu0 %v638, 120
        %v1369 = vpop.permute.xlu0 %1368
        %1370 = vrot.lane.b32.xlu0 %v643, 120
        %v1371 = vpop.permute.xlu0 %1370
        %v1372 = vsel %vm804, %v1367, 0
        %v1374 = vsel %vm804, %v1369, 0
        %v1376 = vsel %vm804, %v1371, 0
        %1378 = vmatprep.subr.mxu0 0.0
        %1379 = vmatpush1.xpose.msra.mxu0 %v1374
        %1380 = vmatprep.subr.mxu0 0.0
        %1381 = vmatpush1.xpose.msra.mxu0 %v1376
        %1382 = vmatprep.subr.mxu0 0.0
        %1383 = vmatpush1.xpose.msra.mxu0 0.0
        %1384 = vmatprep.subr.mxu0 0.0
        %1385 = vmatpush1.xpose.msra.mxu0 0.0
        %1386 = vmatprep.subr.mxu0 0.0
        %1387 = vmatpush1.xpose.msra.mxu0 0.0
        %1388 = vmatprep.subr.mxu0 0.0
        %1389 = vmatpush1.xpose.msra.mxu0 0.0
        %1390 = vmatprep.subr.mxu0 0.0
        %1391 = vmatpush1.xpose.msra.mxu0 0.0
        %1392 = vmatprep.subr.mxu0 0.0
        %1393 = vmatpush1.xpose.msra.mxu0 0.0
        %1394 = vmatprep.subr.mxu0 0.0
        %1395 = vmatpush1.xpose.msra.mxu0 0.0
        %1396 = vmatprep.subr.mxu0 0.0
        %1397 = vmatpush1.xpose.msra.mxu0 0.0
        %1398 = vmatprep.subr.mxu0 0.0
        %1399 = vmatpush1.xpose.msra.mxu0 0.0
        %1400 = vmatprep.subr.mxu0 0.0
        %1401 = vmatpush1.xpose.msra.mxu0 0.0
        %1402 = vmatprep.subr.mxu0 0.0
        %1403 = vmatpush1.xpose.msra.mxu0 0.0
        %1404 = vmatprep.subr.mxu0 0.0
        %1405 = vmatpush1.xpose.msra.mxu0 0.0
        %1406 = vmatprep.subr.mxu0 0.0
        %1407 = vmatpush1.xpose.msra.mxu0 0.0
        %1408 = vmatprep.subr.mxu0 0.0
        %1409 = vmatpush1.xpose.msra.mxu0 0.0
        %1410 = vmatprep.subr.mxu0 0.0
        %1411 = vmatpush1.xpose.msra.mxu0 0.0
        %1412 = vmatprep.subr.mxu0 0.0
        %1413 = vmatpush1.xpose.msra.mxu0 0.0
        %1414 = vmatprep.subr.mxu0 0.0
        %1415 = vmatpush1.xpose.msra.mxu0 0.0
        %1416 = vmatprep.subr.mxu0 0.0
        %1417 = vmatpush1.xpose.msra.mxu0 0.0
        %1418 = vmatprep.subr.mxu0 0.0
        %1419 = vmatpush1.xpose.msra.mxu0 0.0
        %1420 = vmatprep.subr.mxu0 0.0
        %1421 = vmatpush1.xpose.msra.mxu0 0.0
        %1422 = vmatprep.subr.mxu0 0.0
        %1423 = vmatpush1.xpose.msra.mxu0 0.0
        %1424 = vmatprep.subr.mxu0 0.0
        %1425 = vmatpush1.xpose.msra.mxu0 0.0
        %1426 = vmatprep.subr.mxu0 0.0
        %1427 = vmatpush1.xpose.msra.mxu0 0.0
        %1428 = vmatprep.subr.mxu0 0.0
        %1429 = vmatpush1.xpose.msra.mxu0 0.0
        %1430 = vmatprep.subr.mxu0 0.0
        %1431 = vmatpush1.xpose.msra.mxu0 0.0
        %1432 = vmatprep.subr.mxu0 0.0
        %1433 = vmatpush1.xpose.msra.mxu0 0.0
        %1434 = vmatprep.subr.mxu0 0.0
        %1435 = vmatpush1.xpose.msra.mxu0 0.0
        %1436 = vmatprep.subr.mxu0 0.0
        %1437 = vmatpush1.xpose.msra.mxu0 0.0
        %1438 = vmatprep.subr.mxu0 0.0
        %1439 = vmatpush1.xpose.msra.mxu0 0.0
        %1440 = vmatprep.subr.mxu0 0.0
        %1441 = vmatpush1.xpose.msra.mxu0 0.0
        %1442 = vmatprep.mubr.f32.mxu0 0.0
        %1443 = vmatmul.mubr.f32.gmra.mrb[0].mxu0 %v1372
        %v1444 = vpop.f32.mrb[0].mxu0
        %v1445 = vadd.f32 %v802, %v1444
        %v1446 = vpop.f32.mrb[0].mxu0
        %1447 = vdwg.mxu0
        %1448 = vrot.lane.b32.xlu0 %v536, 120
        %v1449 = vpop.permute.xlu0 %1448
        %1450 = vrot.lane.b32.xlu0 %v648, 120
        %v1451 = vpop.permute.xlu0 %1450
        %1452 = vrot.lane.b32.xlu0 %v653, 120
        %v1453 = vpop.permute.xlu0 %1452
        %v1454 = vsel %vm804, %v1449, 0
        %v1456 = vsel %vm804, %v1451, 0
        %v1458 = vsel %vm804, %v1453, 0
        %1460 = vmatprep.subr.mxu0 0.0
        %1461 = vmatpush1.xpose.msra.mxu0 %v1456
        %1462 = vmatprep.subr.mxu0 0.0
        %1463 = vmatpush1.xpose.msra.mxu0 %v1458
        %1464 = vmatprep.subr.mxu0 0.0
        %1465 = vmatpush1.xpose.msra.mxu0 0.0
        %1466 = vmatprep.subr.mxu0 0.0
        %1467 = vmatpush1.xpose.msra.mxu0 0.0
        %1468 = vmatprep.subr.mxu0 0.0
        %1469 = vmatpush1.xpose.msra.mxu0 0.0
        %1470 = vmatprep.subr.mxu0 0.0
        %1471 = vmatpush1.xpose.msra.mxu0 0.0
        %1472 = vmatprep.subr.mxu0 0.0
        %1473 = vmatpush1.xpose.msra.mxu0 0.0
        %1474 = vmatprep.subr.mxu0 0.0
        %1475 = vmatpush1.xpose.msra.mxu0 0.0
        %1476 = vmatprep.subr.mxu0 0.0
        %1477 = vmatpush1.xpose.msra.mxu0 0.0
        %1478 = vmatprep.subr.mxu0 0.0
        %1479 = vmatpush1.xpose.msra.mxu0 0.0
        %1480 = vmatprep.subr.mxu0 0.0
        %1481 = vmatpush1.xpose.msra.mxu0 0.0
        %1482 = vmatprep.subr.mxu0 0.0
        %1483 = vmatpush1.xpose.msra.mxu0 0.0
        %1484 = vmatprep.subr.mxu0 0.0
        %1485 = vmatpush1.xpose.msra.mxu0 0.0
        %1486 = vmatprep.subr.mxu0 0.0
        %1487 = vmatpush1.xpose.msra.mxu0 0.0
        %1488 = vmatprep.subr.mxu0 0.0
        %1489 = vmatpush1.xpose.msra.mxu0 0.0
        %1490 = vmatprep.subr.mxu0 0.0
        %1491 = vmatpush1.xpose.msra.mxu0 0.0
        %1492 = vmatprep.subr.mxu0 0.0
        %1493 = vmatpush1.xpose.msra.mxu0 0.0
        %1494 = vmatprep.subr.mxu0 0.0
        %1495 = vmatpush1.xpose.msra.mxu0 0.0
        %1496 = vmatprep.subr.mxu0 0.0
        %1497 = vmatpush1.xpose.msra.mxu0 0.0
        %1498 = vmatprep.subr.mxu0 0.0
        %1499 = vmatpush1.xpose.msra.mxu0 0.0
        %1500 = vmatprep.subr.mxu0 0.0
        %1501 = vmatpush1.xpose.msra.mxu0 0.0
        %1502 = vmatprep.subr.mxu0 0.0
        %1503 = vmatpush1.xpose.msra.mxu0 0.0
        %1504 = vmatprep.subr.mxu0 0.0
        %1505 = vmatpush1.xpose.msra.mxu0 0.0
        %1506 = vmatprep.subr.mxu0 0.0
        %1507 = vmatpush1.xpose.msra.mxu0 0.0
        %1508 = vmatprep.subr.mxu0 0.0
        %1509 = vmatpush1.xpose.msra.mxu0 0.0
        %1510 = vmatprep.subr.mxu0 0.0
        %1511 = vmatpush1.xpose.msra.mxu0 0.0
        %1512 = vmatprep.subr.mxu0 0.0
        %1513 = vmatpush1.xpose.msra.mxu0 0.0
        %1514 = vmatprep.subr.mxu0 0.0
        %1515 = vmatpush1.xpose.msra.mxu0 0.0
        %1516 = vmatprep.subr.mxu0 0.0
        %1517 = vmatpush1.xpose.msra.mxu0 0.0
        %1518 = vmatprep.subr.mxu0 0.0
        %1519 = vmatpush1.xpose.msra.mxu0 0.0
        %1520 = vmatprep.subr.mxu0 0.0
        %1521 = vmatpush1.xpose.msra.mxu0 0.0
        %1522 = vmatprep.subr.mxu0 0.0
        %1523 = vmatpush1.xpose.msra.mxu0 0.0
        %1524 = vmatprep.mubr.f32.mxu0 0.0
        %1525 = vmatmul.mubr.f32.gmra.mrb[0].mxu0 %v1454
        %v1526 = vpop.f32.mrb[0].mxu0
        %v1527 = vadd.f32 %v900, %v1526
        %v1528 = vpop.f32.mrb[0].mxu0
        %1529 = vdwg.mxu0
        %1530 = vrot.lane.b32.xlu0 %v541, 120
        %v1531 = vpop.permute.xlu0 %1530
        %1532 = vrot.lane.b32.xlu0 %v658, 120
        %v1533 = vpop.permute.xlu0 %1532
        %1534 = vrot.lane.b32.xlu0 %v663, 120
        %v1535 = vpop.permute.xlu0 %1534
        %v1536 = vsel %vm804, %v1531, 0
        %v1538 = vsel %vm804, %v1533, 0
        %v1540 = vsel %vm804, %v1535, 0
        %1542 = vmatprep.subr.mxu0 0.0
        %1543 = vmatpush1.xpose.msra.mxu0 %v1538
        %1544 = vmatprep.subr.mxu0 0.0
        %1545 = vmatpush1.xpose.msra.mxu0 %v1540
        %1546 = vmatprep.subr.mxu0 0.0
        %1547 = vmatpush1.xpose.msra.mxu0 0.0
        %1548 = vmatprep.subr.mxu0 0.0
        %1549 = vmatpush1.xpose.msra.mxu0 0.0
        %1550 = vmatprep.subr.mxu0 0.0
        %1551 = vmatpush1.xpose.msra.mxu0 0.0
        %1552 = vmatprep.subr.mxu0 0.0
        %1553 = vmatpush1.xpose.msra.mxu0 0.0
        %1554 = vmatprep.subr.mxu0 0.0
        %1555 = vmatpush1.xpose.msra.mxu0 0.0
        %1556 = vmatprep.subr.mxu0 0.0
        %1557 = vmatpush1.xpose.msra.mxu0 0.0
        %1558 = vmatprep.subr.mxu0 0.0
        %1559 = vmatpush1.xpose.msra.mxu0 0.0
        %1560 = vmatprep.subr.mxu0 0.0
        %1561 = vmatpush1.xpose.msra.mxu0 0.0
        %1562 = vmatprep.subr.mxu0 0.0
        %1563 = vmatpush1.xpose.msra.mxu0 0.0
        %1564 = vmatprep.subr.mxu0 0.0
        %1565 = vmatpush1.xpose.msra.mxu0 0.0
        %1566 = vmatprep.subr.mxu0 0.0
        %1567 = vmatpush1.xpose.msra.mxu0 0.0
        %1568 = vmatprep.subr.mxu0 0.0
        %1569 = vmatpush1.xpose.msra.mxu0 0.0
        %1570 = vmatprep.subr.mxu0 0.0
        %1571 = vmatpush1.xpose.msra.mxu0 0.0
        %1572 = vmatprep.subr.mxu0 0.0
        %1573 = vmatpush1.xpose.msra.mxu0 0.0
        %1574 = vmatprep.subr.mxu0 0.0
        %1575 = vmatpush1.xpose.msra.mxu0 0.0
        %1576 = vmatprep.subr.mxu0 0.0
        %1577 = vmatpush1.xpose.msra.mxu0 0.0
        %1578 = vmatprep.subr.mxu0 0.0
        %1579 = vmatpush1.xpose.msra.mxu0 0.0
        %1580 = vmatprep.subr.mxu0 0.0
        %1581 = vmatpush1.xpose.msra.mxu0 0.0
        %1582 = vmatprep.subr.mxu0 0.0
        %1583 = vmatpush1.xpose.msra.mxu0 0.0
        %1584 = vmatprep.subr.mxu0 0.0
        %1585 = vmatpush1.xpose.msra.mxu0 0.0
        %1586 = vmatprep.subr.mxu0 0.0
        %1587 = vmatpush1.xpose.msra.mxu0 0.0
        %1588 = vmatprep.subr.mxu0 0.0
        %1589 = vmatpush1.xpose.msra.mxu0 0.0
        %1590 = vmatprep.subr.mxu0 0.0
        %1591 = vmatpush1.xpose.msra.mxu0 0.0
        %1592 = vmatprep.subr.mxu0 0.0
        %1593 = vmatpush1.xpose.msra.mxu0 0.0
        %1594 = vmatprep.subr.mxu0 0.0
        %1595 = vmatpush1.xpose.msra.mxu0 0.0
        %1596 = vmatprep.subr.mxu0 0.0
        %1597 = vmatpush1.xpose.msra.mxu0 0.0
        %1598 = vmatprep.subr.mxu0 0.0
        %1599 = vmatpush1.xpose.msra.mxu0 0.0
        %1600 = vmatprep.subr.mxu0 0.0
        %1601 = vmatpush1.xpose.msra.mxu0 0.0
        %1602 = vmatprep.subr.mxu0 0.0
        %1603 = vmatpush1.xpose.msra.mxu0 0.0
        %1604 = vmatprep.subr.mxu0 0.0
        %1605 = vmatpush1.xpose.msra.mxu0 0.0
        %1606 = vmatprep.mubr.f32.mxu0 0.0
        %1607 = vmatmul.mubr.f32.gmra.mrb[0].mxu0 %v1536
        %v1608 = vpop.f32.mrb[0].mxu0
        %v1609 = vadd.f32 %v997, %v1608
        %v1610 = vpop.f32.mrb[0].mxu0
        %1611 = vdwg.mxu0
        %v1612 = vsel %vm454, %v1445, -inf
        %1613 = vmax.xlane.f32.xlu0 %v1612
        %v1614 = vpop.xlane.xlu0 %1613
        %v1615 = vsel %vm454, %v1527, -inf
        %1616 = vmax.xlane.f32.xlu0 %v1615
        %v1617 = vpop.xlane.xlu0 %1616
        %v1618 = vsel %vm454, %v1609, -inf
        %1619 = vmax.xlane.f32.xlu0 %v1618
        %v1620 = vpop.xlane.xlu0 %1619
        %v1621 = vsub.f32 %v1445, %v1614
        %v1622 = vsub.f32 %v1527, %v1617
        %v1623 = vsub.f32 %v1609, %v1620
        %v1624 = vmul.f32 %v1621, 1.442695
        %v1625 = vpow.pop %v1624
        %v1626 = vmul.f32 %v1622, 1.442695
        %v1627 = vpow.pop %v1626
        %v1628 = vmul.f32 %v1623, 1.442695
        %v1629 = vpow.pop %v1628
        %v1631 = vsel %vm454, %v1625, 0
        %1633 = vmatprep.subr.mxu0 0.0
        %1634 = vmatpush1.msra.mxu0 %v709
        %1635 = vmatprep.subr.mxu0 0.0
        %1636 = vmatpush1.msra.mxu0 %v710
        %1637 = vmatprep.subr.mxu0 0.0
        %1638 = vmatpush1.msra.mxu0 0.0
        %1639 = vmatprep.subr.mxu0 0.0
        %1640 = vmatpush1.msra.mxu0 0.0
        %1641 = vmatprep.subr.mxu0 0.0
        %1642 = vmatpush1.msra.mxu0 0.0
        %1643 = vmatprep.subr.mxu0 0.0
        %1644 = vmatpush1.msra.mxu0 0.0
        %1645 = vmatprep.subr.mxu0 0.0
        %1646 = vmatpush1.msra.mxu0 0.0
        %1647 = vmatprep.subr.mxu0 0.0
        %1648 = vmatpush1.msra.mxu0 0.0
        %1649 = vmatprep.subr.mxu0 0.0
        %1650 = vmatpush1.msra.mxu0 0.0
        %1651 = vmatprep.subr.mxu0 0.0
        %1652 = vmatpush1.msra.mxu0 0.0
        %1653 = vmatprep.subr.mxu0 0.0
        %1654 = vmatpush1.msra.mxu0 0.0
        %1655 = vmatprep.subr.mxu0 0.0
        %1656 = vmatpush1.msra.mxu0 0.0
        %1657 = vmatprep.subr.mxu0 0.0
        %1658 = vmatpush1.msra.mxu0 0.0
        %1659 = vmatprep.subr.mxu0 0.0
        %1660 = vmatpush1.msra.mxu0 0.0
        %1661 = vmatprep.subr.mxu0 0.0
        %1662 = vmatpush1.msra.mxu0 0.0
        %1663 = vmatprep.subr.mxu0 0.0
        %1664 = vmatpush1.msra.mxu0 0.0
        %1665 = vmatprep.subr.mxu0 0.0
        %1666 = vmatpush1.msra.mxu0 0.0
        %1667 = vmatprep.subr.mxu0 0.0
        %1668 = vmatpush1.msra.mxu0 0.0
        %1669 = vmatprep.subr.mxu0 0.0
        %1670 = vmatpush1.msra.mxu0 0.0
        %1671 = vmatprep.subr.mxu0 0.0
        %1672 = vmatpush1.msra.mxu0 0.0
        %1673 = vmatprep.subr.mxu0 0.0
        %1674 = vmatpush1.msra.mxu0 0.0
        %1675 = vmatprep.subr.mxu0 0.0
        %1676 = vmatpush1.msra.mxu0 0.0
        %1677 = vmatprep.subr.mxu0 0.0
        %1678 = vmatpush1.msra.mxu0 0.0
        %1679 = vmatprep.subr.mxu0 0.0
        %1680 = vmatpush1.msra.mxu0 0.0
        %1681 = vmatprep.subr.mxu0 0.0
        %1682 = vmatpush1.msra.mxu0 0.0
        %1683 = vmatprep.subr.mxu0 0.0
        %1684 = vmatpush1.msra.mxu0 0.0
        %1685 = vmatprep.subr.mxu0 0.0
        %1686 = vmatpush1.msra.mxu0 0.0
        %1687 = vmatprep.subr.mxu0 0.0
        %1688 = vmatpush1.msra.mxu0 0.0
        %1689 = vmatprep.subr.mxu0 0.0
        %1690 = vmatpush1.msra.mxu0 0.0
        %1691 = vmatprep.subr.mxu0 0.0
        %1692 = vmatpush1.msra.mxu0 0.0
        %1693 = vmatprep.subr.mxu0 0.0
        %1694 = vmatpush1.msra.mxu0 0.0
        %1695 = vmatprep.subr.mxu0 0.0
        %1696 = vmatpush1.msra.mxu0 0.0
        %1697 = vmatprep.mubr.f32.mxu0 0.0
        %1698 = vmatmul.mubr.f32.gmra.mrb[0].mxu0 %v1631
        %v1699 = vpop.f32.mrb[0].mxu0
        %v1700 = vadd.f32 0.0, %v1699
        %v1701 = vpop.f32.mrb[0].mxu0
        %1702 = vdwg.mxu0
        %v1704 = vsel %vm454, %v1627, 0
        %1706 = vmatprep.subr.mxu0 0.0
        %1707 = vmatpush1.msra.mxu0 %v711
        %1708 = vmatprep.subr.mxu0 0.0
        %1709 = vmatpush1.msra.mxu0 %v712
        %1710 = vmatprep.subr.mxu0 0.0
        %1711 = vmatpush1.msra.mxu0 0.0
        %1712 = vmatprep.subr.mxu0 0.0
        %1713 = vmatpush1.msra.mxu0 0.0
        %1714 = vmatprep.subr.mxu0 0.0
        %1715 = vmatpush1.msra.mxu0 0.0
        %1716 = vmatprep.subr.mxu0 0.0
        %1717 = vmatpush1.msra.mxu0 0.0
        %1718 = vmatprep.subr.mxu0 0.0
        %1719 = vmatpush1.msra.mxu0 0.0
        %1720 = vmatprep.subr.mxu0 0.0
        %1721 = vmatpush1.msra.mxu0 0.0
        %1722 = vmatprep.subr.mxu0 0.0
        %1723 = vmatpush1.msra.mxu0 0.0
        %1724 = vmatprep.subr.mxu0 0.0
        %1725 = vmatpush1.msra.mxu0 0.0
        %1726 = vmatprep.subr.mxu0 0.0
        %1727 = vmatpush1.msra.mxu0 0.0
        %1728 = vmatprep.subr.mxu0 0.0
        %1729 = vmatpush1.msra.mxu0 0.0
        %1730 = vmatprep.subr.mxu0 0.0
        %1731 = vmatpush1.msra.mxu0 0.0
        %1732 = vmatprep.subr.mxu0 0.0
        %1733 = vmatpush1.msra.mxu0 0.0
        %1734 = vmatprep.subr.mxu0 0.0
        %1735 = vmatpush1.msra.mxu0 0.0
        %1736 = vmatprep.subr.mxu0 0.0
        %1737 = vmatpush1.msra.mxu0 0.0
        %1738 = vmatprep.subr.mxu0 0.0
        %1739 = vmatpush1.msra.mxu0 0.0
        %1740 = vmatprep.subr.mxu0 0.0
        %1741 = vmatpush1.msra.mxu0 0.0
        %1742 = vmatprep.subr.mxu0 0.0
        %1743 = vmatpush1.msra.mxu0 0.0
        %1744 = vmatprep.subr.mxu0 0.0
        %1745 = vmatpush1.msra.mxu0 0.0
        %1746 = vmatprep.subr.mxu0 0.0
        %1747 = vmatpush1.msra.mxu0 0.0
        %1748 = vmatprep.subr.mxu0 0.0
        %1749 = vmatpush1.msra.mxu0 0.0
        %1750 = vmatprep.subr.mxu0 0.0
        %1751 = vmatpush1.msra.mxu0 0.0
        %1752 = vmatprep.subr.mxu0 0.0
        %1753 = vmatpush1.msra.mxu0 0.0
        %1754 = vmatprep.subr.mxu0 0.0
        %1755 = vmatpush1.msra.mxu0 0.0
        %1756 = vmatprep.subr.mxu0 0.0
        %1757 = vmatpush1.msra.mxu0 0.0
        %1758 = vmatprep.subr.mxu0 0.0
        %1759 = vmatpush1.msra.mxu0 0.0
        %1760 = vmatprep.subr.mxu0 0.0
        %1761 = vmatpush1.msra.mxu0 0.0
        %1762 = vmatprep.subr.mxu0 0.0
        %1763 = vmatpush1.msra.mxu0 0.0
        %1764 = vmatprep.subr.mxu0 0.0
        %1765 = vmatpush1.msra.mxu0 0.0
        %1766 = vmatprep.subr.mxu0 0.0
        %1767 = vmatpush1.msra.mxu0 0.0
        %1768 = vmatprep.subr.mxu0 0.0
        %1769 = vmatpush1.msra.mxu0 0.0
        %1770 = vmatprep.mubr.f32.mxu0 0.0
        %1771 = vmatmul.mubr.f32.gmra.mrb[0].mxu0 %v1704
        %v1772 = vpop.f32.mrb[0].mxu0
        %v1773 = vadd.f32 0.0, %v1772
        %v1774 = vpop.f32.mrb[0].mxu0
        %1775 = vdwg.mxu0
        %v1777 = vsel %vm454, %v1629, 0
        %1779 = vmatprep.subr.mxu0 0.0
        %1780 = vmatpush1.msra.mxu0 %v713
        %1781 = vmatprep.subr.mxu0 0.0
        %1782 = vmatpush1.msra.mxu0 %v714
        %1783 = vmatprep.subr.mxu0 0.0
        %1784 = vmatpush1.msra.mxu0 0.0
        %1785 = vmatprep.subr.mxu0 0.0
        %1786 = vmatpush1.msra.mxu0 0.0
        %1787 = vmatprep.subr.mxu0 0.0
        %1788 = vmatpush1.msra.mxu0 0.0
        %1789 = vmatprep.subr.mxu0 0.0
        %1790 = vmatpush1.msra.mxu0 0.0
        %1791 = vmatprep.subr.mxu0 0.0
        %1792 = vmatpush1.msra.mxu0 0.0
        %1793 = vmatprep.subr.mxu0 0.0
        %1794 = vmatpush1.msra.mxu0 0.0
        %1795 = vmatprep.subr.mxu0 0.0
        %1796 = vmatpush1.msra.mxu0 0.0
        %1797 = vmatprep.subr.mxu0 0.0
        %1798 = vmatpush1.msra.mxu0 0.0
        %1799 = vmatprep.subr.mxu0 0.0
        %1800 = vmatpush1.msra.mxu0 0.0
        %1801 = vmatprep.subr.mxu0 0.0
        %1802 = vmatpush1.msra.mxu0 0.0
        %1803 = vmatprep.subr.mxu0 0.0
        %1804 = vmatpush1.msra.mxu0 0.0
        %1805 = vmatprep.subr.mxu0 0.0
        %1806 = vmatpush1.msra.mxu0 0.0
        %1807 = vmatprep.subr.mxu0 0.0
        %1808 = vmatpush1.msra.mxu0 0.0
        %1809 = vmatprep.subr.mxu0 0.0
        %1810 = vmatpush1.msra.mxu0 0.0
        %1811 = vmatprep.subr.mxu0 0.0
        %1812 = vmatpush1.msra.mxu0 0.0
        %1813 = vmatprep.subr.mxu0 0.0
        %1814 = vmatpush1.msra.mxu0 0.0
        %1815 = vmatprep.subr.mxu0 0.0
        %1816 = vmatpush1.msra.mxu0 0.0
        %1817 = vmatprep.subr.mxu0 0.0
        %1818 = vmatpush1.msra.mxu0 0.0
        %1819 = vmatprep.subr.mxu0 0.0
        %1820 = vmatpush1.msra.mxu0 0.0
        %1821 = vmatprep.subr.mxu0 0.0
        %1822 = vmatpush1.msra.mxu0 0.0
        %1823 = vmatprep.subr.mxu0 0.0
        %1824 = vmatpush1.msra.mxu0 0.0
        %1825 = vmatprep.subr.mxu0 0.0
        %1826 = vmatpush1.msra.mxu0 0.0
        %1827 = vmatprep.subr.mxu0 0.0
        %1828 = vmatpush1.msra.mxu0 0.0
        %1829 = vmatprep.subr.mxu0 0.0
        %1830 = vmatpush1.msra.mxu0 0.0
        %1831 = vmatprep.subr.mxu0 0.0
        %1832 = vmatpush1.msra.mxu0 0.0
        %1833 = vmatprep.subr.mxu0 0.0
        %1834 = vmatpush1.msra.mxu0 0.0
        %1835 = vmatprep.subr.mxu0 0.0
        %1836 = vmatpush1.msra.mxu0 0.0
        %1837 = vmatprep.subr.mxu0 0.0
        %1838 = vmatpush1.msra.mxu0 0.0
        %1839 = vmatprep.subr.mxu0 0.0
        %1840 = vmatpush1.msra.mxu0 0.0
        %1841 = vmatprep.subr.mxu0 0.0
        %1842 = vmatpush1.msra.mxu0 0.0
        %1843 = vmatprep.mubr.f32.mxu0 0.0
        %1844 = vmatmul.mubr.f32.gmra.mrb[0].mxu0 %v1777
        %v1845 = vpop.f32.mrb[0].mxu0
        %v1846 = vadd.f32 0.0, %v1845
        %v1847 = vpop.f32.mrb[0].mxu0
        %1848 = vdwg.mxu0
        %vm1849 = vcmp.gt.f32.partialorder %v1700, 0.0
        %vm1850 = vcmp.gt.f32.partialorder %v1773, 0.0
        %vm1851 = vcmp.gt.f32.partialorder %v1846, 0.0
        %v1852 = vsel %vm1849, %v1700, 1.0
        %v1853 = vsel %vm1850, %v1773, 1.0
        %v1854 = vsel %vm1851, %v1846, 1.0
        %v1855 = vrcp.pop %v1852
        %v1856 = vrcp.pop %v1853
        %v1857 = vrcp.pop %v1854
        %1861 = vrot.lane.b32.xlu0 %v1855, 124
        %v1862 = vpop.permute.xlu0 %1861
        %1863 = vrot.lane.b32.xlu0 %v1856, 124
        %v1864 = vpop.permute.xlu0 %1863
        %1865 = vrot.lane.b32.xlu0 %v1857, 124
        %v1866 = vpop.permute.xlu0 %1865
        %v1870 = vmul.f32 %v1700, %v1862
        %v1871 = vmul.f32 %v1773, %v1864
        %v1872 = vmul.f32 %v1846, %v1866
        %1876 = vrot.lane.b32.xlu0 %v1870, 4
        %v1877 = vpop.permute.xlu0 %1876
        %1878 = vrot.lane.b32.xlu0 %v1871, 4
        %v1879 = vpop.permute.xlu0 %1878
        %1880 = vrot.lane.b32.xlu0 %v1872, 4
        %v1881 = vpop.permute.xlu0 %1880
        %v1885 = vsel %vm1849, %v1877, %v1355
        %v1886 = vsel %vm1850, %v1879, %v1357
        %v1887 = vsel %vm1851, %v1881, %v1359
        %1891 = vrot.lane.b32.xlu0 %v1363, 124
        %v1892 = vpop.permute.xlu0 %1891
        %1893 = vrot.lane.b32.xlu0 %v1364, 124
        %v1894 = vpop.permute.xlu0 %1893
        %1895 = vrot.lane.b32.xlu0 %v1365, 124
        %v1896 = vpop.permute.xlu0 %1895
        %v1900 = vsel %vm708, %v1892, %v1885
        %v1901 = vsel %vm708, %v1894, %v1886
        %v1902 = vsel %vm708, %v1896, %v1887
        %v1903 = vld [vmem:[%s8] sm:$0xff]
        %v1904 = vld [vmem:[%s9] sm:$0x1]
        %v1906 = vlaneseq
        %v1907 = vshrl.u32 %v1906, 7
        %v1908 = vsub.s32 0, %v1907
        %v1909 = vrot.slane %v1904, %v1908
        %v1912 = vsel %vm804, %v1900, 0
        %v1915 = vsel %vm804, %v1901, 0
        %v1918 = vsel %vm804, %v1902, 0
        %1920 = vmatprep.subr.mxu0 0.0
        %1921 = vmatpush1.msra.mxu0 %v1903
        %1922 = vmatprep.subr.mxu0 0.0
        %1923 = vmatpush1.msra.mxu0 0.0
        %1924 = vmatprep.subr.mxu0 0.0
        %1925 = vmatpush1.msra.mxu0 0.0
        %1926 = vmatprep.subr.mxu0 0.0
        %1927 = vmatpush1.msra.mxu0 0.0
        %1928 = vmatprep.subr.mxu0 0.0
        %1929 = vmatpush1.msra.mxu0 0.0
        %1930 = vmatprep.subr.mxu0 0.0
        %1931 = vmatpush1.msra.mxu0 0.0
        %1932 = vmatprep.subr.mxu0 0.0
        %1933 = vmatpush1.msra.mxu0 0.0
        %1934 = vmatprep.subr.mxu0 0.0
        %1935 = vmatpush1.msra.mxu0 0.0
        %1936 = vmatprep.subr.mxu0 0.0
        %1937 = vmatpush1.msra.mxu0 0.0
        %1938 = vmatprep.subr.mxu0 0.0
        %1939 = vmatpush1.msra.mxu0 0.0
        %1940 = vmatprep.subr.mxu0 0.0
        %1941 = vmatpush1.msra.mxu0 0.0
        %1942 = vmatprep.subr.mxu0 0.0
        %1943 = vmatpush1.msra.mxu0 0.0
        %1944 = vmatprep.subr.mxu0 0.0
        %1945 = vmatpush1.msra.mxu0 0.0
        %1946 = vmatprep.subr.mxu0 0.0
        %1947 = vmatpush1.msra.mxu0 0.0
        %1948 = vmatprep.subr.mxu0 0.0
        %1949 = vmatpush1.msra.mxu0 0.0
        %1950 = vmatprep.subr.mxu0 0.0
        %1951 = vmatpush1.msra.mxu0 0.0
        %1952 = vmatprep.subr.mxu0 0.0
        %1953 = vmatpush1.msra.mxu0 0.0
        %1954 = vmatprep.subr.mxu0 0.0
        %1955 = vmatpush1.msra.mxu0 0.0
        %1956 = vmatprep.subr.mxu0 0.0
        %1957 = vmatpush1.msra.mxu0 0.0
        %1958 = vmatprep.subr.mxu0 0.0
        %1959 = vmatpush1.msra.mxu0 0.0
        %1960 = vmatprep.subr.mxu0 0.0
        %1961 = vmatpush1.msra.mxu0 0.0
        %1962 = vmatprep.subr.mxu0 0.0
        %1963 = vmatpush1.msra.mxu0 0.0
        %1964 = vmatprep.subr.mxu0 0.0
        %1965 = vmatpush1.msra.mxu0 0.0
        %1966 = vmatprep.subr.mxu0 0.0
        %1967 = vmatpush1.msra.mxu0 0.0
        %1968 = vmatprep.subr.mxu0 0.0
        %1969 = vmatpush1.msra.mxu0 0.0
        %1970 = vmatprep.subr.mxu0 0.0
        %1971 = vmatpush1.msra.mxu0 0.0
        %1972 = vmatprep.subr.mxu0 0.0
        %1973 = vmatpush1.msra.mxu0 0.0
        %1974 = vmatprep.subr.mxu0 0.0
        %1975 = vmatpush1.msra.mxu0 0.0
        %1976 = vmatprep.subr.mxu0 0.0
        %1977 = vmatpush1.msra.mxu0 0.0
        %1978 = vmatprep.subr.mxu0 0.0
        %1979 = vmatpush1.msra.mxu0 0.0
        %1980 = vmatprep.subr.mxu0 0.0
        %1981 = vmatpush1.msra.mxu0 0.0
        %1982 = vmatprep.subr.mxu0 0.0
        %1983 = vmatpush1.msra.mxu0 0.0
        %1984 = vmatprep.mubr.f32.mxu0 0.0
        %1985 = vmatmul.mubr.f32.gmra.mrb[0].mxu0 %v1912
        %v1986 = vpop.f32.mrb[0].mxu0
        %v1987 = vadd.f32 %v1909, %v1986
        %v1988 = vpop.f32.mrb[0].mxu0
        %1989 = vmatprep.mubr.f32.mxu0 0.0
        %1990 = vmatmul.mubr.f32.gmra.mrb[0].mxu0 %v1915
        %v1991 = vpop.f32.mrb[0].mxu0
        %v1992 = vadd.f32 %v1909, %v1991
        %v1993 = vpop.f32.mrb[0].mxu0
        %1994 = vmatprep.mubr.f32.mxu0 0.0
        %1995 = vmatmul.mubr.f32.gmra.mrb[0].mxu0 %v1918
        %v1996 = vpop.f32.mrb[0].mxu0
        %v1997 = vadd.f32 %v1909, %v1996
        %v1998 = vpop.f32.mrb[0].mxu0
        %1999 = vdwg.mxu0
        %2000 = vst [vmem:[%s407] sm:$0xff] %v1987
        %2001 = vst [vmem:[%s407 + $0x8] sm:$0xff] %v1992
        %2002 = vst [vmem:[%s407 + $0x10] sm:$0xff] %v1997
        %s2003 = sand.u32 %s262, 1
        %s2004 = scalar_lea.sflag [#allocation3], %s2003
        %s2005 = sand.u32 %s262, 1
        %s2006 = smul.addr %s2005, 24
        %s2007 = scalar_lea.vmem [#allocation2], %s2006
        // Predicated region
        $region61: #{tpu_custom_call.1} parent=59 // pred_check
          %p2008 = pneg %p272
        $region62: #{tpu_custom_call.1} parent=59 // pred_check_branch
          %2010 = sbr.rel (%p2008) target = $region64
        $region63: #{tpu_custom_call.1} parent=59 // pred_region
          %s2011 = smul.u32 3, %s24
          %s2013 = ssub.s32 384, 384
          %2014 = vsyncadd %s2004, %s2013
          %s2015 = smul.addr %s2011, 128
          %s2016 = scalar_lea.hbm %s10, %s2015
          %s2017 = sshll.u32 %s2007, 4
          %s2018 = int_to_ptr.vmem [resolvable:$true] %s2017
          %2023 = dma.vmem_to_hbm [thread:$0]  %s2018, 384, %s2016, %s2004, 128, 128, 8
        $region64: #{tpu_custom_call.1} parent=59 // pred_fallthru
          _
      $region60: #{tpu_custom_call.1} parent=5 // pred_fallthru
        _
      %p2024 = scmp.le.s32.totalorder 2, %s19
      // Predicated region
      $region65: #{tpu_custom_call.1} parent=5 // pred_check
        %p2025 = pneg %p2024
      $region66: #{tpu_custom_call.1} parent=5 // pred_check_branch
        %2027 = sbr.rel (%p2025) target = $region68
      $region67: #{tpu_custom_call.1} parent=5 // pred_region
        %s2028 = ssub.s32 %s19, 2
        // Predicated region
        $region69: #{tpu_custom_call.1} parent=67 // pred_check
          %p2029 = pneg %p278
        $region70: #{tpu_custom_call.1} parent=67 // pred_check_branch
          %2031 = sbr.rel (%p2029) target = $region72
        $region71: #{tpu_custom_call.1} parent=67 // pred_region
          %s2032 = sand.u32 %s263, 1
          %s2033 = scalar_lea.sflag [#allocation3], %s2032
          %s2034 = sand.u32 %s263, 1
          %s2035 = smul.addr %s2034, 24
          %s2036 = scalar_lea.vmem [#allocation2], %s2035
          %2037 = dma.done %s2033, 384
        $region72: #{tpu_custom_call.1} parent=67 // pred_fallthru
          _
      $region68: #{tpu_custom_call.1} parent=5 // pred_fallthru
        _
    $region6: #{tpu_custom_call.1} parent=1 // loop_footer
      %s23 = sadd.s32 1, %s19
    $region7: #{tpu_custom_call.1} parent=1 // loop_footer_branch
      %18 = sbr.rel target = $region3
    $region8: #{tpu_custom_call.1} parent=1 // loop_exit
      _
    %2038 = vsyncpa [#allocation3], 1
    %s2039 = scalar_lea.sflag [#allocation3], 1
    %2040 = vsyncpa %s2039, 1

// kernel: tpu_custom_call.1
$region0: #{tpu_custom_call.1}
  #allocation0 [shape = 'u32[]', space=smem, size = 0x4, offset = 0x4, fixed_abs, tag = 'smem constant byte address 0x4 - core index']
  #allocation1 [shape = 'u32[144,128]{1,0:T(1,128)}', space=vmem, size = 0x12000, scoped, tag = 'internal scratch']
  %s0 = inlined_call_operand.vmem [shape: f32[6,8,16], index: 0, kind: input, shape index: {}]
  %s1 = inlined_call_operand.vmem [shape: f32[6,16,16], index: 1, kind: input, shape index: {}]
  %s2 = inlined_call_operand.vmem [shape: f32[6,16,4], index: 2, kind: input, shape index: {}]
  %s3 = inlined_call_operand.vmem [shape: f32[6,16,4], index: 3, kind: input, shape index: {}]
  %s4 = inlined_call_operand.vmem [shape: f32[16,16], index: 4, kind: input, shape index: {}]
  %s5 = inlined_call_operand.vmem [shape: f32[1,16], index: 5, kind: input, shape index: {}]
  %s6 = inlined_call_operand.vmem [shape: f32[16,16], index: 6, kind: input, shape index: {}]
  %s7 = inlined_call_operand.vmem [shape: f32[1,16], index: 7, kind: input, shape index: {}]
  %s8 = inlined_call_operand.vmem [shape: f32[8,128], index: 8, kind: input, shape index: {}]
  %s9 = inlined_call_operand.vmem [shape: f32[1,128], index: 9, kind: input, shape index: {}]
  %s10 = inlined_call_operand.hbm [shape: f32[48,128], index: 10, kind: output, shape index: {}]
  %s11 = sld [smem:[#allocation0]]
  $region73: #{tpu_custom_call.1} parent=0
    _
  %s13 = ssub.s32 1, %s11
  %s14 = scalar_select 0, %s13, %s11
  $region1: #{tpu_custom_call.1} parent=0
    #allocation2 [shape = 'u8[24576]{0}', space=vmem, size = 0x6000, scoped, tag = 'output window, operand 0']
    #allocation3 [shape = 's32[2]{0}', space=sflag, size = 0x8, scoped, tag = 'scoped memory for tpu_custom_call.1']
    %15 = vsyncpa [#allocation3], 0
    %s16 = scalar_lea.sflag [#allocation3], 1
    %17 = vsyncpa %s16, 0
    loop: start=0, step=1, limit=4
    $region2: #{tpu_custom_call.1} parent=1 // loop_pre_header
      _
    $region3: #{tpu_custom_call.1} parent=1 // loop_header
      %s19 = sphi 0, %s23
      %p20 = scmp.ge.s32.totalorder %s19, 4
      %s29 = sphi 0, %s31
      %s32 = sphi 0, %s29
      %s33 = sphi 0, %s32
      %s49 = sphi 0, %s33
      %s55 = sphi 0, %s57
      %s58 = sphi 0, %s55
      %s59 = sphi 0, %s58
      %s75 = sphi 0, %s59
      %s81 = sphi 0, %s83
      %s84 = sphi 0, %s81
      %s85 = sphi 0, %s84
      %s101 = sphi 0, %s85
      %s107 = sphi 0, %s109
      %s110 = sphi 0, %s107
      %s111 = sphi 0, %s110
      %s127 = sphi 0, %s111
      %s131 = sphi 0, %s131
      %s133 = sphi 0, %s131
      %s134 = sphi 0, %s133
      %s148 = sphi 0, %s134
      %s152 = sphi 0, %s152
      %s154 = sphi 0, %s152
      %s155 = sphi 0, %s154
      %s169 = sphi 0, %s155
      %s173 = sphi 0, %s173
      %s175 = sphi 0, %s173
      %s176 = sphi 0, %s175
      %s190 = sphi 0, %s176
      %s194 = sphi 0, %s194
      %s196 = sphi 0, %s194
      %s197 = sphi 0, %s196
      %s211 = sphi 0, %s197
      %s215 = sphi 0, %s215
      %s217 = sphi 0, %s215
      %s218 = sphi 0, %s217
      %s232 = sphi 0, %s218
      %s236 = sphi 0, %s236
      %s238 = sphi 0, %s236
      %s239 = sphi 0, %s238
      %s253 = sphi 0, %s239
      %s259 = sphi 0, %s261
      %s262 = sphi 0, %s259
      %s263 = sphi 0, %s262
      %s279 = sphi 0, %s263
    $region4: #{tpu_custom_call.1} parent=1 // loop_header_branch
      %22 = sbr.rel (%p20) target = $region8
    $region5: #{tpu_custom_call.1} parent=1 // loop_body
      %s24 = ssub.s32 %s19, 1
      %s25 = ssub.s32 %s19, 2
      %s26 = sadd.s32 %s19, 1
      %s27 = ssub.s32 %s19, %s26
      %p28 = scmp.eq.s32.totalorder %s27, 0
      %s30 = sadd.s32 %s29, 1
      %s31 = scalar_select %p28, %s29, %s30
      %p34 = pneg %p28
      %p35 = scmp.eq.s32.totalorder %s19, 1
      %p36 = por %p34, %p35
      %p37 = scmp.ne.s32.totalorder %s29, %s32
      %p38 = scmp.eq.s32.totalorder %s19, 0
      %p39 = por %p37, %p38
      %p40 = scmp.ne.s32.totalorder %s29, %s32
      %p41 = scmp.eq.s32.totalorder %s24, 1
      %p42 = por %p40, %p41
      %p43 = scmp.ne.s32.totalorder %s32, %s33
      %p44 = scmp.eq.s32.totalorder %s24, 0
      %p45 = por %p43, %p44
      %p46 = scmp.ne.s32.totalorder %s32, %s33
      %p47 = scmp.eq.s32.totalorder %s25, 1
      %p48 = por %p46, %p47
      %p50 = scmp.ne.s32.totalorder %s33, %s49
      %p51 = scmp.eq.s32.totalorder %s25, 0
      %p52 = por %p50, %p51
      %s53 = ssub.s32 %s19, %s26
      %p54 = scmp.eq.s32.totalorder %s53, 0
      %s56 = sadd.s32 %s55, 1
      %s57 = scalar_select %p54, %s55, %s56
      %p60 = pneg %p54
      %p61 = scmp.eq.s32.totalorder %s19, 1
      %p62 = por %p60, %p61
      %p63 = scmp.ne.s32.totalorder %s55, %s58
      %p64 = scmp.eq.s32.totalorder %s19, 0
      %p65 = por %p63, %p64
      %p66 = scmp.ne.s32.totalorder %s55, %s58
      %p67 = scmp.eq.s32.totalorder %s24, 1
      %p68 = por %p66, %p67
      %p69 = scmp.ne.s32.totalorder %s58, %s59
      %p70 = scmp.eq.s32.totalorder %s24, 0
      %p71 = por %p69, %p70
      %p72 = scmp.ne.s32.totalorder %s58, %s59
      %p73 = scmp.eq.s32.totalorder %s25, 1
      %p74 = por %p72, %p73
      %p76 = scmp.ne.s32.totalorder %s59, %s75
      %p77 = scmp.eq.s32.totalorder %s25, 0
      %p78 = por %p76, %p77
      %s79 = ssub.s32 %s19, %s26
      %p80 = scmp.eq.s32.totalorder %s79, 0
      %s82 = sadd.s32 %s81, 1
      %s83 = scalar_select %p80, %s81, %s82
      %p86 = pneg %p80
      %p87 = scmp.eq.s32.totalorder %s19, 1
      %p88 = por %p86, %p87
      %p89 = scmp.ne.s32.totalorder %s81, %s84
      %p90 = scmp.eq.s32.totalorder %s19, 0
      %p91 = por %p89, %p90
      %p92 = scmp.ne.s32.totalorder %s81, %s84
      %p93 = scmp.eq.s32.totalorder %s24, 1
      %p94 = por %p92, %p93
      %p95 = scmp.ne.s32.totalorder %s84, %s85
      %p96 = scmp.eq.s32.totalorder %s24, 0
      %p97 = por %p95, %p96
      %p98 = scmp.ne.s32.totalorder %s84, %s85
      %p99 = scmp.eq.s32.totalorder %s25, 1
      %p100 = por %p98, %p99
      %p102 = scmp.ne.s32.totalorder %s85, %s101
      %p103 = scmp.eq.s32.totalorder %s25, 0
      %p104 = por %p102, %p103
      %s105 = ssub.s32 %s19, %s26
      %p106 = scmp.eq.s32.totalorder %s105, 0
      %s108 = sadd.s32 %s107, 1
      %s109 = scalar_select %p106, %s107, %s108
      %p112 = pneg %p106
      %p113 = scmp.eq.s32.totalorder %s19, 1
      %p114 = por %p112, %p113
      %p115 = scmp.ne.s32.totalorder %s107, %s110
      %p116 = scmp.eq.s32.totalorder %s19, 0
      %p117 = por %p115, %p116
      %p118 = scmp.ne.s32.totalorder %s107, %s110
      %p119 = scmp.eq.s32.totalorder %s24, 1
      %p120 = por %p118, %p119
      %p121 = scmp.ne.s32.totalorder %s110, %s111
      %p122 = scmp.eq.s32.totalorder %s24, 0
      %p123 = por %p121, %p122
      %p124 = scmp.ne.s32.totalorder %s110, %s111
      %p125 = scmp.eq.s32.totalorder %s25, 1
      %p126 = por %p124, %p125
      %p128 = scmp.ne.s32.totalorder %s111, %s127
      %p129 = scmp.eq.s32.totalorder %s25, 0
      %p130 = por %p128, %p129
      %s132 = sadd.s32 %s131, 1
      %p135 = scmp.eq.s32.totalorder %s19, 1
      %p136 = scmp.ne.s32.totalorder %s131, %s133
      %p137 = scmp.eq.s32.totalorder %s19, 0
      %p138 = por %p136, %p137
      %p139 = scmp.ne.s32.totalorder %s131, %s133
      %p140 = scmp.eq.s32.totalorder %s24, 1
      %p141 = por %p139, %p140
      %p142 = scmp.ne.s32.totalorder %s133, %s134
      %p143 = scmp.eq.s32.totalorder %s24, 0
      %p144 = por %p142, %p143
      %p145 = scmp.ne.s32.totalorder %s133, %s134
      %p146 = scmp.eq.s32.totalorder %s25, 1
      %p147 = por %p145, %p146
      %p149 = scmp.ne.s32.totalorder %s134, %s148
      %p150 = scmp.eq.s32.totalorder %s25, 0
      %p151 = por %p149, %p150
      %s153 = sadd.s32 %s152, 1
      %p156 = scmp.eq.s32.totalorder %s19, 1
      %p157 = scmp.ne.s32.totalorder %s152, %s154
      %p158 = scmp.eq.s32.totalorder %s19, 0
      %p159 = por %p157, %p158
      %p160 = scmp.ne.s32.totalorder %s152, %s154
      %p161 = scmp.eq.s32.totalorder %s24, 1
      %p162 = por %p160, %p161
      %p163 = scmp.ne.s32.totalorder %s154, %s155
      %p164 = scmp.eq.s32.totalorder %s24, 0
      %p165 = por %p163, %p164
      %p166 = scmp.ne.s32.totalorder %s154, %s155
      %p167 = scmp.eq.s32.totalorder %s25, 1
      %p168 = por %p166, %p167
      %p170 = scmp.ne.s32.totalorder %s155, %s169
      %p171 = scmp.eq.s32.totalorder %s25, 0
      %p172 = por %p170, %p171
      %s174 = sadd.s32 %s173, 1
      %p177 = scmp.eq.s32.totalorder %s19, 1
      %p178 = scmp.ne.s32.totalorder %s173, %s175
      %p179 = scmp.eq.s32.totalorder %s19, 0
      %p180 = por %p178, %p179
      %p181 = scmp.ne.s32.totalorder %s173, %s175
      %p182 = scmp.eq.s32.totalorder %s24, 1
      %p183 = por %p181, %p182
      %p184 = scmp.ne.s32.totalorder %s175, %s176
      %p185 = scmp.eq.s32.totalorder %s24, 0
      %p186 = por %p184, %p185
      %p187 = scmp.ne.s32.totalorder %s175, %s176
      %p188 = scmp.eq.s32.totalorder %s25, 1
      %p189 = por %p187, %p188
      %p191 = scmp.ne.s32.totalorder %s176, %s190
      %p192 = scmp.eq.s32.totalorder %s25, 0
      %p193 = por %p191, %p192
      %s195 = sadd.s32 %s194, 1
      %p198 = scmp.eq.s32.totalorder %s19, 1
      %p199 = scmp.ne.s32.totalorder %s194, %s196
      %p200 = scmp.eq.s32.totalorder %s19, 0
      %p201 = por %p199, %p200
      %p202 = scmp.ne.s32.totalorder %s194, %s196
      %p203 = scmp.eq.s32.totalorder %s24, 1
      %p204 = por %p202, %p203
      %p205 = scmp.ne.s32.totalorder %s196, %s197
      %p206 = scmp.eq.s32.totalorder %s24, 0
      %p207 = por %p205, %p206
      %p208 = scmp.ne.s32.totalorder %s196, %s197
      %p209 = scmp.eq.s32.totalorder %s25, 1
      %p210 = por %p208, %p209
      %p212 = scmp.ne.s32.totalorder %s197, %s211
      %p213 = scmp.eq.s32.totalorder %s25, 0
      %p214 = por %p212, %p213
      %s216 = sadd.s32 %s215, 1
      %p219 = scmp.eq.s32.totalorder %s19, 1
      %p220 = scmp.ne.s32.totalorder %s215, %s217
      %p221 = scmp.eq.s32.totalorder %s19, 0
      %p222 = por %p220, %p221
      %p223 = scmp.ne.s32.totalorder %s215, %s217
      %p224 = scmp.eq.s32.totalorder %s24, 1
      %p225 = por %p223, %p224
      %p226 = scmp.ne.s32.totalorder %s217, %s218
      %p227 = scmp.eq.s32.totalorder %s24, 0
      %p228 = por %p226, %p227
      %p229 = scmp.ne.s32.totalorder %s217, %s218
      %p230 = scmp.eq.s32.totalorder %s25, 1
      %p231 = por %p229, %p230
      %p233 = scmp.ne.s32.totalorder %s218, %s232
      %p234 = scmp.eq.s32.totalorder %s25, 0
      %p235 = por %p233, %p234
      %s237 = sadd.s32 %s236, 1
      %p240 = scmp.eq.s32.totalorder %s19, 1
      %p241 = scmp.ne.s32.totalorder %s236, %s238
      %p242 = scmp.eq.s32.totalorder %s19, 0
      %p243 = por %p241, %p242
      %p244 = scmp.ne.s32.totalorder %s236, %s238
      %p245 = scmp.eq.s32.totalorder %s24, 1
      %p246 = por %p244, %p245
      %p247 = scmp.ne.s32.totalorder %s238, %s239
      %p248 = scmp.eq.s32.totalorder %s24, 0
      %p249 = por %p247, %p248
      %p250 = scmp.ne.s32.totalorder %s238, %s239
      %p251 = scmp.eq.s32.totalorder %s25, 1
      %p252 = por %p250, %p251
      %p254 = scmp.ne.s32.totalorder %s239, %s253
      %p255 = scmp.eq.s32.totalorder %s25, 0
      %p256 = por %p254, %p255
      %s257 = ssub.s32 %s19, %s26
      %p258 = scmp.eq.s32.totalorder %s257, 0
      %s260 = sadd.s32 %s259, 1
      %s261 = scalar_select %p258, %s259, %s260
      %p264 = pneg %p258
      %p265 = scmp.eq.s32.totalorder %s19, 1
      %p266 = por %p264, %p265
      %p267 = scmp.ne.s32.totalorder %s259, %s262
      %p268 = scmp.eq.s32.totalorder %s19, 0
      %p269 = por %p267, %p268
      %p270 = scmp.ne.s32.totalorder %s259, %s262
      %p271 = scmp.eq.s32.totalorder %s24, 1
      %p272 = por %p270, %p271
      %p273 = scmp.ne.s32.totalorder %s262, %s263
      %p274 = scmp.eq.s32.totalorder %s24, 0
      %p275 = por %p273, %p274
      %p276 = scmp.ne.s32.totalorder %s262, %s263
      %p277 = scmp.eq.s32.totalorder %s25, 1
      %p278 = por %p276, %p277
      %p280 = scmp.ne.s32.totalorder %s263, %s279
      %p281 = scmp.eq.s32.totalorder %s25, 0
      %p282 = por %p280, %p281
      %p283 = scmp.le.s32.totalorder 1, %s19
      %p284 = scmp.lt.s32.totalorder %s19, 3
      %p285 = pnand %p283, %p284
      %p286 = pneg %p285
      // Predicated region
      $region9: #{tpu_custom_call.1} parent=5 // pred_check
        _
      $region10: #{tpu_custom_call.1} parent=5 // pred_check_branch
        %288 = sbr.rel (%p285) target = $region12
      $region11: #{tpu_custom_call.1} parent=5 // pred_region
        %s289 = ssub.s32 %s19, 1
        // Predicated region
        $region13: #{tpu_custom_call.1} parent=11 // pred_check
          %p290 = pneg %p144
        $region14: #{tpu_custom_call.1} parent=11 // pred_check_branch
          %292 = sbr.rel (%p290) target = $region16
        $region15: #{tpu_custom_call.1} parent=11 // pred_region
          _
        $region16: #{tpu_custom_call.1} parent=11 // pred_fallthru
          _
        // Predicated region
        $region17: #{tpu_custom_call.1} parent=11 // pred_check
          %p293 = pneg %p165
        $region18: #{tpu_custom_call.1} parent=11 // pred_check_branch
          %295 = sbr.rel (%p293) target = $region20
        $region19: #{tpu_custom_call.1} parent=11 // pred_region
          _
        $region20: #{tpu_custom_call.1} parent=11 // pred_fallthru
          _
        // Predicated region
        $region21: #{tpu_custom_call.1} parent=11 // pred_check
          %p296 = pneg %p186
        $region22: #{tpu_custom_call.1} parent=11 // pred_check_branch
          %298 = sbr.rel (%p296) target = $region24
        $region23: #{tpu_custom_call.1} parent=11 // pred_region
          _
        $region24: #{tpu_custom_call.1} parent=11 // pred_fallthru
          _
        // Predicated region
        $region25: #{tpu_custom_call.1} parent=11 // pred_check
          %p299 = pneg %p207
        $region26: #{tpu_custom_call.1} parent=11 // pred_check_branch
          %301 = sbr.rel (%p299) target = $region28
        $region27: #{tpu_custom_call.1} parent=11 // pred_region
          _
        $region28: #{tpu_custom_call.1} parent=11 // pred_fallthru
          _
        // Predicated region
        $region29: #{tpu_custom_call.1} parent=11 // pred_check
          %p302 = pneg %p228
        $region30: #{tpu_custom_call.1} parent=11 // pred_check_branch
          %304 = sbr.rel (%p302) target = $region32
        $region31: #{tpu_custom_call.1} parent=11 // pred_region
          _
        $region32: #{tpu_custom_call.1} parent=11 // pred_fallthru
          _
        // Predicated region
        $region33: #{tpu_custom_call.1} parent=11 // pred_check
          %p305 = pneg %p249
        $region34: #{tpu_custom_call.1} parent=11 // pred_check_branch
          %307 = sbr.rel (%p305) target = $region36
        $region35: #{tpu_custom_call.1} parent=11 // pred_region
          _
        $region36: #{tpu_custom_call.1} parent=11 // pred_fallthru
          _
      $region12: #{tpu_custom_call.1} parent=5 // pred_fallthru
        _
      %p308 = scmp.lt.s32.totalorder %s19, 2
      // Predicated region
      $region37: #{tpu_custom_call.1} parent=5 // pred_check
        %p309 = pneg %p308
      $region38: #{tpu_custom_call.1} parent=5 // pred_check_branch
        %311 = sbr.rel (%p309) target = $region40
      $region39: #{tpu_custom_call.1} parent=5 // pred_region
        // Predicated region
        $region41: #{tpu_custom_call.1} parent=39 // pred_check
          %p312 = pneg %p39
        $region42: #{tpu_custom_call.1} parent=39 // pred_check_branch
          %314 = sbr.rel (%p312) target = $region44
        $region43: #{tpu_custom_call.1} parent=39 // pred_region
          %s315 = smul.u32 3, %s19
          %p316 = scmp.lt.s32.totalorder %s315, 5
          %s317 = scalar_select %p316, %s315, 5
          %s318 = smul.addr %s317, 8
          %s319 = scalar_lea.vmem %s0, %s318
          %s320 = smul.u32 3, %s19
        $region44: #{tpu_custom_call.1} parent=39 // pred_fallthru
          _
        // Predicated region
        $region45: #{tpu_custom_call.1} parent=39 // pred_check
          %p321 = pneg %p65
        $region46: #{tpu_custom_call.1} parent=39 // pred_check_branch
          %323 = sbr.rel (%p321) target = $region48
        $region47: #{tpu_custom_call.1} parent=39 // pred_region
          %s324 = smul.u32 3, %s19
          %p325 = scmp.lt.s32.totalorder %s324, 5
          %s326 = scalar_select %p325, %s324, 5
          %s327 = smul.addr %s326, 2
          %s328 = smul.addr %s327, 8
          %s329 = scalar_lea.vmem %s1, %s328
          %s330 = smul.u32 3, %s19
        $region48: #{tpu_custom_call.1} parent=39 // pred_fallthru
          _
        // Predicated region
        $region49: #{tpu_custom_call.1} parent=39 // pred_check
          %p331 = pneg %p91
        $region50: #{tpu_custom_call.1} parent=39 // pred_check_branch
          %333 = sbr.rel (%p331) target = $region52
        $region51: #{tpu_custom_call.1} parent=39 // pred_region
          %s334 = smul.u32 3, %s19
          %p335 = scmp.lt.s32.totalorder %s334, 5
          %s336 = scalar_select %p335, %s334, 5
          %s337 = smul.addr %s336, 2
          %s338 = smul.addr %s337, 8
          %s339 = scalar_lea.vmem %s2, %s338
          %s340 = smul.u32 3, %s19
        $region52: #{tpu_custom_call.1} parent=39 // pred_fallthru
          _
        // Predicated region
        $region53: #{tpu_custom_call.1} parent=39 // pred_check
          %p341 = pneg %p117
        $region54: #{tpu_custom_call.1} parent=39 // pred_check_branch
          %343 = sbr.rel (%p341) target = $region56
        $region55: #{tpu_custom_call.1} parent=39 // pred_region
          %s344 = smul.u32 3, %s19
          %p345 = scmp.lt.s32.totalorder %s344, 5
          %s346 = scalar_select %p345, %s344, 5
          %s347 = smul.addr %s346, 2
          %s348 = smul.addr %s347, 8
          %s349 = scalar_lea.vmem %s3, %s348
          %s350 = smul.u32 3, %s19
        $region56: #{tpu_custom_call.1} parent=39 // pred_fallthru
          _
      $region40: #{tpu_custom_call.1} parent=5 // pred_fallthru
        _
      %p351 = scmp.le.s32.totalorder 1, %s19
      %p352 = scmp.lt.s32.totalorder %s19, 3
      %p353 = pnand %p351, %p352
      %p354 = pneg %p353
      // Predicated region
      $region57: #{tpu_custom_call.1} parent=5 // pred_check
        _
      $region58: #{tpu_custom_call.1} parent=5 // pred_check_branch
        %356 = sbr.rel (%p353) target = $region60
      $region59: #{tpu_custom_call.1} parent=5 // pred_region
        %s357 = ssub.s32 %s19, 1
        %s358 = smul.u32 3, %s24
        %p359 = scmp.lt.s32.totalorder %s358, 5
        %s360 = scalar_select %p359, %s358, 5
        %s361 = smul.addr %s360, 8
        %s362 = scalar_lea.vmem %s0, %s361
        %p363 = pneg %p45
        %p364 = pneg %p42
        %s365 = smul.u32 3, %s24
        %p366 = scmp.lt.s32.totalorder %s365, 5
        %s367 = scalar_select %p366, %s365, 5
        %s368 = smul.addr %s367, 2
        %s369 = smul.addr %s368, 8
        %s370 = scalar_lea.vmem %s1, %s369
        %p371 = pneg %p71
        %p372 = pneg %p68
        %s373 = smul.u32 3, %s24
        %p374 = scmp.lt.s32.totalorder %s373, 5
        %s375 = scalar_select %p374, %s373, 5
        %s376 = smul.addr %s375, 2
        %s377 = smul.addr %s376, 8
        %s378 = scalar_lea.vmem %s2, %s377
        %p379 = pneg %p97
        %p380 = pneg %p94
        %s381 = smul.u32 3, %s24
        %p382 = scmp.lt.s32.totalorder %s381, 5
        %s383 = scalar_select %p382, %s381, 5
        %s384 = smul.addr %s383, 2
        %s385 = smul.addr %s384, 8
        %s386 = scalar_lea.vmem %s3, %s385
        %p387 = pneg %p123
        %p388 = pneg %p120
        %p389 = pneg %p144
        %p390 = pneg %p141
        %p391 = pneg %p165
        %p392 = pneg %p162
        %p393 = pneg %p186
        %p394 = pneg %p183
        %p395 = pneg %p207
        %p396 = pneg %p204
        %p397 = pneg %p228
        %p398 = pneg %p225
        %p399 = pneg %p249
        %p400 = pneg %p246
        %p401 = pneg %p275
        %p402 = pneg %p272
        %s403 = sand.u32 %s262, 1
        %s404 = scalar_lea.sflag [#allocation3], %s403
        %s405 = sand.u32 %s262, 1
        %s406 = smul.addr %s405, 24
        %s407 = scalar_lea.vmem [#allocation2], %s406
        %s408 = smul.u32 3, %s24
        %p409 = scmp.lt.s32.totalorder %s408, 5
        %s410 = scalar_select %p409, %s408, 5
        %s411 = smul.addr %s410, 8
        %s412 = scalar_lea.vmem %s0, %s411
        %s413 = smul.u32 3, %s24
        %s414 = smul.u32 3, %s24
        %p415 = scmp.lt.s32.totalorder %s414, 5
        %s416 = scalar_select %p415, %s414, 5
        %s417 = smul.addr %s416, 2
        %s418 = smul.addr %s417, 8
        %s419 = scalar_lea.vmem %s1, %s418
        %s420 = smul.u32 3, %s24
        %s421 = smul.u32 3, %s24
        %p422 = scmp.lt.s32.totalorder %s421, 5
        %s423 = scalar_select %p422, %s421, 5
        %s424 = smul.addr %s423, 2
        %s425 = smul.addr %s424, 8
        %s426 = scalar_lea.vmem %s2, %s425
        %s427 = smul.u32 3, %s24
        %s428 = smul.u32 3, %s24
        %p429 = scmp.lt.s32.totalorder %s428, 5
        %s430 = scalar_select %p429, %s428, 5
        %s431 = smul.addr %s430, 2
        %s432 = smul.addr %s431, 8
        %s433 = scalar_lea.vmem %s3, %s432
        %s434 = smul.u32 3, %s24
        %s435 = smul.u32 3, %s24
        %v436 = vld [vmem:[%s412] sm:$0xff]
        %v437 = vld [vmem:[%s412 + $0x8] sm:$0xff]
        %v438 = vld [vmem:[%s412 + $0x10] sm:$0xff]
        %v439 = vld [vmem:[%s419] sm:$0xff]
        %v440 = vld [vmem:[%s419 + $0x8] sm:$0xff]
        %v441 = vld [vmem:[%s419 + $0x10] sm:$0xff]
        %v442 = vld [vmem:[%s419 + $0x18] sm:$0xff]
        %v443 = vld [vmem:[%s419 + $0x20] sm:$0xff]
        %v444 = vld [vmem:[%s419 + $0x28] sm:$0xff]
        %v445 = vld [vmem:[%s4] sm:$0xff]
        %v446 = vld [vmem:[%s4 + $0x8] sm:$0xff]
        %v447 = vld [vmem:[%s5] sm:$0x1]
        %v449 = vlaneseq
        %v450 = vshrl.u32 %v449, 7
        %v451 = vsub.s32 0, %v450
        %v452 = vrot.slane %v447, %v451
        %vm454 = vcmask 130048
        %v456 = vsel %vm454, %v436, 0
        %v459 = vsel %vm454, %v437, 0
        %v462 = vsel %vm454, %v438, 0
        %464 = vmatprep.subr.mxu0 0.0
        %465 = vmatpush1.msra.mxu0 %v445
        %466 = vmatprep.subr.mxu0 0.0
        %467 = vmatpush1.msra.mxu0 %v446
        %468 = vmatprep.subr.mxu0 0.0
        %469 = vmatpush1.msra.mxu0 0.0
        %470 = vmatprep.subr.mxu0 0.0
        %471 = vmatpush1.msra.mxu0 0.0
        %472 = vmatprep.subr.mxu0 0.0
        %473 = vmatpush1.msra.mxu0 0.0
        %474 = vmatprep.subr.mxu0 0.0
        %475 = vmatpush1.msra.mxu0 0.0
        %476 = vmatprep.subr.mxu0 0.0
        %477 = vmatpush1.msra.mxu0 0.0
        %478 = vmatprep.subr.mxu0 0.0
        %479 = vmatpush1.msra.mxu0 0.0
        %480 = vmatprep.subr.mxu0 0.0
        %481 = vmatpush1.msra.mxu0 0.0
        %482 = vmatprep.subr.mxu0 0.0
        %483 = vmatpush1.msra.mxu0 0.0
        %484 = vmatprep.subr.mxu0 0.0
        %485 = vmatpush1.msra.mxu0 0.0
        %486 = vmatprep.subr.mxu0 0.0
        %487 = vmatpush1.msra.mxu0 0.0
        %488 = vmatprep.subr.mxu0 0.0
        %489 = vmatpush1.msra.mxu0 0.0
        %490 = vmatprep.subr.mxu0 0.0
        %491 = vmatpush1.msra.mxu0 0.0
        %492 = vmatprep.subr.mxu0 0.0
        %493 = vmatpush1.msra.mxu0 0.0
        %494 = vmatprep.subr.mxu0 0.0
        %495 = vmatpush1.msra.mxu0 0.0
        %496 = vmatprep.subr.mxu0 0.0
        %497 = vmatpush1.msra.mxu0 0.0
        %498 = vmatprep.subr.mxu0 0.0
        %499 = vmatpush1.msra.mxu0 0.0
        %500 = vmatprep.subr.mxu0 0.0
        %501 = vmatpush1.msra.mxu0 0.0
        %502 = vmatprep.subr.mxu0 0.0
        %503 = vmatpush1.msra.mxu0 0.0
        %504 = vmatprep.subr.mxu0 0.0
        %505 = vmatpush1.msra.mxu0 0.0
        %506 = vmatprep.subr.mxu0 0.0
        %507 = vmatpush1.msra.mxu0 0.0
        %508 = vmatprep.subr.mxu0 0.0
        %509 = vmatpush1.msra.mxu0 0.0
        %510 = vmatprep.subr.mxu0 0.0
        %511 = vmatpush1.msra.mxu0 0.0
        %512 = vmatprep.subr.mxu0 0.0
        %513 = vmatpush1.msra.mxu0 0.0
        %514 = vmatprep.subr.mxu0 0.0
        %515 = vmatpush1.msra.mxu0 0.0
        %516 = vmatprep.subr.mxu0 0.0
        %517 = vmatpush1.msra.mxu0 0.0
        %518 = vmatprep.subr.mxu0 0.0
        %519 = vmatpush1.msra.mxu0 0.0
        %520 = vmatprep.subr.mxu0 0.0
        %521 = vmatpush1.msra.mxu0 0.0
        %522 = vmatprep.subr.mxu0 0.0
        %523 = vmatpush1.msra.mxu0 0.0
        %524 = vmatprep.subr.mxu0 0.0
        %525 = vmatpush1.msra.mxu0 0.0
        %526 = vmatprep.subr.mxu0 0.0
        %527 = vmatpush1.msra.mxu0 0.0
        %528 = vmatprep.mubr.f32.mxu0 0.0
        %529 = vmatmul.mubr.f32.gmra.mrb[0].mxu0 %v456
        %v530 = vpop.f32.mrb[0].mxu0
        %v531 = vadd.f32 %v452, %v530
        %v532 = vpop.f32.mrb[0].mxu0
        %533 = vmatprep.mubr.f32.mxu0 0.0
        %534 = vmatmul.mubr.f32.gmra.mrb[0].mxu0 %v459
        %v535 = vpop.f32.mrb[0].mxu0
        %v536 = vadd.f32 %v452, %v535
        %v537 = vpop.f32.mrb[0].mxu0
        %538 = vmatprep.mubr.f32.mxu0 0.0
        %539 = vmatmul.mubr.f32.gmra.mrb[0].mxu0 %v462
        %v540 = vpop.f32.mrb[0].mxu0
        %v541 = vadd.f32 %v452, %v540
        %v542 = vpop.f32.mrb[0].mxu0
        %543 = vdwg.mxu0
        %v544 = vld [vmem:[%s6] sm:$0xff]
        %v545 = vld [vmem:[%s6 + $0x8] sm:$0xff]
        %v546 = vld [vmem:[%s7] sm:$0x1]
        %v548 = vlaneseq
        %v549 = vshrl.u32 %v548, 7
        %v550 = vsub.s32 0, %v549
        %v551 = vrot.slane %v546, %v550
        %v554 = vsel %vm454, %v439, 0
        %v557 = vsel %vm454, %v440, 0
        %v560 = vsel %vm454, %v441, 0
        %v563 = vsel %vm454, %v442, 0
        %v566 = vsel %vm454, %v443, 0
        %v569 = vsel %vm454, %v444, 0
        %571 = vmatprep.subr.mxu0 0.0
        %572 = vmatpush1.msra.mxu0 %v544
        %573 = vmatprep.subr.mxu0 0.0
        %574 = vmatpush1.msra.mxu0 %v545
        %575 = vmatprep.subr.mxu0 0.0
        %576 = vmatpush1.msra.mxu0 0.0
        %577 = vmatprep.subr.mxu0 0.0
        %578 = vmatpush1.msra.mxu0 0.0
        %579 = vmatprep.subr.mxu0 0.0
        %580 = vmatpush1.msra.mxu0 0.0
        %581 = vmatprep.subr.mxu0 0.0
        %582 = vmatpush1.msra.mxu0 0.0
        %583 = vmatprep.subr.mxu0 0.0
        %584 = vmatpush1.msra.mxu0 0.0
        %585 = vmatprep.subr.mxu0 0.0
        %586 = vmatpush1.msra.mxu0 0.0
        %587 = vmatprep.subr.mxu0 0.0
        %588 = vmatpush1.msra.mxu0 0.0
        %589 = vmatprep.subr.mxu0 0.0
        %590 = vmatpush1.msra.mxu0 0.0
        %591 = vmatprep.subr.mxu0 0.0
        %592 = vmatpush1.msra.mxu0 0.0
        %593 = vmatprep.subr.mxu0 0.0
        %594 = vmatpush1.msra.mxu0 0.0
        %595 = vmatprep.subr.mxu0 0.0
        %596 = vmatpush1.msra.mxu0 0.0
        %597 = vmatprep.subr.mxu0 0.0
        %598 = vmatpush1.msra.mxu0 0.0
        %599 = vmatprep.subr.mxu0 0.0
        %600 = vmatpush1.msra.mxu0 0.0
        %601 = vmatprep.subr.mxu0 0.0
        %602 = vmatpush1.msra.mxu0 0.0
        %603 = vmatprep.subr.mxu0 0.0
        %604 = vmatpush1.msra.mxu0 0.0
        %605 = vmatprep.subr.mxu0 0.0
        %606 = vmatpush1.msra.mxu0 0.0
        %607 = vmatprep.subr.mxu0 0.0
        %608 = vmatpush1.msra.mxu0 0.0
        %609 = vmatprep.subr.mxu0 0.0
        %610 = vmatpush1.msra.mxu0 0.0
        %611 = vmatprep.subr.mxu0 0.0
        %612 = vmatpush1.msra.mxu0 0.0
        %613 = vmatprep.subr.mxu0 0.0
        %614 = vmatpush1.msra.mxu0 0.0
        %615 = vmatprep.subr.mxu0 0.0
        %616 = vmatpush1.msra.mxu0 0.0
        %617 = vmatprep.subr.mxu0 0.0
        %618 = vmatpush1.msra.mxu0 0.0
        %619 = vmatprep.subr.mxu0 0.0
        %620 = vmatpush1.msra.mxu0 0.0
        %621 = vmatprep.subr.mxu0 0.0
        %622 = vmatpush1.msra.mxu0 0.0
        %623 = vmatprep.subr.mxu0 0.0
        %624 = vmatpush1.msra.mxu0 0.0
        %625 = vmatprep.subr.mxu0 0.0
        %626 = vmatpush1.msra.mxu0 0.0
        %627 = vmatprep.subr.mxu0 0.0
        %628 = vmatpush1.msra.mxu0 0.0
        %629 = vmatprep.subr.mxu0 0.0
        %630 = vmatpush1.msra.mxu0 0.0
        %631 = vmatprep.subr.mxu0 0.0
        %632 = vmatpush1.msra.mxu0 0.0
        %633 = vmatprep.subr.mxu0 0.0
        %634 = vmatpush1.msra.mxu0 0.0
        %635 = vmatprep.mubr.f32.mxu0 0.0
        %636 = vmatmul.mubr.f32.gmra.mrb[0].mxu0 %v554
        %v637 = vpop.f32.mrb[0].mxu0
        %v638 = vadd.f32 %v551, %v637
        %v639 = vpop.f32.mrb[0].mxu0
        %640 = vmatprep.mubr.f32.mxu0 0.0
        %641 = vmatmul.mubr.f32.gmra.mrb[0].mxu0 %v557
        %v642 = vpop.f32.mrb[0].mxu0
        %v643 = vadd.f32 %v551, %v642
        %v644 = vpop.f32.mrb[0].mxu0
        %645 = vmatprep.mubr.f32.mxu0 0.0
        %646 = vmatmul.mubr.f32.gmra.mrb[0].mxu0 %v560
        %v647 = vpop.f32.mrb[0].mxu0
        %v648 = vadd.f32 %v551, %v647
        %v649 = vpop.f32.mrb[0].mxu0
        %650 = vmatprep.mubr.f32.mxu0 0.0
        %651 = vmatmul.mubr.f32.gmra.mrb[0].mxu0 %v563
        %v652 = vpop.f32.mrb[0].mxu0
        %v653 = vadd.f32 %v551, %v652
        %v654 = vpop.f32.mrb[0].mxu0
        %655 = vmatprep.mubr.f32.mxu0 0.0
        %656 = vmatmul.mubr.f32.gmra.mrb[0].mxu0 %v566
        %v657 = vpop.f32.mrb[0].mxu0
        %v658 = vadd.f32 %v551, %v657
        %v659 = vpop.f32.mrb[0].mxu0
        %660 = vmatprep.mubr.f32.mxu0 0.0
        %661 = vmatmul.mubr.f32.gmra.mrb[0].mxu0 %v569
        %v662 = vpop.f32.mrb[0].mxu0
        %v663 = vadd.f32 %v551, %v662
        %v664 = vpop.f32.mrb[0].mxu0
        %665 = vdwg.mxu0
        %v666 = vld [vmem:[%s426] sm:$0xff]
        %v667 = vld [vmem:[%s426 + $0x8] sm:$0xff]
        %v668 = vld [vmem:[%s426 + $0x10] sm:$0xff]
        %v669 = vld [vmem:[%s426 + $0x18] sm:$0xff]
        %v670 = vld [vmem:[%s426 + $0x20] sm:$0xff]
        %v671 = vld [vmem:[%s426 + $0x28] sm:$0xff]
        %v672 = vld [vmem:[%s433] sm:$0xff]
        %v673 = vld [vmem:[%s433 + $0x8] sm:$0xff]
        %v674 = vld [vmem:[%s433 + $0x10] sm:$0xff]
        %v675 = vld [vmem:[%s433 + $0x18] sm:$0xff]
        %v676 = vld [vmem:[%s433 + $0x20] sm:$0xff]
        %v677 = vld [vmem:[%s433 + $0x28] sm:$0xff]
        %v678 = vmul.f32 %v672, %v666
        %v679 = vmul.f32 %v673, %v667
        %v680 = vmul.f32 %v674, %v668
        %v681 = vmul.f32 %v675, %v669
        %v682 = vmul.f32 %v676, %v670
        %v683 = vmul.f32 %v677, %v671
        %690 = vrot.lane.b32.xlu0 %v672, 4
        %v691 = vpop.permute.xlu0 %690
        %692 = vrot.lane.b32.xlu0 %v673, 4
        %v693 = vpop.permute.xlu0 %692
        %694 = vrot.lane.b32.xlu0 %v674, 4
        %v695 = vpop.permute.xlu0 %694
        %696 = vrot.lane.b32.xlu0 %v675, 4
        %v697 = vpop.permute.xlu0 %696
        %698 = vrot.lane.b32.xlu0 %v676, 4
        %v699 = vpop.permute.xlu0 %698
        %700 = vrot.lane.b32.xlu0 %v677, 4
        %v701 = vpop.permute.xlu0 %700
        %vm708 = vcmask 31744
        %v709 = vsel %vm708, %v678, %v691
        %v710 = vsel %vm708, %v679, %v693
        %v711 = vsel %vm708, %v680, %v695
        %v712 = vsel %vm708, %v681, %v697
        %v713 = vsel %vm708, %v682, %v699
        %v714 = vsel %vm708, %v683, %v701
        %v715 = vsel %vm708, %v672, -inf
        %716 = vmax.xlane.f32.xlu0 %v715
        %v717 = vpop.xlane.xlu0 %716
        %v718 = vsel %vm708, %v673, -inf
        %719 = vmax.xlane.f32.xlu0 %v718
        %v720 = vpop.xlane.xlu0 %719
        %v721 = vsel %vm708, %v674, -inf
        %722 = vmax.xlane.f32.xlu0 %v721
        %v723 = vpop.xlane.xlu0 %722
        %v724 = vsel %vm708, %v675, -inf
        %725 = vmax.xlane.f32.xlu0 %v724
        %v726 = vpop.xlane.xlu0 %725
        %v727 = vsel %vm708, %v676, -inf
        %728 = vmax.xlane.f32.xlu0 %v727
        %v729 = vpop.xlane.xlu0 %728
        %v730 = vsel %vm708, %v677, -inf
        %731 = vmax.xlane.f32.xlu0 %v730
        %v732 = vpop.xlane.xlu0 %731
        %vm733 = vcmp.gt.f32.partialorder %v717, 0.0
        %vm734 = vcmp.gt.f32.partialorder %v720, 0.0
        %vm735 = vcmp.gt.f32.partialorder %v723, 0.0
        %vm736 = vcmp.gt.f32.partialorder %v726, 0.0
        %vm737 = vcmp.gt.f32.partialorder %v729, 0.0
        %vm738 = vcmp.gt.f32.partialorder %v732, 0.0
        %v739 = vsel %vm733, 0.0, -1e+09
        %v740 = vsel %vm734, 0.0, -1e+09
        %v741 = vsel %vm735, 0.0, -1e+09
        %v742 = vsel %vm736, 0.0, -1e+09
        %v743 = vsel %vm737, 0.0, -1e+09
        %v744 = vsel %vm738, 0.0, -1e+09
        %v745 = vsel %vm708, %v666, 0.0
        %v746 = vsel %vm708, %v667, 0.0
        %v747 = vadd.f32 %v745, %v746
        %v748 = vrot.slane %v747, 4
        %v749 = vadd.f32 %v747, %v748
        %v750 = vrot.slane %v749, 2
        %v751 = vadd.f32 %v749, %v750
        %v752 = vrot.slane %v751, 1
        %v753 = vadd.f32 %v751, %v752
        %v754 = vsel %vm708, %v668, 0.0
        %v755 = vsel %vm708, %v669, 0.0
        %v756 = vadd.f32 %v754, %v755
        %v757 = vrot.slane %v756, 4
        %v758 = vadd.f32 %v756, %v757
        %v759 = vrot.slane %v758, 2
        %v760 = vadd.f32 %v758, %v759
        %v761 = vrot.slane %v760, 1
        %v762 = vadd.f32 %v760, %v761
        %v763 = vsel %vm708, %v670, 0.0
        %v764 = vsel %vm708, %v671, 0.0
        %v765 = vadd.f32 %v763, %v764
        %v766 = vrot.slane %v765, 4
        %v767 = vadd.f32 %v765, %v766
        %v768 = vrot.slane %v767, 2
        %v769 = vadd.f32 %v767, %v768
        %v770 = vrot.slane %v769, 1
        %v771 = vadd.f32 %v769, %v770
        %v772 = vrcp.pop 16.0
        %v773 = vmul.f32 %v753, %v772
        %v774 = vmul.f32 %v762, %v772
        %v775 = vmul.f32 %v771, %v772
        %v778 = vlaneseq
        %v779 = vand.u32 %v778, 127
        %v780 = vlaneseq
        %v781 = vshrl.u32 %v780, 7
        %v782 = vsub.s32 %v779, %v781
        %v783 = vrot.slane %v739, %v782
        %v784 = vadd.s32 %v779, 4294967288
        %v785 = vlaneseq
        %v786 = vshrl.u32 %v785, 7
        %v787 = vsub.s32 %v784, %v786
        %v788 = vrot.slane %v740, %v787
        %vm789 = vcmask 130112
        %v790 = vsel %vm789, %v788, %v783
        %vm791 = vcmask 1042434
        %v792 = vsel %vm791, %v790, %v790
        %vm793 = vcmask 1043459
        %v794 = vsel %vm793, %v790, %v792
        %vm795 = vcmask 1044484
        %v796 = vsel %vm795, %v790, %v794
        %vm797 = vcmask 1045509
        %v798 = vsel %vm797, %v790, %v796
        %vm799 = vcmask 1046534
        %v800 = vsel %vm799, %v790, %v798
        %vm801 = vcmask 1047559
        %v802 = vsel %vm801, %v790, %v800
        %vm804 = vcmask 64512
        %v806 = vsel %vm804, %v531, 0
        %v809 = vsel %vm804, %v638, 0
        %v812 = vsel %vm804, %v643, 0
        %814 = vmatprep.subr.mxu0 0.0
        %815 = vmatpush1.xpose.msra.mxu0 %v809
        %816 = vmatprep.subr.mxu0 0.0
        %817 = vmatpush1.xpose.msra.mxu0 %v812
        %818 = vmatprep.subr.mxu0 0.0
        %819 = vmatpush1.xpose.msra.mxu0 0.0
        %820 = vmatprep.subr.mxu0 0.0
        %821 = vmatpush1.xpose.msra.mxu0 0.0
        %822 = vmatprep.subr.mxu0 0.0
        %823 = vmatpush1.xpose.msra.mxu0 0.0
        %824 = vmatprep.subr.mxu0 0.0
        %825 = vmatpush1.xpose.msra.mxu0 0.0
        %826 = vmatprep.subr.mxu0 0.0
        %827 = vmatpush1.xpose.msra.mxu0 0.0
        %828 = vmatprep.subr.mxu0 0.0
        %829 = vmatpush1.xpose.msra.mxu0 0.0
        %830 = vmatprep.subr.mxu0 0.0
        %831 = vmatpush1.xpose.msra.mxu0 0.0
        %832 = vmatprep.subr.mxu0 0.0
        %833 = vmatpush1.xpose.msra.mxu0 0.0
        %834 = vmatprep.subr.mxu0 0.0
        %835 = vmatpush1.xpose.msra.mxu0 0.0
        %836 = vmatprep.subr.mxu0 0.0
        %837 = vmatpush1.xpose.msra.mxu0 0.0
        %838 = vmatprep.subr.mxu0 0.0
        %839 = vmatpush1.xpose.msra.mxu0 0.0
        %840 = vmatprep.subr.mxu0 0.0
        %841 = vmatpush1.xpose.msra.mxu0 0.0
        %842 = vmatprep.subr.mxu0 0.0
        %843 = vmatpush1.xpose.msra.mxu0 0.0
        %844 = vmatprep.subr.mxu0 0.0
        %845 = vmatpush1.xpose.msra.mxu0 0.0
        %846 = vmatprep.subr.mxu0 0.0
        %847 = vmatpush1.xpose.msra.mxu0 0.0
        %848 = vmatprep.subr.mxu0 0.0
        %849 = vmatpush1.xpose.msra.mxu0 0.0
        %850 = vmatprep.subr.mxu0 0.0
        %851 = vmatpush1.xpose.msra.mxu0 0.0
        %852 = vmatprep.subr.mxu0 0.0
        %853 = vmatpush1.xpose.msra.mxu0 0.0
        %854 = vmatprep.subr.mxu0 0.0
        %855 = vmatpush1.xpose.msra.mxu0 0.0
        %856 = vmatprep.subr.mxu0 0.0
        %857 = vmatpush1.xpose.msra.mxu0 0.0
        %858 = vmatprep.subr.mxu0 0.0
        %859 = vmatpush1.xpose.msra.mxu0 0.0
        %860 = vmatprep.subr.mxu0 0.0
        %861 = vmatpush1.xpose.msra.mxu0 0.0
        %862 = vmatprep.subr.mxu0 0.0
        %863 = vmatpush1.xpose.msra.mxu0 0.0
        %864 = vmatprep.subr.mxu0 0.0
        %865 = vmatpush1.xpose.msra.mxu0 0.0
        %866 = vmatprep.subr.mxu0 0.0
        %867 = vmatpush1.xpose.msra.mxu0 0.0
        %868 = vmatprep.subr.mxu0 0.0
        %869 = vmatpush1.xpose.msra.mxu0 0.0
        %870 = vmatprep.subr.mxu0 0.0
        %871 = vmatpush1.xpose.msra.mxu0 0.0
        %872 = vmatprep.subr.mxu0 0.0
        %873 = vmatpush1.xpose.msra.mxu0 0.0
        %874 = vmatprep.subr.mxu0 0.0
        %875 = vmatpush1.xpose.msra.mxu0 0.0
        %876 = vmatprep.subr.mxu0 0.0
        %877 = vmatpush1.xpose.msra.mxu0 0.0
        %878 = vmatprep.mubr.f32.mxu0 0.0
        %879 = vmatmul.mubr.f32.gmra.mrb[0].mxu0 %v806
        %v880 = vpop.f32.mrb[0].mxu0
        %v881 = vadd.f32 %v802, %v880
        %v882 = vpop.f32.mrb[0].mxu0
        %883 = vdwg.mxu0
        %v886 = vlaneseq
        %v887 = vshrl.u32 %v886, 7
        %v888 = vsub.s32 %v779, %v887
        %v889 = vrot.slane %v741, %v888
        %v890 = vlaneseq
        %v891 = vshrl.u32 %v890, 7
        %v892 = vsub.s32 %v784, %v891
        %v893 = vrot.slane %v742, %v892
        %v894 = vsel %vm789, %v893, %v889
        %v895 = vsel %vm791, %v894, %v894
        %v896 = vsel %vm793, %v894, %v895
        %v897 = vsel %vm795, %v894, %v896
        %v898 = vsel %vm797, %v894, %v897
        %v899 = vsel %vm799, %v894, %v898
        %v900 = vsel %vm801, %v894, %v899
        %v903 = vsel %vm804, %v536, 0
        %v906 = vsel %vm804, %v648, 0
        %v909 = vsel %vm804, %v653, 0
        %911 = vmatprep.subr.mxu0 0.0
        %912 = vmatpush1.xpose.msra.mxu0 %v906
        %913 = vmatprep.subr.mxu0 0.0
        %914 = vmatpush1.xpose.msra.mxu0 %v909
        %915 = vmatprep.subr.mxu0 0.0
        %916 = vmatpush1.xpose.msra.mxu0 0.0
        %917 = vmatprep.subr.mxu0 0.0
        %918 = vmatpush1.xpose.msra.mxu0 0.0
        %919 = vmatprep.subr.mxu0 0.0
        %920 = vmatpush1.xpose.msra.mxu0 0.0
        %921 = vmatprep.subr.mxu0 0.0
        %922 = vmatpush1.xpose.msra.mxu0 0.0
        %923 = vmatprep.subr.mxu0 0.0
        %924 = vmatpush1.xpose.msra.mxu0 0.0
        %925 = vmatprep.subr.mxu0 0.0
        %926 = vmatpush1.xpose.msra.mxu0 0.0
        %927 = vmatprep.subr.mxu0 0.0
        %928 = vmatpush1.xpose.msra.mxu0 0.0
        %929 = vmatprep.subr.mxu0 0.0
        %930 = vmatpush1.xpose.msra.mxu0 0.0
        %931 = vmatprep.subr.mxu0 0.0
        %932 = vmatpush1.xpose.msra.mxu0 0.0
        %933 = vmatprep.subr.mxu0 0.0
        %934 = vmatpush1.xpose.msra.mxu0 0.0
        %935 = vmatprep.subr.mxu0 0.0
        %936 = vmatpush1.xpose.msra.mxu0 0.0
        %937 = vmatprep.subr.mxu0 0.0
        %938 = vmatpush1.xpose.msra.mxu0 0.0
        %939 = vmatprep.subr.mxu0 0.0
        %940 = vmatpush1.xpose.msra.mxu0 0.0
        %941 = vmatprep.subr.mxu0 0.0
        %942 = vmatpush1.xpose.msra.mxu0 0.0
        %943 = vmatprep.subr.mxu0 0.0
        %944 = vmatpush1.xpose.msra.mxu0 0.0
        %945 = vmatprep.subr.mxu0 0.0
        %946 = vmatpush1.xpose.msra.mxu0 0.0
        %947 = vmatprep.subr.mxu0 0.0
        %948 = vmatpush1.xpose.msra.mxu0 0.0
        %949 = vmatprep.subr.mxu0 0.0
        %950 = vmatpush1.xpose.msra.mxu0 0.0
        %951 = vmatprep.subr.mxu0 0.0
        %952 = vmatpush1.xpose.msra.mxu0 0.0
        %953 = vmatprep.subr.mxu0 0.0
        %954 = vmatpush1.xpose.msra.mxu0 0.0
        %955 = vmatprep.subr.mxu0 0.0
        %956 = vmatpush1.xpose.msra.mxu0 0.0
        %957 = vmatprep.subr.mxu0 0.0
        %958 = vmatpush1.xpose.msra.mxu0 0.0
        %959 = vmatprep.subr.mxu0 0.0
        %960 = vmatpush1.xpose.msra.mxu0 0.0
        %961 = vmatprep.subr.mxu0 0.0
        %962 = vmatpush1.xpose.msra.mxu0 0.0
        %963 = vmatprep.subr.mxu0 0.0
        %964 = vmatpush1.xpose.msra.mxu0 0.0
        %965 = vmatprep.subr.mxu0 0.0
        %966 = vmatpush1.xpose.msra.mxu0 0.0
        %967 = vmatprep.subr.mxu0 0.0
        %968 = vmatpush1.xpose.msra.mxu0 0.0
        %969 = vmatprep.subr.mxu0 0.0
        %970 = vmatpush1.xpose.msra.mxu0 0.0
        %971 = vmatprep.subr.mxu0 0.0
        %972 = vmatpush1.xpose.msra.mxu0 0.0
        %973 = vmatprep.subr.mxu0 0.0
        %974 = vmatpush1.xpose.msra.mxu0 0.0
        %975 = vmatprep.mubr.f32.mxu0 0.0
        %976 = vmatmul.mubr.f32.gmra.mrb[0].mxu0 %v903
        %v977 = vpop.f32.mrb[0].mxu0
        %v978 = vadd.f32 %v900, %v977
        %v979 = vpop.f32.mrb[0].mxu0
        %980 = vdwg.mxu0
        %v983 = vlaneseq
        %v984 = vshrl.u32 %v983, 7
        %v985 = vsub.s32 %v779, %v984
        %v986 = vrot.slane %v743, %v985
        %v987 = vlaneseq
        %v988 = vshrl.u32 %v987, 7
        %v989 = vsub.s32 %v784, %v988
        %v990 = vrot.slane %v744, %v989
        %v991 = vsel %vm789, %v990, %v986
        %v992 = vsel %vm791, %v991, %v991
        %v993 = vsel %vm793, %v991, %v992
        %v994 = vsel %vm795, %v991, %v993
        %v995 = vsel %vm797, %v991, %v994
        %v996 = vsel %vm799, %v991, %v995
        %v997 = vsel %vm801, %v991, %v996
        %v1000 = vsel %vm804, %v541, 0
        %v1003 = vsel %vm804, %v658, 0
        %v1006 = vsel %vm804, %v663, 0
        %1008 = vmatprep.subr.mxu0 0.0
        %1009 = vmatpush1.xpose.msra.mxu0 %v1003
        %1010 = vmatprep.subr.mxu0 0.0
        %1011 = vmatpush1.xpose.msra.mxu0 %v1006
        %1012 = vmatprep.subr.mxu0 0.0
        %1013 = vmatpush1.xpose.msra.mxu0 0.0
        %1014 = vmatprep.subr.mxu0 0.0
        %1015 = vmatpush1.xpose.msra.mxu0 0.0
        %1016 = vmatprep.subr.mxu0 0.0
        %1017 = vmatpush1.xpose.msra.mxu0 0.0
        %1018 = vmatprep.subr.mxu0 0.0
        %1019 = vmatpush1.xpose.msra.mxu0 0.0
        %1020 = vmatprep.subr.mxu0 0.0
        %1021 = vmatpush1.xpose.msra.mxu0 0.0
        %1022 = vmatprep.subr.mxu0 0.0
        %1023 = vmatpush1.xpose.msra.mxu0 0.0
        %1024 = vmatprep.subr.mxu0 0.0
        %1025 = vmatpush1.xpose.msra.mxu0 0.0
        %1026 = vmatprep.subr.mxu0 0.0
        %1027 = vmatpush1.xpose.msra.mxu0 0.0
        %1028 = vmatprep.subr.mxu0 0.0
        %1029 = vmatpush1.xpose.msra.mxu0 0.0
        %1030 = vmatprep.subr.mxu0 0.0
        %1031 = vmatpush1.xpose.msra.mxu0 0.0
        %1032 = vmatprep.subr.mxu0 0.0
        %1033 = vmatpush1.xpose.msra.mxu0 0.0
        %1034 = vmatprep.subr.mxu0 0.0
        %1035 = vmatpush1.xpose.msra.mxu0 0.0
        %1036 = vmatprep.subr.mxu0 0.0
        %1037 = vmatpush1.xpose.msra.mxu0 0.0
        %1038 = vmatprep.subr.mxu0 0.0
        %1039 = vmatpush1.xpose.msra.mxu0 0.0
        %1040 = vmatprep.subr.mxu0 0.0
        %1041 = vmatpush1.xpose.msra.mxu0 0.0
        %1042 = vmatprep.subr.mxu0 0.0
        %1043 = vmatpush1.xpose.msra.mxu0 0.0
        %1044 = vmatprep.subr.mxu0 0.0
        %1045 = vmatpush1.xpose.msra.mxu0 0.0
        %1046 = vmatprep.subr.mxu0 0.0
        %1047 = vmatpush1.xpose.msra.mxu0 0.0
        %1048 = vmatprep.subr.mxu0 0.0
        %1049 = vmatpush1.xpose.msra.mxu0 0.0
        %1050 = vmatprep.subr.mxu0 0.0
        %1051 = vmatpush1.xpose.msra.mxu0 0.0
        %1052 = vmatprep.subr.mxu0 0.0
        %1053 = vmatpush1.xpose.msra.mxu0 0.0
        %1054 = vmatprep.subr.mxu0 0.0
        %1055 = vmatpush1.xpose.msra.mxu0 0.0
        %1056 = vmatprep.subr.mxu0 0.0
        %1057 = vmatpush1.xpose.msra.mxu0 0.0
        %1058 = vmatprep.subr.mxu0 0.0
        %1059 = vmatpush1.xpose.msra.mxu0 0.0
        %1060 = vmatprep.subr.mxu0 0.0
        %1061 = vmatpush1.xpose.msra.mxu0 0.0
        %1062 = vmatprep.subr.mxu0 0.0
        %1063 = vmatpush1.xpose.msra.mxu0 0.0
        %1064 = vmatprep.subr.mxu0 0.0
        %1065 = vmatpush1.xpose.msra.mxu0 0.0
        %1066 = vmatprep.subr.mxu0 0.0
        %1067 = vmatpush1.xpose.msra.mxu0 0.0
        %1068 = vmatprep.subr.mxu0 0.0
        %1069 = vmatpush1.xpose.msra.mxu0 0.0
        %1070 = vmatprep.subr.mxu0 0.0
        %1071 = vmatpush1.xpose.msra.mxu0 0.0
        %1072 = vmatprep.mubr.f32.mxu0 0.0
        %1073 = vmatmul.mubr.f32.gmra.mrb[0].mxu0 %v1000
        %v1074 = vpop.f32.mrb[0].mxu0
        %v1075 = vadd.f32 %v997, %v1074
        %v1076 = vpop.f32.mrb[0].mxu0
        %1077 = vdwg.mxu0
        %v1078 = vsel %vm454, %v881, -inf
        %1079 = vmax.xlane.f32.xlu0 %v1078
        %v1080 = vpop.xlane.xlu0 %1079
        %v1081 = vsel %vm454, %v978, -inf
        %1082 = vmax.xlane.f32.xlu0 %v1081
        %v1083 = vpop.xlane.xlu0 %1082
        %v1084 = vsel %vm454, %v1075, -inf
        %1085 = vmax.xlane.f32.xlu0 %v1084
        %v1086 = vpop.xlane.xlu0 %1085
        %v1087 = vsub.f32 %v881, %v1080
        %v1088 = vsub.f32 %v978, %v1083
        %v1089 = vsub.f32 %v1075, %v1086
        %v1090 = vmul.f32 %v1087, 1.442695
        %v1091 = vpow.pop %v1090
        %v1092 = vmul.f32 %v1088, 1.442695
        %v1093 = vpow.pop %v1092
        %v1094 = vmul.f32 %v1089, 1.442695
        %v1095 = vpow.pop %v1094
        %v1097 = vsel %vm454, %v1091, 0
        %1099 = vmatprep.subr.mxu0 0.0
        %1100 = vmatpush1.msra.mxu0 %v709
        %1101 = vmatprep.subr.mxu0 0.0
        %1102 = vmatpush1.msra.mxu0 %v710
        %1103 = vmatprep.subr.mxu0 0.0
        %1104 = vmatpush1.msra.mxu0 0.0
        %1105 = vmatprep.subr.mxu0 0.0
        %1106 = vmatpush1.msra.mxu0 0.0
        %1107 = vmatprep.subr.mxu0 0.0
        %1108 = vmatpush1.msra.mxu0 0.0
        %1109 = vmatprep.subr.mxu0 0.0
        %1110 = vmatpush1.msra.mxu0 0.0
        %1111 = vmatprep.subr.mxu0 0.0
        %1112 = vmatpush1.msra.mxu0 0.0
        %1113 = vmatprep.subr.mxu0 0.0
        %1114 = vmatpush1.msra.mxu0 0.0
        %1115 = vmatprep.subr.mxu0 0.0
        %1116 = vmatpush1.msra.mxu0 0.0
        %1117 = vmatprep.subr.mxu0 0.0
        %1118 = vmatpush1.msra.mxu0 0.0
        %1119 = vmatprep.subr.mxu0 0.0
        %1120 = vmatpush1.msra.mxu0 0.0
        %1121 = vmatprep.subr.mxu0 0.0
        %1122 = vmatpush1.msra.mxu0 0.0
        %1123 = vmatprep.subr.mxu0 0.0
        %1124 = vmatpush1.msra.mxu0 0.0
        %1125 = vmatprep.subr.mxu0 0.0
        %1126 = vmatpush1.msra.mxu0 0.0
        %1127 = vmatprep.subr.mxu0 0.0
        %1128 = vmatpush1.msra.mxu0 0.0
        %1129 = vmatprep.subr.mxu0 0.0
        %1130 = vmatpush1.msra.mxu0 0.0
        %1131 = vmatprep.subr.mxu0 0.0
        %1132 = vmatpush1.msra.mxu0 0.0
        %1133 = vmatprep.subr.mxu0 0.0
        %1134 = vmatpush1.msra.mxu0 0.0
        %1135 = vmatprep.subr.mxu0 0.0
        %1136 = vmatpush1.msra.mxu0 0.0
        %1137 = vmatprep.subr.mxu0 0.0
        %1138 = vmatpush1.msra.mxu0 0.0
        %1139 = vmatprep.subr.mxu0 0.0
        %1140 = vmatpush1.msra.mxu0 0.0
        %1141 = vmatprep.subr.mxu0 0.0
        %1142 = vmatpush1.msra.mxu0 0.0
        %1143 = vmatprep.subr.mxu0 0.0
        %1144 = vmatpush1.msra.mxu0 0.0
        %1145 = vmatprep.subr.mxu0 0.0
        %1146 = vmatpush1.msra.mxu0 0.0
        %1147 = vmatprep.subr.mxu0 0.0
        %1148 = vmatpush1.msra.mxu0 0.0
        %1149 = vmatprep.subr.mxu0 0.0
        %1150 = vmatpush1.msra.mxu0 0.0
        %1151 = vmatprep.subr.mxu0 0.0
        %1152 = vmatpush1.msra.mxu0 0.0
        %1153 = vmatprep.subr.mxu0 0.0
        %1154 = vmatpush1.msra.mxu0 0.0
        %1155 = vmatprep.subr.mxu0 0.0
        %1156 = vmatpush1.msra.mxu0 0.0
        %1157 = vmatprep.subr.mxu0 0.0
        %1158 = vmatpush1.msra.mxu0 0.0
        %1159 = vmatprep.subr.mxu0 0.0
        %1160 = vmatpush1.msra.mxu0 0.0
        %1161 = vmatprep.subr.mxu0 0.0
        %1162 = vmatpush1.msra.mxu0 0.0
        %1163 = vmatprep.mubr.f32.mxu0 0.0
        %1164 = vmatmul.mubr.f32.gmra.mrb[0].mxu0 %v1097
        %v1165 = vpop.f32.mrb[0].mxu0
        %v1166 = vadd.f32 0.0, %v1165
        %v1167 = vpop.f32.mrb[0].mxu0
        %1168 = vdwg.mxu0
        %v1170 = vsel %vm454, %v1093, 0
        %1172 = vmatprep.subr.mxu0 0.0
        %1173 = vmatpush1.msra.mxu0 %v711
        %1174 = vmatprep.subr.mxu0 0.0
        %1175 = vmatpush1.msra.mxu0 %v712
        %1176 = vmatprep.subr.mxu0 0.0
        %1177 = vmatpush1.msra.mxu0 0.0
        %1178 = vmatprep.subr.mxu0 0.0
        %1179 = vmatpush1.msra.mxu0 0.0
        %1180 = vmatprep.subr.mxu0 0.0
        %1181 = vmatpush1.msra.mxu0 0.0
        %1182 = vmatprep.subr.mxu0 0.0
        %1183 = vmatpush1.msra.mxu0 0.0
        %1184 = vmatprep.subr.mxu0 0.0
        %1185 = vmatpush1.msra.mxu0 0.0
        %1186 = vmatprep.subr.mxu0 0.0
        %1187 = vmatpush1.msra.mxu0 0.0
        %1188 = vmatprep.subr.mxu0 0.0
        %1189 = vmatpush1.msra.mxu0 0.0
        %1190 = vmatprep.subr.mxu0 0.0
        %1191 = vmatpush1.msra.mxu0 0.0
        %1192 = vmatprep.subr.mxu0 0.0
        %1193 = vmatpush1.msra.mxu0 0.0
        %1194 = vmatprep.subr.mxu0 0.0
        %1195 = vmatpush1.msra.mxu0 0.0
        %1196 = vmatprep.subr.mxu0 0.0
        %1197 = vmatpush1.msra.mxu0 0.0
        %1198 = vmatprep.subr.mxu0 0.0
        %1199 = vmatpush1.msra.mxu0 0.0
        %1200 = vmatprep.subr.mxu0 0.0
        %1201 = vmatpush1.msra.mxu0 0.0
        %1202 = vmatprep.subr.mxu0 0.0
        %1203 = vmatpush1.msra.mxu0 0.0
        %1204 = vmatprep.subr.mxu0 0.0
        %1205 = vmatpush1.msra.mxu0 0.0
        %1206 = vmatprep.subr.mxu0 0.0
        %1207 = vmatpush1.msra.mxu0 0.0
        %1208 = vmatprep.subr.mxu0 0.0
        %1209 = vmatpush1.msra.mxu0 0.0
        %1210 = vmatprep.subr.mxu0 0.0
        %1211 = vmatpush1.msra.mxu0 0.0
        %1212 = vmatprep.subr.mxu0 0.0
        %1213 = vmatpush1.msra.mxu0 0.0
        %1214 = vmatprep.subr.mxu0 0.0
        %1215 = vmatpush1.msra.mxu0 0.0
        %1216 = vmatprep.subr.mxu0 0.0
        %1217 = vmatpush1.msra.mxu0 0.0
        %1218 = vmatprep.subr.mxu0 0.0
        %1219 = vmatpush1.msra.mxu0 0.0
        %1220 = vmatprep.subr.mxu0 0.0
        %1221 = vmatpush1.msra.mxu0 0.0
        %1222 = vmatprep.subr.mxu0 0.0
        %1223 = vmatpush1.msra.mxu0 0.0
        %1224 = vmatprep.subr.mxu0 0.0
        %1225 = vmatpush1.msra.mxu0 0.0
        %1226 = vmatprep.subr.mxu0 0.0
        %1227 = vmatpush1.msra.mxu0 0.0
        %1228 = vmatprep.subr.mxu0 0.0
        %1229 = vmatpush1.msra.mxu0 0.0
        %1230 = vmatprep.subr.mxu0 0.0
        %1231 = vmatpush1.msra.mxu0 0.0
        %1232 = vmatprep.subr.mxu0 0.0
        %1233 = vmatpush1.msra.mxu0 0.0
        %1234 = vmatprep.subr.mxu0 0.0
        %1235 = vmatpush1.msra.mxu0 0.0
        %1236 = vmatprep.mubr.f32.mxu0 0.0
        %1237 = vmatmul.mubr.f32.gmra.mrb[0].mxu0 %v1170
        %v1238 = vpop.f32.mrb[0].mxu0
        %v1239 = vadd.f32 0.0, %v1238
        %v1240 = vpop.f32.mrb[0].mxu0
        %1241 = vdwg.mxu0
        %v1243 = vsel %vm454, %v1095, 0
        %1245 = vmatprep.subr.mxu0 0.0
        %1246 = vmatpush1.msra.mxu0 %v713
        %1247 = vmatprep.subr.mxu0 0.0
        %1248 = vmatpush1.msra.mxu0 %v714
        %1249 = vmatprep.subr.mxu0 0.0
        %1250 = vmatpush1.msra.mxu0 0.0
        %1251 = vmatprep.subr.mxu0 0.0
        %1252 = vmatpush1.msra.mxu0 0.0
        %1253 = vmatprep.subr.mxu0 0.0
        %1254 = vmatpush1.msra.mxu0 0.0
        %1255 = vmatprep.subr.mxu0 0.0
        %1256 = vmatpush1.msra.mxu0 0.0
        %1257 = vmatprep.subr.mxu0 0.0
        %1258 = vmatpush1.msra.mxu0 0.0
        %1259 = vmatprep.subr.mxu0 0.0
        %1260 = vmatpush1.msra.mxu0 0.0
        %1261 = vmatprep.subr.mxu0 0.0
        %1262 = vmatpush1.msra.mxu0 0.0
        %1263 = vmatprep.subr.mxu0 0.0
        %1264 = vmatpush1.msra.mxu0 0.0
        %1265 = vmatprep.subr.mxu0 0.0
        %1266 = vmatpush1.msra.mxu0 0.0
        %1267 = vmatprep.subr.mxu0 0.0
        %1268 = vmatpush1.msra.mxu0 0.0
        %1269 = vmatprep.subr.mxu0 0.0
        %1270 = vmatpush1.msra.mxu0 0.0
        %1271 = vmatprep.subr.mxu0 0.0
        %1272 = vmatpush1.msra.mxu0 0.0
        %1273 = vmatprep.subr.mxu0 0.0
        %1274 = vmatpush1.msra.mxu0 0.0
        %1275 = vmatprep.subr.mxu0 0.0
        %1276 = vmatpush1.msra.mxu0 0.0
        %1277 = vmatprep.subr.mxu0 0.0
        %1278 = vmatpush1.msra.mxu0 0.0
        %1279 = vmatprep.subr.mxu0 0.0
        %1280 = vmatpush1.msra.mxu0 0.0
        %1281 = vmatprep.subr.mxu0 0.0
        %1282 = vmatpush1.msra.mxu0 0.0
        %1283 = vmatprep.subr.mxu0 0.0
        %1284 = vmatpush1.msra.mxu0 0.0
        %1285 = vmatprep.subr.mxu0 0.0
        %1286 = vmatpush1.msra.mxu0 0.0
        %1287 = vmatprep.subr.mxu0 0.0
        %1288 = vmatpush1.msra.mxu0 0.0
        %1289 = vmatprep.subr.mxu0 0.0
        %1290 = vmatpush1.msra.mxu0 0.0
        %1291 = vmatprep.subr.mxu0 0.0
        %1292 = vmatpush1.msra.mxu0 0.0
        %1293 = vmatprep.subr.mxu0 0.0
        %1294 = vmatpush1.msra.mxu0 0.0
        %1295 = vmatprep.subr.mxu0 0.0
        %1296 = vmatpush1.msra.mxu0 0.0
        %1297 = vmatprep.subr.mxu0 0.0
        %1298 = vmatpush1.msra.mxu0 0.0
        %1299 = vmatprep.subr.mxu0 0.0
        %1300 = vmatpush1.msra.mxu0 0.0
        %1301 = vmatprep.subr.mxu0 0.0
        %1302 = vmatpush1.msra.mxu0 0.0
        %1303 = vmatprep.subr.mxu0 0.0
        %1304 = vmatpush1.msra.mxu0 0.0
        %1305 = vmatprep.subr.mxu0 0.0
        %1306 = vmatpush1.msra.mxu0 0.0
        %1307 = vmatprep.subr.mxu0 0.0
        %1308 = vmatpush1.msra.mxu0 0.0
        %1309 = vmatprep.mubr.f32.mxu0 0.0
        %1310 = vmatmul.mubr.f32.gmra.mrb[0].mxu0 %v1243
        %v1311 = vpop.f32.mrb[0].mxu0
        %v1312 = vadd.f32 0.0, %v1311
        %v1313 = vpop.f32.mrb[0].mxu0
        %1314 = vdwg.mxu0
        %vm1315 = vcmp.gt.f32.partialorder %v1166, 0.0
        %vm1316 = vcmp.gt.f32.partialorder %v1239, 0.0
        %vm1317 = vcmp.gt.f32.partialorder %v1312, 0.0
        %v1318 = vsel %vm1315, %v1166, 1.0
        %v1319 = vsel %vm1316, %v1239, 1.0
        %v1320 = vsel %vm1317, %v1312, 1.0
        %v1321 = vrcp.pop %v1318
        %v1322 = vrcp.pop %v1319
        %v1323 = vrcp.pop %v1320
        %1327 = vrot.lane.b32.xlu0 %v1321, 124
        %v1328 = vpop.permute.xlu0 %1327
        %1329 = vrot.lane.b32.xlu0 %v1322, 124
        %v1330 = vpop.permute.xlu0 %1329
        %1331 = vrot.lane.b32.xlu0 %v1323, 124
        %v1332 = vpop.permute.xlu0 %1331
        %v1336 = vmul.f32 %v1166, %v1328
        %v1337 = vmul.f32 %v1239, %v1330
        %v1338 = vmul.f32 %v1312, %v1332
        %1342 = vrot.lane.b32.xlu0 %v1336, 4
        %v1343 = vpop.permute.xlu0 %1342
        %1344 = vrot.lane.b32.xlu0 %v1337, 4
        %v1345 = vpop.permute.xlu0 %1344
        %1346 = vrot.lane.b32.xlu0 %v1338, 4
        %v1347 = vpop.permute.xlu0 %1346
        %1354 = vrot.lane.b32.xlu0 %v773, 4
        %v1355 = vpop.permute.xlu0 %1354
        %1356 = vrot.lane.b32.xlu0 %v774, 4
        %v1357 = vpop.permute.xlu0 %1356
        %1358 = vrot.lane.b32.xlu0 %v775, 4
        %v1359 = vpop.permute.xlu0 %1358
        %v1363 = vsel %vm1315, %v1343, %v1355
        %v1364 = vsel %vm1316, %v1345, %v1357
        %v1365 = vsel %vm1317, %v1347, %v1359
        %1366 = vrot.lane.b32.xlu0 %v531, 120
        %v1367 = vpop.permute.xlu0 %1366
        %1368 = vrot.lane.b32.xlu0 %v638, 120
        %v1369 = vpop.permute.xlu0 %1368
        %1370 = vrot.lane.b32.xlu0 %v643, 120
        %v1371 = vpop.permute.xlu0 %1370
        %v1372 = vsel %vm804, %v1367, 0
        %v1374 = vsel %vm804, %v1369, 0
        %v1376 = vsel %vm804, %v1371, 0
        %1378 = vmatprep.subr.mxu0 0.0
        %1379 = vmatpush1.xpose.msra.mxu0 %v1374
        %1380 = vmatprep.subr.mxu0 0.0
        %1381 = vmatpush1.xpose.msra.mxu0 %v1376
        %1382 = vmatprep.subr.mxu0 0.0
        %1383 = vmatpush1.xpose.msra.mxu0 0.0
        %1384 = vmatprep.subr.mxu0 0.0
        %1385 = vmatpush1.xpose.msra.mxu0 0.0
        %1386 = vmatprep.subr.mxu0 0.0
        %1387 = vmatpush1.xpose.msra.mxu0 0.0
        %1388 = vmatprep.subr.mxu0 0.0
        %1389 = vmatpush1.xpose.msra.mxu0 0.0
        %1390 = vmatprep.subr.mxu0 0.0
        %1391 = vmatpush1.xpose.msra.mxu0 0.0
        %1392 = vmatprep.subr.mxu0 0.0
        %1393 = vmatpush1.xpose.msra.mxu0 0.0
        %1394 = vmatprep.subr.mxu0 0.0
        %1395 = vmatpush1.xpose.msra.mxu0 0.0
        %1396 = vmatprep.subr.mxu0 0.0
        %1397 = vmatpush1.xpose.msra.mxu0 0.0
        %1398 = vmatprep.subr.mxu0 0.0
        %1399 = vmatpush1.xpose.msra.mxu0 0.0
        %1400 = vmatprep.subr.mxu0 0.0
        %1401 = vmatpush1.xpose.msra.mxu0 0.0
        %1402 = vmatprep.subr.mxu0 0.0
        %1403 = vmatpush1.xpose.msra.mxu0 0.0
        %1404 = vmatprep.subr.mxu0 0.0
        %1405 = vmatpush1.xpose.msra.mxu0 0.0
        %1406 = vmatprep.subr.mxu0 0.0
        %1407 = vmatpush1.xpose.msra.mxu0 0.0
        %1408 = vmatprep.subr.mxu0 0.0
        %1409 = vmatpush1.xpose.msra.mxu0 0.0
        %1410 = vmatprep.subr.mxu0 0.0
        %1411 = vmatpush1.xpose.msra.mxu0 0.0
        %1412 = vmatprep.subr.mxu0 0.0
        %1413 = vmatpush1.xpose.msra.mxu0 0.0
        %1414 = vmatprep.subr.mxu0 0.0
        %1415 = vmatpush1.xpose.msra.mxu0 0.0
        %1416 = vmatprep.subr.mxu0 0.0
        %1417 = vmatpush1.xpose.msra.mxu0 0.0
        %1418 = vmatprep.subr.mxu0 0.0
        %1419 = vmatpush1.xpose.msra.mxu0 0.0
        %1420 = vmatprep.subr.mxu0 0.0
        %1421 = vmatpush1.xpose.msra.mxu0 0.0
        %1422 = vmatprep.subr.mxu0 0.0
        %1423 = vmatpush1.xpose.msra.mxu0 0.0
        %1424 = vmatprep.subr.mxu0 0.0
        %1425 = vmatpush1.xpose.msra.mxu0 0.0
        %1426 = vmatprep.subr.mxu0 0.0
        %1427 = vmatpush1.xpose.msra.mxu0 0.0
        %1428 = vmatprep.subr.mxu0 0.0
        %1429 = vmatpush1.xpose.msra.mxu0 0.0
        %1430 = vmatprep.subr.mxu0 0.0
        %1431 = vmatpush1.xpose.msra.mxu0 0.0
        %1432 = vmatprep.subr.mxu0 0.0
        %1433 = vmatpush1.xpose.msra.mxu0 0.0
        %1434 = vmatprep.subr.mxu0 0.0
        %1435 = vmatpush1.xpose.msra.mxu0 0.0
        %1436 = vmatprep.subr.mxu0 0.0
        %1437 = vmatpush1.xpose.msra.mxu0 0.0
        %1438 = vmatprep.subr.mxu0 0.0
        %1439 = vmatpush1.xpose.msra.mxu0 0.0
        %1440 = vmatprep.subr.mxu0 0.0
        %1441 = vmatpush1.xpose.msra.mxu0 0.0
        %1442 = vmatprep.mubr.f32.mxu0 0.0
        %1443 = vmatmul.mubr.f32.gmra.mrb[0].mxu0 %v1372
        %v1444 = vpop.f32.mrb[0].mxu0
        %v1445 = vadd.f32 %v802, %v1444
        %v1446 = vpop.f32.mrb[0].mxu0
        %1447 = vdwg.mxu0
        %1448 = vrot.lane.b32.xlu0 %v536, 120
        %v1449 = vpop.permute.xlu0 %1448
        %1450 = vrot.lane.b32.xlu0 %v648, 120
        %v1451 = vpop.permute.xlu0 %1450
        %1452 = vrot.lane.b32.xlu0 %v653, 120
        %v1453 = vpop.permute.xlu0 %1452
        %v1454 = vsel %vm804, %v1449, 0
        %v1456 = vsel %vm804, %v1451, 0
        %v1458 = vsel %vm804, %v1453, 0
        %1460 = vmatprep.subr.mxu0 0.0
        %1461 = vmatpush1.xpose.msra.mxu0 %v1456
        %1462 = vmatprep.subr.mxu0 0.0
        %1463 = vmatpush1.xpose.msra.mxu0 %v1458
        %1464 = vmatprep.subr.mxu0 0.0
        %1465 = vmatpush1.xpose.msra.mxu0 0.0
        %1466 = vmatprep.subr.mxu0 0.0
        %1467 = vmatpush1.xpose.msra.mxu0 0.0
        %1468 = vmatprep.subr.mxu0 0.0
        %1469 = vmatpush1.xpose.msra.mxu0 0.0
        %1470 = vmatprep.subr.mxu0 0.0
        %1471 = vmatpush1.xpose.msra.mxu0 0.0
        %1472 = vmatprep.subr.mxu0 0.0
        %1473 = vmatpush1.xpose.msra.mxu0 0.0
        %1474 = vmatprep.subr.mxu0 0.0
        %1475 = vmatpush1.xpose.msra.mxu0 0.0
        %1476 = vmatprep.subr.mxu0 0.0
        %1477 = vmatpush1.xpose.msra.mxu0 0.0
        %1478 = vmatprep.subr.mxu0 0.0
        %1479 = vmatpush1.xpose.msra.mxu0 0.0
        %1480 = vmatprep.subr.mxu0 0.0
        %1481 = vmatpush1.xpose.msra.mxu0 0.0
        %1482 = vmatprep.subr.mxu0 0.0
        %1483 = vmatpush1.xpose.msra.mxu0 0.0
        %1484 = vmatprep.subr.mxu0 0.0
        %1485 = vmatpush1.xpose.msra.mxu0 0.0
        %1486 = vmatprep.subr.mxu0 0.0
        %1487 = vmatpush1.xpose.msra.mxu0 0.0
        %1488 = vmatprep.subr.mxu0 0.0
        %1489 = vmatpush1.xpose.msra.mxu0 0.0
        %1490 = vmatprep.subr.mxu0 0.0
        %1491 = vmatpush1.xpose.msra.mxu0 0.0
        %1492 = vmatprep.subr.mxu0 0.0
        %1493 = vmatpush1.xpose.msra.mxu0 0.0
        %1494 = vmatprep.subr.mxu0 0.0
        %1495 = vmatpush1.xpose.msra.mxu0 0.0
        %1496 = vmatprep.subr.mxu0 0.0
        %1497 = vmatpush1.xpose.msra.mxu0 0.0
        %1498 = vmatprep.subr.mxu0 0.0
        %1499 = vmatpush1.xpose.msra.mxu0 0.0
        %1500 = vmatprep.subr.mxu0 0.0
        %1501 = vmatpush1.xpose.msra.mxu0 0.0
        %1502 = vmatprep.subr.mxu0 0.0
        %1503 = vmatpush1.xpose.msra.mxu0 0.0
        %1504 = vmatprep.subr.mxu0 0.0
        %1505 = vmatpush1.xpose.msra.mxu0 0.0
        %1506 = vmatprep.subr.mxu0 0.0
        %1507 = vmatpush1.xpose.msra.mxu0 0.0
        %1508 = vmatprep.subr.mxu0 0.0
        %1509 = vmatpush1.xpose.msra.mxu0 0.0
        %1510 = vmatprep.subr.mxu0 0.0
        %1511 = vmatpush1.xpose.msra.mxu0 0.0
        %1512 = vmatprep.subr.mxu0 0.0
        %1513 = vmatpush1.xpose.msra.mxu0 0.0
        %1514 = vmatprep.subr.mxu0 0.0
        %1515 = vmatpush1.xpose.msra.mxu0 0.0
        %1516 = vmatprep.subr.mxu0 0.0
        %1517 = vmatpush1.xpose.msra.mxu0 0.0
        %1518 = vmatprep.subr.mxu0 0.0
        %1519 = vmatpush1.xpose.msra.mxu0 0.0
        %1520 = vmatprep.subr.mxu0 0.0
        %1521 = vmatpush1.xpose.msra.mxu0 0.0
        %1522 = vmatprep.subr.mxu0 0.0
        %1523 = vmatpush1.xpose.msra.mxu0 0.0
        %1524 = vmatprep.mubr.f32.mxu0 0.0
        %1525 = vmatmul.mubr.f32.gmra.mrb[0].mxu0 %v1454
        %v1526 = vpop.f32.mrb[0].mxu0
        %v1527 = vadd.f32 %v900, %v1526
        %v1528 = vpop.f32.mrb[0].mxu0
        %1529 = vdwg.mxu0
        %1530 = vrot.lane.b32.xlu0 %v541, 120
        %v1531 = vpop.permute.xlu0 %1530
        %1532 = vrot.lane.b32.xlu0 %v658, 120
        %v1533 = vpop.permute.xlu0 %1532
        %1534 = vrot.lane.b32.xlu0 %v663, 120
        %v1535 = vpop.permute.xlu0 %1534
        %v1536 = vsel %vm804, %v1531, 0
        %v1538 = vsel %vm804, %v1533, 0
        %v1540 = vsel %vm804, %v1535, 0
        %1542 = vmatprep.subr.mxu0 0.0
        %1543 = vmatpush1.xpose.msra.mxu0 %v1538
        %1544 = vmatprep.subr.mxu0 0.0
        %1545 = vmatpush1.xpose.msra.mxu0 %v1540
        %1546 = vmatprep.subr.mxu0 0.0
        %1547 = vmatpush1.xpose.msra.mxu0 0.0
        %1548 = vmatprep.subr.mxu0 0.0
        %1549 = vmatpush1.xpose.msra.mxu0 0.0
        %1550 = vmatprep.subr.mxu0 0.0
        %1551 = vmatpush1.xpose.msra.mxu0 0.0
        %1552 = vmatprep.subr.mxu0 0.0
        %1553 = vmatpush1.xpose.msra.mxu0 0.0
        %1554 = vmatprep.subr.mxu0 0.0
        %1555 = vmatpush1.xpose.msra.mxu0 0.0
        %1556 = vmatprep.subr.mxu0 0.0
        %1557 = vmatpush1.xpose.msra.mxu0 0.0
        %1558 = vmatprep.subr.mxu0 0.0
        %1559 = vmatpush1.xpose.msra.mxu0 0.0
        %1560 = vmatprep.subr.mxu0 0.0
        %1561 = vmatpush1.xpose.msra.mxu0 0.0
        %1562 = vmatprep.subr.mxu0 0.0
        %1563 = vmatpush1.xpose.msra.mxu0 0.0
        %1564 = vmatprep.subr.mxu0 0.0
        %1565 = vmatpush1.xpose.msra.mxu0 0.0
        %1566 = vmatprep.subr.mxu0 0.0
        %1567 = vmatpush1.xpose.msra.mxu0 0.0
        %1568 = vmatprep.subr.mxu0 0.0
        %1569 = vmatpush1.xpose.msra.mxu0 0.0
        %1570 = vmatprep.subr.mxu0 0.0
        %1571 = vmatpush1.xpose.msra.mxu0 0.0
        %1572 = vmatprep.subr.mxu0 0.0
        %1573 = vmatpush1.xpose.msra.mxu0 0.0
        %1574 = vmatprep.subr.mxu0 0.0
        %1575 = vmatpush1.xpose.msra.mxu0 0.0
        %1576 = vmatprep.subr.mxu0 0.0
        %1577 = vmatpush1.xpose.msra.mxu0 0.0
        %1578 = vmatprep.subr.mxu0 0.0
        %1579 = vmatpush1.xpose.msra.mxu0 0.0
        %1580 = vmatprep.subr.mxu0 0.0
        %1581 = vmatpush1.xpose.msra.mxu0 0.0
        %1582 = vmatprep.subr.mxu0 0.0
        %1583 = vmatpush1.xpose.msra.mxu0 0.0
        %1584 = vmatprep.subr.mxu0 0.0
        %1585 = vmatpush1.xpose.msra.mxu0 0.0
        %1586 = vmatprep.subr.mxu0 0.0
        %1587 = vmatpush1.xpose.msra.mxu0 0.0
        %1588 = vmatprep.subr.mxu0 0.0
        %1589 = vmatpush1.xpose.msra.mxu0 0.0
        %1590 = vmatprep.subr.mxu0 0.0
        %1591 = vmatpush1.xpose.msra.mxu0 0.0
        %1592 = vmatprep.subr.mxu0 0.0
        %1593 = vmatpush1.xpose.msra.mxu0 0.0
        %1594 = vmatprep.subr.mxu0 0.0
        %1595 = vmatpush1.xpose.msra.mxu0 0.0
        %1596 = vmatprep.subr.mxu0 0.0
        %1597 = vmatpush1.xpose.msra.mxu0 0.0
        %1598 = vmatprep.subr.mxu0 0.0
        %1599 = vmatpush1.xpose.msra.mxu0 0.0
        %1600 = vmatprep.subr.mxu0 0.0
        %1601 = vmatpush1.xpose.msra.mxu0 0.0
        %1602 = vmatprep.subr.mxu0 0.0
        %1603 = vmatpush1.xpose.msra.mxu0 0.0
        %1604 = vmatprep.subr.mxu0 0.0
        %1605 = vmatpush1.xpose.msra.mxu0 0.0
        %1606 = vmatprep.mubr.f32.mxu0 0.0
        %1607 = vmatmul.mubr.f32.gmra.mrb[0].mxu0 %v1536
        %v1608 = vpop.f32.mrb[0].mxu0
        %v1609 = vadd.f32 %v997, %v1608
        %v1610 = vpop.f32.mrb[0].mxu0
        %1611 = vdwg.mxu0
        %v1612 = vsel %vm454, %v1445, -inf
        %1613 = vmax.xlane.f32.xlu0 %v1612
        %v1614 = vpop.xlane.xlu0 %1613
        %v1615 = vsel %vm454, %v1527, -inf
        %1616 = vmax.xlane.f32.xlu0 %v1615
        %v1617 = vpop.xlane.xlu0 %1616
        %v1618 = vsel %vm454, %v1609, -inf
        %1619 = vmax.xlane.f32.xlu0 %v1618
        %v1620 = vpop.xlane.xlu0 %1619
        %v1621 = vsub.f32 %v1445, %v1614
        %v1622 = vsub.f32 %v1527, %v1617
        %v1623 = vsub.f32 %v1609, %v1620
        %v1624 = vmul.f32 %v1621, 1.442695
        %v1625 = vpow.pop %v1624
        %v1626 = vmul.f32 %v1622, 1.442695
        %v1627 = vpow.pop %v1626
        %v1628 = vmul.f32 %v1623, 1.442695
        %v1629 = vpow.pop %v1628
        %v1631 = vsel %vm454, %v1625, 0
        %1633 = vmatprep.subr.mxu0 0.0
        %1634 = vmatpush1.msra.mxu0 %v709
        %1635 = vmatprep.subr.mxu0 0.0
        %1636 = vmatpush1.msra.mxu0 %v710
        %1637 = vmatprep.subr.mxu0 0.0
        %1638 = vmatpush1.msra.mxu0 0.0
        %1639 = vmatprep.subr.mxu0 0.0
        %1640 = vmatpush1.msra.mxu0 0.0
        %1641 = vmatprep.subr.mxu0 0.0
        %1642 = vmatpush1.msra.mxu0 0.0
        %1643 = vmatprep.subr.mxu0 0.0
        %1644 = vmatpush1.msra.mxu0 0.0
        %1645 = vmatprep.subr.mxu0 0.0
        %1646 = vmatpush1.msra.mxu0 0.0
        %1647 = vmatprep.subr.mxu0 0.0
        %1648 = vmatpush1.msra.mxu0 0.0
        %1649 = vmatprep.subr.mxu0 0.0
        %1650 = vmatpush1.msra.mxu0 0.0
        %1651 = vmatprep.subr.mxu0 0.0
        %1652 = vmatpush1.msra.mxu0 0.0
        %1653 = vmatprep.subr.mxu0 0.0
        %1654 = vmatpush1.msra.mxu0 0.0
        %1655 = vmatprep.subr.mxu0 0.0
        %1656 = vmatpush1.msra.mxu0 0.0
        %1657 = vmatprep.subr.mxu0 0.0
        %1658 = vmatpush1.msra.mxu0 0.0
        %1659 = vmatprep.subr.mxu0 0.0
        %1660 = vmatpush1.msra.mxu0 0.0
        %1661 = vmatprep.subr.mxu0 0.0
        %1662 = vmatpush1.msra.mxu0 0.0
        %1663 = vmatprep.subr.mxu0 0.0
        %1664 = vmatpush1.msra.mxu0 0.0
        %1665 = vmatprep.subr.mxu0 0.0
        %1666 = vmatpush1.msra.mxu0 0.0
        %1667 = vmatprep.subr.mxu0 0.0
        %1668 = vmatpush1.msra.mxu0 0.0
        %1669 = vmatprep.subr.mxu0 0.0
        %1670 = vmatpush1.msra.mxu0 0.0
        %1671 = vmatprep.subr.mxu0 0.0
        %1672 = vmatpush1.msra.mxu0 0.0
        %1673 = vmatprep.subr.mxu0 0.0
        %1674 = vmatpush1.msra.mxu0 0.0
        %1675 = vmatprep.subr.mxu0 0.0
        %1676 = vmatpush1.msra.mxu0 0.0
        %1677 = vmatprep.subr.mxu0 0.0
        %1678 = vmatpush1.msra.mxu0 0.0
        %1679 = vmatprep.subr.mxu0 0.0
        %1680 = vmatpush1.msra.mxu0 0.0
        %1681 = vmatprep.subr.mxu0 0.0
        %1682 = vmatpush1.msra.mxu0 0.0
        %1683 = vmatprep.subr.mxu0 0.0
        %1684 = vmatpush1.msra.mxu0 0.0
        %1685 = vmatprep.subr.mxu0 0.0
        %1686 = vmatpush1.msra.mxu0 0.0
        %1687 = vmatprep.subr.mxu0 0.0
        %1688 = vmatpush1.msra.mxu0 0.0
        %1689 = vmatprep.subr.mxu0 0.0
        %1690 = vmatpush1.msra.mxu0 0.0
        %1691 = vmatprep.subr.mxu0 0.0
        %1692 = vmatpush1.msra.mxu0 0.0
        %1693 = vmatprep.subr.mxu0 0.0
        %1694 = vmatpush1.msra.mxu0 0.0
        %1695 = vmatprep.subr.mxu0 0.0
        %1696 = vmatpush1.msra.mxu0 0.0
        %1697 = vmatprep.mubr.f32.mxu0 0.0
        %1698 = vmatmul.mubr.f32.gmra.mrb[0].mxu0 %v1631
        %v1699 = vpop.f32.mrb[0].mxu0
        %v1700 = vadd.f32 0.0, %v1699
        %v1701 = vpop.f32.mrb[0].mxu0
        %1702 = vdwg.mxu0
        %v1704 = vsel %vm454, %v1627, 0
        %1706 = vmatprep.subr.mxu0 0.0
        %1707 = vmatpush1.msra.mxu0 %v711
        %1708 = vmatprep.subr.mxu0 0.0
        %1709 = vmatpush1.msra.mxu0 %v712
        %1710 = vmatprep.subr.mxu0 0.0
        %1711 = vmatpush1.msra.mxu0 0.0
        %1712 = vmatprep.subr.mxu0 0.0
        %1713 = vmatpush1.msra.mxu0 0.0
        %1714 = vmatprep.subr.mxu0 0.0
        %1715 = vmatpush1.msra.mxu0 0.0
        %1716 = vmatprep.subr.mxu0 0.0
        %1717 = vmatpush1.msra.mxu0 0.0
        %1718 = vmatprep.subr.mxu0 0.0
        %1719 = vmatpush1.msra.mxu0 0.0
        %1720 = vmatprep.subr.mxu0 0.0
        %1721 = vmatpush1.msra.mxu0 0.0
        %1722 = vmatprep.subr.mxu0 0.0
        %1723 = vmatpush1.msra.mxu0 0.0
        %1724 = vmatprep.subr.mxu0 0.0
        %1725 = vmatpush1.msra.mxu0 0.0
        %1726 = vmatprep.subr.mxu0 0.0
        %1727 = vmatpush1.msra.mxu0 0.0
        %1728 = vmatprep.subr.mxu0 0.0
        %1729 = vmatpush1.msra.mxu0 0.0
        %1730 = vmatprep.subr.mxu0 0.0
        %1731 = vmatpush1.msra.mxu0 0.0
        %1732 = vmatprep.subr.mxu0 0.0
        %1733 = vmatpush1.msra.mxu0 0.0
        %1734 = vmatprep.subr.mxu0 0.0
        %1735 = vmatpush1.msra.mxu0 0.0
        %1736 = vmatprep.subr.mxu0 0.0
        %1737 = vmatpush1.msra.mxu0 0.0
        %1738 = vmatprep.subr.mxu0 0.0
        %1739 = vmatpush1.msra.mxu0 0.0
        %1740 = vmatprep.subr.mxu0 0.0
        %1741 = vmatpush1.msra.mxu0 0.0
        %1742 = vmatprep.subr.mxu0 0.0
        %1743 = vmatpush1.msra.mxu0 0.0
        %1744 = vmatprep.subr.mxu0 0.0
        %1745 = vmatpush1.msra.mxu0 0.0
        %1746 = vmatprep.subr.mxu0 0.0
        %1747 = vmatpush1.msra.mxu0 0.0
        %1748 = vmatprep.subr.mxu0 0.0
        %1749 = vmatpush1.msra.mxu0 0.0
        %1750 = vmatprep.subr.mxu0 0.0
        %1751 = vmatpush1.msra.mxu0 0.0
        %1752 = vmatprep.subr.mxu0 0.0
        %1753 = vmatpush1.msra.mxu0 0.0
        %1754 = vmatprep.subr.mxu0 0.0
        %1755 = vmatpush1.msra.mxu0 0.0
        %1756 = vmatprep.subr.mxu0 0.0
        %1757 = vmatpush1.msra.mxu0 0.0
        %1758 = vmatprep.subr.mxu0 0.0
        %1759 = vmatpush1.msra.mxu0 0.0
        %1760 = vmatprep.subr.mxu0 0.0
        %1761 = vmatpush1.msra.mxu0 0.0
        %1762 = vmatprep.subr.mxu0 0.0
        %1763 = vmatpush1.msra.mxu0 0.0
        %1764 = vmatprep.subr.mxu0 0.0
        %1765 = vmatpush1.msra.mxu0 0.0
        %1766 = vmatprep.subr.mxu0 0.0
        %1767 = vmatpush1.msra.mxu0 0.0
        %1768 = vmatprep.subr.mxu0 0.0
        %1769 = vmatpush1.msra.mxu0 0.0
        %1770 = vmatprep.mubr.f32.mxu0 0.0
        %1771 = vmatmul.mubr.f32.gmra.mrb[0].mxu0 %v1704
        %v1772 = vpop.f32.mrb[0].mxu0
        %v1773 = vadd.f32 0.0, %v1772
        %v1774 = vpop.f32.mrb[0].mxu0
        %1775 = vdwg.mxu0
        %v1777 = vsel %vm454, %v1629, 0
        %1779 = vmatprep.subr.mxu0 0.0
        %1780 = vmatpush1.msra.mxu0 %v713
        %1781 = vmatprep.subr.mxu0 0.0
        %1782 = vmatpush1.msra.mxu0 %v714
        %1783 = vmatprep.subr.mxu0 0.0
        %1784 = vmatpush1.msra.mxu0 0.0
        %1785 = vmatprep.subr.mxu0 0.0
        %1786 = vmatpush1.msra.mxu0 0.0
        %1787 = vmatprep.subr.mxu0 0.0
        %1788 = vmatpush1.msra.mxu0 0.0
        %1789 = vmatprep.subr.mxu0 0.0
        %1790 = vmatpush1.msra.mxu0 0.0
        %1791 = vmatprep.subr.mxu0 0.0
        %1792 = vmatpush1.msra.mxu0 0.0
        %1793 = vmatprep.subr.mxu0 0.0
        %1794 = vmatpush1.msra.mxu0 0.0
        %1795 = vmatprep.subr.mxu0 0.0
        %1796 = vmatpush1.msra.mxu0 0.0
        %1797 = vmatprep.subr.mxu0 0.0
        %1798 = vmatpush1.msra.mxu0 0.0
        %1799 = vmatprep.subr.mxu0 0.0
        %1800 = vmatpush1.msra.mxu0 0.0
        %1801 = vmatprep.subr.mxu0 0.0
        %1802 = vmatpush1.msra.mxu0 0.0
        %1803 = vmatprep.subr.mxu0 0.0
        %1804 = vmatpush1.msra.mxu0 0.0
        %1805 = vmatprep.subr.mxu0 0.0
        %1806 = vmatpush1.msra.mxu0 0.0
        %1807 = vmatprep.subr.mxu0 0.0
        %1808 = vmatpush1.msra.mxu0 0.0
        %1809 = vmatprep.subr.mxu0 0.0
        %1810 = vmatpush1.msra.mxu0 0.0
        %1811 = vmatprep.subr.mxu0 0.0
        %1812 = vmatpush1.msra.mxu0 0.0
        %1813 = vmatprep.subr.mxu0 0.0
        %1814 = vmatpush1.msra.mxu0 0.0
        %1815 = vmatprep.subr.mxu0 0.0
        %1816 = vmatpush1.msra.mxu0 0.0
        %1817 = vmatprep.subr.mxu0 0.0
        %1818 = vmatpush1.msra.mxu0 0.0
        %1819 = vmatprep.subr.mxu0 0.0
        %1820 = vmatpush1.msra.mxu0 0.0
        %1821 = vmatprep.subr.mxu0 0.0
        %1822 = vmatpush1.msra.mxu0 0.0
        %1823 = vmatprep.subr.mxu0 0.0
        %1824 = vmatpush1.msra.mxu0 0.0
        %1825 = vmatprep.subr.mxu0 0.0
        %1826 = vmatpush1.msra.mxu0 0.0
        %1827 = vmatprep.subr.mxu0 0.0
        %1828 = vmatpush1.msra.mxu0 0.0
        %1829 = vmatprep.subr.mxu0 0.0
        %1830 = vmatpush1.msra.mxu0 0.0
        %1831 = vmatprep.subr.mxu0 0.0
        %1832 = vmatpush1.msra.mxu0 0.0
        %1833 = vmatprep.subr.mxu0 0.0
        %1834 = vmatpush1.msra.mxu0 0.0
        %1835 = vmatprep.subr.mxu0 0.0
        %1836 = vmatpush1.msra.mxu0 0.0
        %1837 = vmatprep.subr.mxu0 0.0
        %1838 = vmatpush1.msra.mxu0 0.0
        %1839 = vmatprep.subr.mxu0 0.0
        %1840 = vmatpush1.msra.mxu0 0.0
        %1841 = vmatprep.subr.mxu0 0.0
        %1842 = vmatpush1.msra.mxu0 0.0
        %1843 = vmatprep.mubr.f32.mxu0 0.0
        %1844 = vmatmul.mubr.f32.gmra.mrb[0].mxu0 %v1777
        %v1845 = vpop.f32.mrb[0].mxu0
        %v1846 = vadd.f32 0.0, %v1845
        %v1847 = vpop.f32.mrb[0].mxu0
        %1848 = vdwg.mxu0
        %vm1849 = vcmp.gt.f32.partialorder %v1700, 0.0
        %vm1850 = vcmp.gt.f32.partialorder %v1773, 0.0
        %vm1851 = vcmp.gt.f32.partialorder %v1846, 0.0
        %v1852 = vsel %vm1849, %v1700, 1.0
        %v1853 = vsel %vm1850, %v1773, 1.0
        %v1854 = vsel %vm1851, %v1846, 1.0
        %v1855 = vrcp.pop %v1852
        %v1856 = vrcp.pop %v1853
        %v1857 = vrcp.pop %v1854
        %1861 = vrot.lane.b32.xlu0 %v1855, 124
        %v1862 = vpop.permute.xlu0 %1861
        %1863 = vrot.lane.b32.xlu0 %v1856, 124
        %v1864 = vpop.permute.xlu0 %1863
        %1865 = vrot.lane.b32.xlu0 %v1857, 124
        %v1866 = vpop.permute.xlu0 %1865
        %v1870 = vmul.f32 %v1700, %v1862
        %v1871 = vmul.f32 %v1773, %v1864
        %v1872 = vmul.f32 %v1846, %v1866
        %1876 = vrot.lane.b32.xlu0 %v1870, 4
        %v1877 = vpop.permute.xlu0 %1876
        %1878 = vrot.lane.b32.xlu0 %v1871, 4
        %v1879 = vpop.permute.xlu0 %1878
        %1880 = vrot.lane.b32.xlu0 %v1872, 4
        %v1881 = vpop.permute.xlu0 %1880
        %v1885 = vsel %vm1849, %v1877, %v1355
        %v1886 = vsel %vm1850, %v1879, %v1357
        %v1887 = vsel %vm1851, %v1881, %v1359
        %1891 = vrot.lane.b32.xlu0 %v1363, 124
        %v1892 = vpop.permute.xlu0 %1891
        %1893 = vrot.lane.b32.xlu0 %v1364, 124
        %v1894 = vpop.permute.xlu0 %1893
        %1895 = vrot.lane.b32.xlu0 %v1365, 124
        %v1896 = vpop.permute.xlu0 %1895
        %v1900 = vsel %vm708, %v1892, %v1885
        %v1901 = vsel %vm708, %v1894, %v1886
        %v1902 = vsel %vm708, %v1896, %v1887
        %v1903 = vld [vmem:[%s8] sm:$0xff]
        %v1904 = vld [vmem:[%s9] sm:$0x1]
        %v1906 = vlaneseq
        %v1907 = vshrl.u32 %v1906, 7
        %v1908 = vsub.s32 0, %v1907
        %v1909 = vrot.slane %v1904, %v1908
        %v1912 = vsel %vm804, %v1900, 0
        %v1915 = vsel %vm804, %v1901, 0
        %v1918 = vsel %vm804, %v1902, 0
        %1920 = vmatprep.subr.mxu0 0.0
        %1921 = vmatpush1.msra.mxu0 %v1903
        %1922 = vmatprep.subr.mxu0 0.0
        %1923 = vmatpush1.msra.mxu0 0.0
        %1924 = vmatprep.subr.mxu0 0.0
        %1925 = vmatpush1.msra.mxu0 0.0
        %1926 = vmatprep.subr.mxu0 0.0
        %1927 = vmatpush1.msra.mxu0 0.0
        %1928 = vmatprep.subr.mxu0 0.0
        %1929 = vmatpush1.msra.mxu0 0.0
        %1930 = vmatprep.subr.mxu0 0.0
        %1931 = vmatpush1.msra.mxu0 0.0
        %1932 = vmatprep.subr.mxu0 0.0
        %1933 = vmatpush1.msra.mxu0 0.0
        %1934 = vmatprep.subr.mxu0 0.0
        %1935 = vmatpush1.msra.mxu0 0.0
        %1936 = vmatprep.subr.mxu0 0.0
        %1937 = vmatpush1.msra.mxu0 0.0
        %1938 = vmatprep.subr.mxu0 0.0
        %1939 = vmatpush1.msra.mxu0 0.0
        %1940 = vmatprep.subr.mxu0 0.0
        %1941 = vmatpush1.msra.mxu0 0.0
        %1942 = vmatprep.subr.mxu0 0.0
        %1943 = vmatpush1.msra.mxu0 0.0
        %1944 = vmatprep.subr.mxu0 0.0
        %1945 = vmatpush1.msra.mxu0 0.0
        %1946 = vmatprep.subr.mxu0 0.0
        %1947 = vmatpush1.msra.mxu0 0.0
        %1948 = vmatprep.subr.mxu0 0.0
        %1949 = vmatpush1.msra.mxu0 0.0
        %1950 = vmatprep.subr.mxu0 0.0
        %1951 = vmatpush1.msra.mxu0 0.0
        %1952 = vmatprep.subr.mxu0 0.0
        %1953 = vmatpush1.msra.mxu0 0.0
        %1954 = vmatprep.subr.mxu0 0.0
        %1955 = vmatpush1.msra.mxu0 0.0
        %1956 = vmatprep.subr.mxu0 0.0
        %1957 = vmatpush1.msra.mxu0 0.0
        %1958 = vmatprep.subr.mxu0 0.0
        %1959 = vmatpush1.msra.mxu0 0.0
        %1960 = vmatprep.subr.mxu0 0.0
        %1961 = vmatpush1.msra.mxu0 0.0
        %1962 = vmatprep.subr.mxu0 0.0
        %1963 = vmatpush1.msra.mxu0 0.0
        %1964 = vmatprep.subr.mxu0 0.0
        %1965 = vmatpush1.msra.mxu0 0.0
        %1966 = vmatprep.subr.mxu0 0.0
        %1967 = vmatpush1.msra.mxu0 0.0
        %1968 = vmatprep.subr.mxu0 0.0
        %1969 = vmatpush1.msra.mxu0 0.0
        %1970 = vmatprep.subr.mxu0 0.0
        %1971 = vmatpush1.msra.mxu0 0.0
        %1972 = vmatprep.subr.mxu0 0.0
        %1973 = vmatpush1.msra.mxu0 0.0
        %1974 = vmatprep.subr.mxu0 0.0
        %1975 = vmatpush1.msra.mxu0 0.0
        %1976 = vmatprep.subr.mxu0 0.0
        %1977 = vmatpush1.msra.mxu0 0.0
        %1978 = vmatprep.subr.mxu0 0.0
        %1979 = vmatpush1.msra.mxu0 0.0
        %1980 = vmatprep.subr.mxu0 0.0
        %1981 = vmatpush1.msra.mxu0 0.0
        %1982 = vmatprep.subr.mxu0 0.0
        %1983 = vmatpush1.msra.mxu0 0.0
        %1984 = vmatprep.mubr.f32.mxu0 0.0
        %1985 = vmatmul.mubr.f32.gmra.mrb[0].mxu0 %v1912
        %v1986 = vpop.f32.mrb[0].mxu0
        %v1987 = vadd.f32 %v1909, %v1986
        %v1988 = vpop.f32.mrb[0].mxu0
        %1989 = vmatprep.mubr.f32.mxu0 0.0
        %1990 = vmatmul.mubr.f32.gmra.mrb[0].mxu0 %v1915
        %v1991 = vpop.f32.mrb[0].mxu0
        %v1992 = vadd.f32 %v1909, %v1991
        %v1993 = vpop.f32.mrb[0].mxu0
        %1994 = vmatprep.mubr.f32.mxu0 0.0
        %1995 = vmatmul.mubr.f32.gmra.mrb[0].mxu0 %v1918
        %v1996 = vpop.f32.mrb[0].mxu0
        %v1997 = vadd.f32 %v1909, %v1996
        %v1998 = vpop.f32.mrb[0].mxu0
        %1999 = vdwg.mxu0
        %2000 = vst [vmem:[%s407] sm:$0xff] %v1987
        %2001 = vst [vmem:[%s407 + $0x8] sm:$0xff] %v1992
        %2002 = vst [vmem:[%s407 + $0x10] sm:$0xff] %v1997
        %s2003 = sand.u32 %s262, 1
        %s2004 = scalar_lea.sflag [#allocation3], %s2003
        %s2005 = sand.u32 %s262, 1
        %s2006 = smul.addr %s2005, 24
        %s2007 = scalar_lea.vmem [#allocation2], %s2006
        // Predicated region
        $region61: #{tpu_custom_call.1} parent=59 // pred_check
          %p2008 = pneg %p272
        $region62: #{tpu_custom_call.1} parent=59 // pred_check_branch
          %2010 = sbr.rel (%p2008) target = $region64
        $region63: #{tpu_custom_call.1} parent=59 // pred_region
          %s2011 = smul.u32 3, %s24
          %s2013 = ssub.s32 384, 384
          %2014 = vsyncadd %s2004, %s2013
          %s2015 = smul.addr %s2011, 128
          %s2016 = scalar_lea.hbm %s10, %s2015
          %s2017 = sshll.u32 %s2007, 4
          %s2018 = int_to_ptr.vmem [resolvable:$true] %s2017
          %2023 = dma.vmem_to_hbm [thread:$0]  %s2018, 384, %s2016, %s2004, 128, 128, 8
        $region64: #{tpu_custom_call.1} parent=59 // pred_fallthru
          _
      $region60: #{tpu_custom_call.1} parent=5 // pred_fallthru
        _
      %p2024 = scmp.le.s32.totalorder 2, %s19
      // Predicated region
      $region65: #{tpu_custom_call.1} parent=5 // pred_check
        %p2025 = pneg %p2024
      $region66: #{tpu_custom_call.1} parent=5 // pred_check_branch
        %2027 = sbr.rel (%p2025) target = $region68
      $region67: #{tpu_custom_call.1} parent=5 // pred_region
        %s2028 = ssub.s32 %s19, 2
        // Predicated region
        $region69: #{tpu_custom_call.1} parent=67 // pred_check
          %p2029 = pneg %p278
        $region70: #{tpu_custom_call.1} parent=67 // pred_check_branch
          %2031 = sbr.rel (%p2029) target = $region72
        $region71: #{tpu_custom_call.1} parent=67 // pred_region
          %s2032 = sand.u32 %s263, 1
          %s2033 = scalar_lea.sflag [#allocation3], %s2032
          %s2034 = sand.u32 %s263, 1
          %s2035 = smul.addr %s2034, 24
          %s2036 = scalar_lea.vmem [#allocation2], %s2035
          %2037 = dma.done %s2033, 384
        $region72: #{tpu_custom_call.1} parent=67 // pred_fallthru
          _
      $region68: #{tpu_custom_call.1} parent=5 // pred_fallthru
        _
    $region6: #{tpu_custom_call.1} parent=1 // loop_footer
      %s23 = sadd.s32 1, %s19
    $region7: #{tpu_custom_call.1} parent=1 // loop_footer_branch
      %18 = sbr.rel target = $region3
    $region8: #{tpu_custom_call.1} parent=1 // loop_exit
      _
    %2038 = vsyncpa [#allocation3], 1
    %s2039 = scalar_lea.sflag [#allocation3], 1
    %2040 = vsyncpa %s2039, 1

</llo_original>
